<compile_context>
chip_gen: v5e
topology: v5e:2x2
jax: 0.10.0
libtpu: 0.0.40
codegen_flags: <defaults>
</compile_context>

<pallas_src>
import jax
import jax.numpy as jnp
import numpy as np
from jax import lax
from jax.experimental import pallas as pl
from jax.experimental.pallas import tpu as pltpu


def _simsppf_kernel(x_ref, w1_ref, b1_ref, w2_ref, b2_ref, o_ref):
    # x_ref : (1, H, W, Cin)  one image per grid step
    _, H, W, Cin = x_ref.shape
    Cmid = w1_ref.shape[1]
    Cout = w2_ref.shape[1]

    neg_inf = -jnp.inf

    x = x_ref[0].astype(jnp.float32)              # (H, W, Cin)
    xf = x.reshape(H * W, Cin)                    # layout-preserving (W % 8 == 0)

    # conv1 (1x1, BN scale pre-folded into w1) + bias + ReLU
    y = jnp.maximum(
        jnp.dot(xf, w1_ref[...], preferred_element_type=jnp.float32)
        + b1_ref[...], 0.0)                       # (H*W, Cmid)

    # ---- hoisted pooling constants (built once, reused by all 3 pools) ----
    # Column index along W (the sublane axis) for the -inf edge masks of the
    # rolled W-direction reads.
    col = lax.broadcasted_iota(jnp.int32, (H, W, Cmid), 1)
    w_shift_masks = []
    for k in (1, 2):
        # roll by (W - k)  ==  roll by -k : shifted[:, w, :] = v[:, w + k, :]
        w_shift_masks.append(((W - k) % W, col < (W - k)))
        # roll by k                      : shifted[:, w, :] = v[:, w - k, :]
        w_shift_masks.append((k, col >= k))
    # -inf rows for the implicit padding of the H-direction pass.
    neg_rows = jnp.full((2, W, Cmid), neg_inf, jnp.float32)

    def pool5x5(v2d):
        # v2d: (H*W, Cmid) -> separable 5x5 stride-1 maxpool, -inf padding 2,
        # done entirely in registers (no VMEM scratch round trips).
        v = v2d.reshape(H, W, Cmid)
        # Pass 1: 1x5 max along W via XLU sublane rolls + -inf edge masks.
        r = v
        for shift, mask in w_shift_masks:
            shifted = pltpu.roll(v, shift, axis=1)
            r = jnp.maximum(r, jnp.where(mask, shifted, neg_inf))
        # Pass 2: 5x1 max along H (leading, untiled axis): -inf pad rows +
        # five leading-axis slices == pure vreg selection.
        rp = jnp.concatenate([neg_rows, r, neg_rows], axis=0)   # (H+4, W, Cmid)
        out = rp[0:H]
        for dh in range(1, 5):
            out = jnp.maximum(out, rp[dh:dh + H])
        return out.reshape(H * W, Cmid)

    # conv2 (1x1) on cat([y, p1, p2, p3], channel) == sum of 4 partial matmuls,
    # interleaved with the pooling chain to minimize live intermediates.
    acc = jnp.dot(y, w2_ref[0:Cmid, :], preferred_element_type=jnp.float32)
    p = pool5x5(y)
    acc = acc + jnp.dot(p, w2_ref[Cmid:2 * Cmid, :],
                        preferred_element_type=jnp.float32)
    p = pool5x5(p)
    acc = acc + jnp.dot(p, w2_ref[2 * Cmid:3 * Cmid, :],
                        preferred_element_type=jnp.float32)
    p = pool5x5(p)
    acc = acc + jnp.dot(p, w2_ref[3 * Cmid:4 * Cmid, :],
                        preferred_element_type=jnp.float32)

    z = jnp.maximum(acc + b2_ref[...], 0.0)       # (H*W, Cout)
    o_ref[0] = z.reshape(H, W, Cout).astype(o_ref.dtype)


@jax.jit
def simsppf_pallas(x_nchw, w1, s1, b1, w2, s2, b2):
    """x_nchw: (N, Cin, H, W) float32 -> (N, Cout, H, W) float32."""
    N, Cin, H, W = x_nchw.shape
    Cmid = w1.shape[1]
    Cout = w2.shape[1]
    x_nhwc = jnp.transpose(x_nchw, (0, 2, 3, 1))   # NCHW -> NHWC for the kernel

    # Fold the (inference-mode) BN scales into the conv weights once, outside
    # the hot loop:  (x @ w) * s + b == x @ (w * s) + b.
    w1f = w1 * s1            # (Cin, Cmid)   * (1, Cmid)
    w2f = w2 * s2            # (4Cmid, Cout) * (1, Cout)

    out_nhwc = pl.pallas_call(
        _simsppf_kernel,
        out_shape=jax.ShapeDtypeStruct((N, H, W, Cout), jnp.float32),
        grid=(N,),
        in_specs=[
            pl.BlockSpec((1, H, W, Cin), lambda b: (b, 0, 0, 0)),
            pl.BlockSpec((Cin, Cmid), lambda b: (0, 0)),
            pl.BlockSpec((1, Cmid), lambda b: (0, 0)),
            pl.BlockSpec((4 * Cmid, Cout), lambda b: (0, 0)),
            pl.BlockSpec((1, Cout), lambda b: (0, 0)),
        ],
        out_specs=pl.BlockSpec((1, H, W, Cout), lambda b: (b, 0, 0, 0)),
        compiler_params=pltpu.CompilerParams(
            dimension_semantics=("parallel",)),
    )(x_nhwc, w1f, b1, w2f, b2)

    return jnp.transpose(out_nhwc, (0, 3, 1, 2))   # back to NCHW


# ---------------- pure-JAX reference (for correctness check) ----------------
def _maxpool5_ref(x_nhwc):
    return lax.reduce_window(x_nhwc, -jnp.inf, lax.max,
                             window_dimensions=(1, 5, 5, 1),
                             window_strides=(1, 1, 1, 1),
                             padding=((0, 0), (2, 2), (2, 2), (0, 0)))


def simsppf_reference(x_nchw, w1, s1, b1, w2, s2, b2):
    x = jnp.transpose(x_nchw, (0, 2, 3, 1))
    y = jnp.maximum(jnp.einsum("nhwc,cd->nhwd", x, w1) * s1 + b1, 0.0)
    p1 = _maxpool5_ref(y)
    p2 = _maxpool5_ref(p1)
    p3 = _maxpool5_ref(p2)
    cat = jnp.concatenate([y, p1, p2, p3], axis=-1)
    z = jnp.maximum(jnp.einsum("nhwc,cd->nhwd", cat, w2) * s2 + b2, 0.0)
    return jnp.transpose(z, (0, 3, 1, 2))


if __name__ == "__main__":
    # Module config: in_channels=4, out_channels=8, kernel_size=1 (default)
    N, Cin, H, W = 2, 4, 16, 16
    Cmid = Cin // 2
    Cout = 8
    eps = 1e-5

    key = jax.random.PRNGKey(0)
    keys = jax.random.split(key, 11)

    x = jax.random.normal(keys[0], (N, Cin, H, W), jnp.float32)

    # conv1 weight (PyTorch shape (Cmid, Cin, 1, 1)) stored as (Cin, Cmid) for matmul
    w1 = jax.random.normal(keys[1], (Cin, Cmid), jnp.float32) * 0.5
    g1 = jax.random.normal(keys[2], (1, Cmid), jnp.float32) * 0.1 + 1.0
    beta1 = jax.random.normal(keys[3], (1, Cmid), jnp.float32) * 0.1
    mean1 = jax.random.normal(keys[4], (1, Cmid), jnp.float32) * 0.1
    var1 = jnp.abs(jax.random.normal(keys[5], (1, Cmid), jnp.float32)) + 0.5
    s1 = g1 / jnp.sqrt(var1 + eps)            # folded BN (inference mode)
    b1 = beta1 - mean1 * s1

    # conv2 weight (PyTorch shape (Cout, 4*Cmid, 1, 1)) stored as (4*Cmid, Cout)
    w2 = jax.random.normal(keys[6], (4 * Cmid, Cout), jnp.float32) * 0.3
    g2 = jax.random.normal(keys[7], (1, Cout), jnp.float32) * 0.1 + 1.0
    beta2 = jax.random.normal(keys[8], (1, Cout), jnp.float32) * 0.1
    mean2 = jax.random.normal(keys[9], (1, Cout), jnp.float32) * 0.1
    var2 = jnp.abs(jax.random.normal(keys[10], (1, Cout), jnp.float32)) + 0.5
    s2 = g2 / jnp.sqrt(var2 + eps)
    b2 = beta2 - mean2 * s2

    out = simsppf_pallas(x, w1, s1, b1, w2, s2, b2)
    out = jax.block_until_ready(out)

    ref = simsppf_reference(x, w1, s1, b1, w2, s2, b2)
    np.testing.assert_allclose(np.asarray(out), np.asarray(ref),
                               rtol=1e-3, atol=1e-3)

    print("KERNEL_OK")
</pallas_src>

<mosaic_0001>
module attributes {stable_mosaic.version = 11 : i64} {
  func.func @_simsppf_kernel(%arg0: i32, %arg1: memref<1x16x16x4xf32, #tpu.memory_space<vmem>>, %arg2: memref<4x2xf32, #tpu.memory_space<vmem>>, %arg3: memref<1x2xf32, #tpu.memory_space<vmem>>, %arg4: memref<8x8xf32, #tpu.memory_space<vmem>>, %arg5: memref<1x8xf32, #tpu.memory_space<vmem>>, %arg6: memref<1x16x16x8xf32, #tpu.memory_space<vmem>>) attributes {dimension_semantics = [#tpu.dimension_semantics<parallel>], iteration_bounds = array<i64: 2>, scalar_prefetch = 0 : i64, scratch_operands = 0 : i64, tpu.core_type = #tpu.core_type<tc>, window_params = [{transform_indices = @transform_0, window_bounds = array<i64: 1, 16, 16, 4>}, {pipeline_mode = #tpu.pipeline_mode<synchronous>, transform_indices = @transform_1, window_bounds = array<i64: 4, 2>}, {pipeline_mode = #tpu.pipeline_mode<synchronous>, transform_indices = @transform_2, window_bounds = array<i64: 1, 2>}, {pipeline_mode = #tpu.pipeline_mode<synchronous>, transform_indices = @transform_3, window_bounds = array<i64: 8, 8>}, {pipeline_mode = #tpu.pipeline_mode<synchronous>, transform_indices = @transform_4, window_bounds = array<i64: 1, 8>}, {transform_indices = @transform_5, window_bounds = array<i64: 1, 16, 16, 8>}]} {
    %c0 = arith.constant 0 : index
    %c0_0 = arith.constant 0 : index
    %c0_1 = arith.constant 0 : index
    %c0_2 = arith.constant 0 : index
    %0 = vector.load %arg1[%c0, %c0_0, %c0_1, %c0_2] : memref<1x16x16x4xf32, #tpu.memory_space<vmem>>, vector<1x16x16x4xf32>
    %1 = vector.shape_cast %0 : vector<1x16x16x4xf32> to vector<16x16x4xf32>
    %2 = vector.shape_cast %1 : vector<16x16x4xf32> to vector<256x4xf32>
    %c0_3 = arith.constant 0 : index
    %c0_4 = arith.constant 0 : index
    %3 = vector.load %arg2[%c0_3, %c0_4] : memref<4x2xf32, #tpu.memory_space<vmem>>, vector<4x2xf32>
    %cst = arith.constant dense<0.000000e+00> : vector<256x2xf32>
    %4 = tpu.matmul %2, %3, %cst {dimension_numbers = #tpu.dot_dimension_numbers<[1], [0], [0], [1], [0, 0, 1, 1], [], []>} : vector<256x4xf32>, vector<4x2xf32>, vector<256x2xf32> -> vector<256x2xf32>
    %c0_5 = arith.constant 0 : index
    %c0_6 = arith.constant 0 : index
    %5 = vector.load %arg3[%c0_5, %c0_6] : memref<1x2xf32, #tpu.memory_space<vmem>>, vector<1x2xf32>
    %6 = vector.broadcast %5 : vector<1x2xf32> to vector<256x2xf32>
    %7 = arith.addf %4, %6 : vector<256x2xf32>
    %cst_7 = arith.constant 0.000000e+00 : f32
    %8 = vector.broadcast %cst_7 : f32 to vector<256x2xf32>
    %9 = arith.maximumf %7, %8 : vector<256x2xf32>
    %10 = tpu.iota {dimensions = array<i32: 1>} : vector<16x16x2xi32>
    %c15_i32 = arith.constant 15 : i32
    %11 = vector.broadcast %c15_i32 : i32 to vector<16x16x2xi32>
    %12 = arith.cmpi slt, %10, %11 : vector<16x16x2xi32>
    %c1_i32 = arith.constant 1 : i32
    %13 = vector.broadcast %c1_i32 : i32 to vector<16x16x2xi32>
    %14 = arith.cmpi sge, %10, %13 : vector<16x16x2xi32>
    %c14_i32 = arith.constant 14 : i32
    %15 = vector.broadcast %c14_i32 : i32 to vector<16x16x2xi32>
    %16 = arith.cmpi slt, %10, %15 : vector<16x16x2xi32>
    %c2_i32 = arith.constant 2 : i32
    %17 = vector.broadcast %c2_i32 : i32 to vector<16x16x2xi32>
    %18 = arith.cmpi sge, %10, %17 : vector<16x16x2xi32>
    %cst_8 = arith.constant 0xFF800000 : f32
    %19 = vector.broadcast %cst_8 : f32 to vector<2x16x2xf32>
    %c0_9 = arith.constant 0 : index
    %c0_10 = arith.constant 0 : index
    %20 = vector.load %arg4[%c0_9, %c0_10] : memref<8x8xf32, #tpu.memory_space<vmem>>, vector<2x8xf32>
    %cst_11 = arith.constant dense<0.000000e+00> : vector<256x8xf32>
    %21 = tpu.matmul %9, %20, %cst_11 {dimension_numbers = #tpu.dot_dimension_numbers<[1], [0], [0], [1], [0, 0, 1, 1], [], []>} : vector<256x2xf32>, vector<2x8xf32>, vector<256x8xf32> -> vector<256x8xf32>
    %22 = vector.shape_cast %9 : vector<256x2xf32> to vector<16x16x2xf32>
    %c15_i32_12 = arith.constant 15 : i32
    %23 = tpu.dynamic_rotate %22 by %c15_i32_12 dim 1 : vector<16x16x2xf32>, i32 -> vector<16x16x2xf32>
    %cst_13 = arith.constant 0xFF800000 : f32
    %24 = vector.broadcast %cst_13 : f32 to vector<16x16x2xf32>
    %25 = arith.select %12, %23, %24 : vector<16x16x2xi1>, vector<16x16x2xf32>
    %26 = arith.maximumf %22, %25 : vector<16x16x2xf32>
    %c1_i32_14 = arith.constant 1 : i32
    %27 = tpu.dynamic_rotate %22 by %c1_i32_14 dim 1 : vector<16x16x2xf32>, i32 -> vector<16x16x2xf32>
    %cst_15 = arith.constant 0xFF800000 : f32
    %28 = vector.broadcast %cst_15 : f32 to vector<16x16x2xf32>
    %29 = arith.select %14, %27, %28 : vector<16x16x2xi1>, vector<16x16x2xf32>
    %30 = arith.maximumf %26, %29 : vector<16x16x2xf32>
    %c14_i32_16 = arith.constant 14 : i32
    %31 = tpu.dynamic_rotate %22 by %c14_i32_16 dim 1 : vector<16x16x2xf32>, i32 -> vector<16x16x2xf32>
    %cst_17 = arith.constant 0xFF800000 : f32
    %32 = vector.broadcast %cst_17 : f32 to vector<16x16x2xf32>
    %33 = arith.select %16, %31, %32 : vector<16x16x2xi1>, vector<16x16x2xf32>
    %34 = arith.maximumf %30, %33 : vector<16x16x2xf32>
    %c2_i32_18 = arith.constant 2 : i32
    %35 = tpu.dynamic_rotate %22 by %c2_i32_18 dim 1 : vector<16x16x2xf32>, i32 -> vector<16x16x2xf32>
    %cst_19 = arith.constant 0xFF800000 : f32
    %36 = vector.broadcast %cst_19 : f32 to vector<16x16x2xf32>
    %37 = arith.select %18, %35, %36 : vector<16x16x2xi1>, vector<16x16x2xf32>
    %38 = arith.maximumf %34, %37 : vector<16x16x2xf32>
    %39 = tpu.concatenate %19, %38, %19 in 0 : vector<2x16x2xf32>, vector<16x16x2xf32>, vector<2x16x2xf32> -> vector<20x16x2xf32>
    %40 = vector.extract_strided_slice %39 {offsets = [0, 0, 0], sizes = [16, 16, 2], strides = [1, 1, 1]} : vector<20x16x2xf32> to vector<16x16x2xf32>
    %41 = vector.extract_strided_slice %39 {offsets = [1, 0, 0], sizes = [16, 16, 2], strides = [1, 1, 1]} : vector<20x16x2xf32> to vector<16x16x2xf32>
    %42 = arith.maximumf %40, %41 : vector<16x16x2xf32>
    %43 = vector.extract_strided_slice %39 {offsets = [2, 0, 0], sizes = [16, 16, 2], strides = [1, 1, 1]} : vector<20x16x2xf32> to vector<16x16x2xf32>
    %44 = arith.maximumf %42, %43 : vector<16x16x2xf32>
    %45 = vector.extract_strided_slice %39 {offsets = [3, 0, 0], sizes = [16, 16, 2], strides = [1, 1, 1]} : vector<20x16x2xf32> to vector<16x16x2xf32>
    %46 = arith.maximumf %44, %45 : vector<16x16x2xf32>
    %47 = vector.extract_strided_slice %39 {offsets = [4, 0, 0], sizes = [16, 16, 2], strides = [1, 1, 1]} : vector<20x16x2xf32> to vector<16x16x2xf32>
    %48 = arith.maximumf %46, %47 : vector<16x16x2xf32>
    %49 = vector.shape_cast %48 : vector<16x16x2xf32> to vector<256x2xf32>
    %c2 = arith.constant 2 : index
    %c0_20 = arith.constant 0 : index
    %50 = vector.load %arg4[%c2, %c0_20] : memref<8x8xf32, #tpu.memory_space<vmem>>, vector<2x8xf32>
    %cst_21 = arith.constant dense<0.000000e+00> : vector<256x8xf32>
    %51 = tpu.matmul %49, %50, %cst_21 {dimension_numbers = #tpu.dot_dimension_numbers<[1], [0], [0], [1], [0, 0, 1, 1], [], []>} : vector<256x2xf32>, vector<2x8xf32>, vector<256x8xf32> -> vector<256x8xf32>
    %52 = arith.addf %21, %51 : vector<256x8xf32>
    %53 = vector.shape_cast %49 : vector<256x2xf32> to vector<16x16x2xf32>
    %c15_i32_22 = arith.constant 15 : i32
    %54 = tpu.dynamic_rotate %53 by %c15_i32_22 dim 1 : vector<16x16x2xf32>, i32 -> vector<16x16x2xf32>
    %cst_23 = arith.constant 0xFF800000 : f32
    %55 = vector.broadcast %cst_23 : f32 to vector<16x16x2xf32>
    %56 = arith.select %12, %54, %55 : vector<16x16x2xi1>, vector<16x16x2xf32>
    %57 = arith.maximumf %53, %56 : vector<16x16x2xf32>
    %c1_i32_24 = arith.constant 1 : i32
    %58 = tpu.dynamic_rotate %53 by %c1_i32_24 dim 1 : vector<16x16x2xf32>, i32 -> vector<16x16x2xf32>
    %cst_25 = arith.constant 0xFF800000 : f32
    %59 = vector.broadcast %cst_25 : f32 to vector<16x16x2xf32>
    %60 = arith.select %14, %58, %59 : vector<16x16x2xi1>, vector<16x16x2xf32>
    %61 = arith.maximumf %57, %60 : vector<16x16x2xf32>
    %c14_i32_26 = arith.constant 14 : i32
    %62 = tpu.dynamic_rotate %53 by %c14_i32_26 dim 1 : vector<16x16x2xf32>, i32 -> vector<16x16x2xf32>
    %cst_27 = arith.constant 0xFF800000 : f32
    %63 = vector.broadcast %cst_27 : f32 to vector<16x16x2xf32>
    %64 = arith.select %16, %62, %63 : vector<16x16x2xi1>, vector<16x16x2xf32>
    %65 = arith.maximumf %61, %64 : vector<16x16x2xf32>
    %c2_i32_28 = arith.constant 2 : i32
    %66 = tpu.dynamic_rotate %53 by %c2_i32_28 dim 1 : vector<16x16x2xf32>, i32 -> vector<16x16x2xf32>
    %cst_29 = arith.constant 0xFF800000 : f32
    %67 = vector.broadcast %cst_29 : f32 to vector<16x16x2xf32>
    %68 = arith.select %18, %66, %67 : vector<16x16x2xi1>, vector<16x16x2xf32>
    %69 = arith.maximumf %65, %68 : vector<16x16x2xf32>
    %70 = tpu.concatenate %19, %69, %19 in 0 : vector<2x16x2xf32>, vector<16x16x2xf32>, vector<2x16x2xf32> -> vector<20x16x2xf32>
    %71 = vector.extract_strided_slice %70 {offsets = [0, 0, 0], sizes = [16, 16, 2], strides = [1, 1, 1]} : vector<20x16x2xf32> to vector<16x16x2xf32>
    %72 = vector.extract_strided_slice %70 {offsets = [1, 0, 0], sizes = [16, 16, 2], strides = [1, 1, 1]} : vector<20x16x2xf32> to vector<16x16x2xf32>
    %73 = arith.maximumf %71, %72 : vector<16x16x2xf32>
    %74 = vector.extract_strided_slice %70 {offsets = [2, 0, 0], sizes = [16, 16, 2], strides = [1, 1, 1]} : vector<20x16x2xf32> to vector<16x16x2xf32>
    %75 = arith.maximumf %73, %74 : vector<16x16x2xf32>
    %76 = vector.extract_strided_slice %70 {offsets = [3, 0, 0], sizes = [16, 16, 2], strides = [1, 1, 1]} : vector<20x16x2xf32> to vector<16x16x2xf32>
    %77 = arith.maximumf %75, %76 : vector<16x16x2xf32>
    %78 = vector.extract_strided_slice %70 {offsets = [4, 0, 0], sizes = [16, 16, 2], strides = [1, 1, 1]} : vector<20x16x2xf32> to vector<16x16x2xf32>
    %79 = arith.maximumf %77, %78 : vector<16x16x2xf32>
    %80 = vector.shape_cast %79 : vector<16x16x2xf32> to vector<256x2xf32>
    %c4 = arith.constant 4 : index
    %c0_30 = arith.constant 0 : index
    %81 = vector.load %arg4[%c4, %c0_30] : memref<8x8xf32, #tpu.memory_space<vmem>>, vector<2x8xf32>
    %cst_31 = arith.constant dense<0.000000e+00> : vector<256x8xf32>
    %82 = tpu.matmul %80, %81, %cst_31 {dimension_numbers = #tpu.dot_dimension_numbers<[1], [0], [0], [1], [0, 0, 1, 1], [], []>} : vector<256x2xf32>, vector<2x8xf32>, vector<256x8xf32> -> vector<256x8xf32>
    %83 = arith.addf %52, %82 : vector<256x8xf32>
    %84 = vector.shape_cast %80 : vector<256x2xf32> to vector<16x16x2xf32>
    %c15_i32_32 = arith.constant 15 : i32
    %85 = tpu.dynamic_rotate %84 by %c15_i32_32 dim 1 : vector<16x16x2xf32>, i32 -> vector<16x16x2xf32>
    %cst_33 = arith.constant 0xFF800000 : f32
    %86 = vector.broadcast %cst_33 : f32 to vector<16x16x2xf32>
    %87 = arith.select %12, %85, %86 : vector<16x16x2xi1>, vector<16x16x2xf32>
    %88 = arith.maximumf %84, %87 : vector<16x16x2xf32>
    %c1_i32_34 = arith.constant 1 : i32
    %89 = tpu.dynamic_rotate %84 by %c1_i32_34 dim 1 : vector<16x16x2xf32>, i32 -> vector<16x16x2xf32>
    %cst_35 = arith.constant 0xFF800000 : f32
    %90 = vector.broadcast %cst_35 : f32 to vector<16x16x2xf32>
    %91 = arith.select %14, %89, %90 : vector<16x16x2xi1>, vector<16x16x2xf32>
    %92 = arith.maximumf %88, %91 : vector<16x16x2xf32>
    %c14_i32_36 = arith.constant 14 : i32
    %93 = tpu.dynamic_rotate %84 by %c14_i32_36 dim 1 : vector<16x16x2xf32>, i32 -> vector<16x16x2xf32>
    %cst_37 = arith.constant 0xFF800000 : f32
    %94 = vector.broadcast %cst_37 : f32 to vector<16x16x2xf32>
    %95 = arith.select %16, %93, %94 : vector<16x16x2xi1>, vector<16x16x2xf32>
    %96 = arith.maximumf %92, %95 : vector<16x16x2xf32>
    %c2_i32_38 = arith.constant 2 : i32
    %97 = tpu.dynamic_rotate %84 by %c2_i32_38 dim 1 : vector<16x16x2xf32>, i32 -> vector<16x16x2xf32>
    %cst_39 = arith.constant 0xFF800000 : f32
    %98 = vector.broadcast %cst_39 : f32 to vector<16x16x2xf32>
    %99 = arith.select %18, %97, %98 : vector<16x16x2xi1>, vector<16x16x2xf32>
    %100 = arith.maximumf %96, %99 : vector<16x16x2xf32>
    %101 = tpu.concatenate %19, %100, %19 in 0 : vector<2x16x2xf32>, vector<16x16x2xf32>, vector<2x16x2xf32> -> vector<20x16x2xf32>
    %102 = vector.extract_strided_slice %101 {offsets = [0, 0, 0], sizes = [16, 16, 2], strides = [1, 1, 1]} : vector<20x16x2xf32> to vector<16x16x2xf32>
    %103 = vector.extract_strided_slice %101 {offsets = [1, 0, 0], sizes = [16, 16, 2], strides = [1, 1, 1]} : vector<20x16x2xf32> to vector<16x16x2xf32>
    %104 = arith.maximumf %102, %103 : vector<16x16x2xf32>
    %105 = vector.extract_strided_slice %101 {offsets = [2, 0, 0], sizes = [16, 16, 2], strides = [1, 1, 1]} : vector<20x16x2xf32> to vector<16x16x2xf32>
    %106 = arith.maximumf %104, %105 : vector<16x16x2xf32>
    %107 = vector.extract_strided_slice %101 {offsets = [3, 0, 0], sizes = [16, 16, 2], strides = [1, 1, 1]} : vector<20x16x2xf32> to vector<16x16x2xf32>
    %108 = arith.maximumf %106, %107 : vector<16x16x2xf32>
    %109 = vector.extract_strided_slice %101 {offsets = [4, 0, 0], sizes = [16, 16, 2], strides = [1, 1, 1]} : vector<20x16x2xf32> to vector<16x16x2xf32>
    %110 = arith.maximumf %108, %109 : vector<16x16x2xf32>
    %111 = vector.shape_cast %110 : vector<16x16x2xf32> to vector<256x2xf32>
    %c6 = arith.constant 6 : index
    %c0_40 = arith.constant 0 : index
    %112 = vector.load %arg4[%c6, %c0_40] : memref<8x8xf32, #tpu.memory_space<vmem>>, vector<2x8xf32>
    %cst_41 = arith.constant dense<0.000000e+00> : vector<256x8xf32>
    %113 = tpu.matmul %111, %112, %cst_41 {dimension_numbers = #tpu.dot_dimension_numbers<[1], [0], [0], [1], [0, 0, 1, 1], [], []>} : vector<256x2xf32>, vector<2x8xf32>, vector<256x8xf32> -> vector<256x8xf32>
    %114 = arith.addf %83, %113 : vector<256x8xf32>
    %c0_42 = arith.constant 0 : index
    %c0_43 = arith.constant 0 : index
    %115 = vector.load %arg5[%c0_42, %c0_43] : memref<1x8xf32, #tpu.memory_space<vmem>>, vector<1x8xf32>
    %116 = vector.broadcast %115 : vector<1x8xf32> to vector<256x8xf32>
    %117 = arith.addf %114, %116 : vector<256x8xf32>
    %cst_44 = arith.constant 0.000000e+00 : f32
    %118 = vector.broadcast %cst_44 : f32 to vector<256x8xf32>
    %119 = arith.maximumf %117, %118 : vector<256x8xf32>
    %120 = vector.shape_cast %119 : vector<256x8xf32> to vector<16x16x8xf32>
    %c0_45 = arith.constant 0 : index
    %c0_46 = arith.constant 0 : index
    %c0_47 = arith.constant 0 : index
    %c0_48 = arith.constant 0 : index
    %121 = vector.load %arg6[%c0_45, %c0_46, %c0_47, %c0_48] : memref<1x16x16x8xf32, #tpu.memory_space<vmem>>, vector<1x16x16x8xf32>
    %122 = vector.shape_cast %121 : vector<1x16x16x8xf32> to vector<16x16x8xf32>
    %123 = vector.shape_cast %120 : vector<16x16x8xf32> to vector<1x16x16x8xf32>
    tpu.vector_store %arg6[%c0_45, %c0_46, %c0_47, %c0_48], %123 {strides = array<i32>} : memref<1x16x16x8xf32, #tpu.memory_space<vmem>>, vector<1x16x16x8xf32>,
    return
  }
  func.func @transform_0(%arg0: i32) -> (i32, i32, i32, i32) {
    %c0_i32 = arith.constant 0 : i32
    %c0_i32_0 = arith.constant 0 : i32
    %c0_i32_1 = arith.constant 0 : i32
    %c0_i32_2 = arith.constant 0 : i32
    return %arg0, %c0_i32, %c0_i32_0, %c0_i32_1 : i32, i32, i32, i32
  }
  func.func @transform_1(%arg0: i32) -> (i32, i32) {
    %c0_i32 = arith.constant 0 : i32
    %c0_i32_0 = arith.constant 0 : i32
    %c0_i32_1 = arith.constant 0 : i32
    return %c0_i32, %c0_i32_0 : i32, i32
  }
  func.func @transform_2(%arg0: i32) -> (i32, i32) {
    %c0_i32 = arith.constant 0 : i32
    %c0_i32_0 = arith.constant 0 : i32
    %c0_i32_1 = arith.constant 0 : i32
    return %c0_i32, %c0_i32_0 : i32, i32
  }
  func.func @transform_3(%arg0: i32) -> (i32, i32) {
    %c0_i32 = arith.constant 0 : i32
    %c0_i32_0 = arith.constant 0 : i32
    %c0_i32_1 = arith.constant 0 : i32
    return %c0_i32, %c0_i32_0 : i32, i32
  }
  func.func @transform_4(%arg0: i32) -> (i32, i32) {
    %c0_i32 = arith.constant 0 : i32
    %c0_i32_0 = arith.constant 0 : i32
    %c0_i32_1 = arith.constant 0 : i32
    return %c0_i32, %c0_i32_0 : i32, i32
  }
  func.func @transform_5(%arg0: i32) -> (i32, i32, i32, i32) {
    %c0_i32 = arith.constant 0 : i32
    %c0_i32_0 = arith.constant 0 : i32
    %c0_i32_1 = arith.constant 0 : i32
    %c0_i32_2 = arith.constant 0 : i32
    return %arg0, %c0_i32, %c0_i32_0, %c0_i32_1 : i32, i32, i32, i32
  }
}

</mosaic_0001>

<llo_original>
// kernel: simsppf_pallas.1
$region0: #{simsppf_pallas.1}
  #allocation0 [shape = 'u32[]', space=smem, size = 0x4, offset = 0x4, fixed_abs, tag = 'smem constant byte address 0x4 - core index']
  #allocation1 [shape = 'u32[72,128]{1,0:T(1,128)}', space=vmem, size = 0x9000, scoped, tag = 'internal scratch']
  %s0 = inlined_call_operand.vmem [shape: f32[2,16,16,4], index: 0, kind: input, shape index: {}]
  %s1 = inlined_call_operand.vmem [shape: f32[4,2], index: 1, kind: input, shape index: {}]
  %s2 = inlined_call_operand.vmem [shape: f32[1,2], index: 2, kind: input, shape index: {}]
  %s3 = inlined_call_operand.vmem [shape: f32[8,8], index: 3, kind: input, shape index: {}]
  %s4 = inlined_call_operand.vmem [shape: f32[1,8], index: 4, kind: input, shape index: {}]
  %s5 = inlined_call_operand.vmem [shape: f32[2,16,16,8], index: 5, kind: output, shape index: {}]
  %s6 = sld [smem:[#allocation0]]
  $region53: #{simsppf_pallas.1} parent=0
    _
  %s8 = ssub.s32 1, %s6
  %s9 = scalar_select 0, %s8, %s6
  loop: start=0, step=1, limit=4
  $region2: #{simsppf_pallas.1} parent=0 // loop_pre_header
    _
  $region3: #{simsppf_pallas.1} parent=0 // loop_header
    %s11 = sphi 0, %s15
    %p12 = scmp.ge.s32.totalorder %s11, 4
    %s21 = sphi 0, %s23
    %s24 = sphi 0, %s21
    %s25 = sphi 0, %s24
    %s41 = sphi 0, %s25
    %s45 = sphi 0, %s45
    %s47 = sphi 0, %s45
    %s48 = sphi 0, %s47
    %s62 = sphi 0, %s48
    %s66 = sphi 0, %s66
    %s68 = sphi 0, %s66
    %s69 = sphi 0, %s68
    %s83 = sphi 0, %s69
    %s87 = sphi 0, %s87
    %s89 = sphi 0, %s87
    %s90 = sphi 0, %s89
    %s104 = sphi 0, %s90
    %s108 = sphi 0, %s108
    %s110 = sphi 0, %s108
    %s111 = sphi 0, %s110
    %s125 = sphi 0, %s111
    %s131 = sphi 0, %s133
    %s134 = sphi 0, %s131
    %s135 = sphi 0, %s134
    %s151 = sphi 0, %s135
  $region4: #{simsppf_pallas.1} parent=0 // loop_header_branch
    %14 = sbr.rel (%p12) target = $region8
  $region5: #{simsppf_pallas.1} parent=0 // loop_body
    %s16 = ssub.s32 %s11, 1
    %s17 = ssub.s32 %s11, 2
    %s18 = sadd.s32 %s11, 1
    %s19 = ssub.s32 %s11, %s18
    %p20 = scmp.eq.s32.totalorder %s19, 0
    %s22 = sadd.s32 %s21, 1
    %s23 = scalar_select %p20, %s21, %s22
    %p26 = pneg %p20
    %p27 = scmp.eq.s32.totalorder %s11, 1
    %p28 = por %p26, %p27
    %p29 = scmp.ne.s32.totalorder %s21, %s24
    %p30 = scmp.eq.s32.totalorder %s11, 0
    %p31 = por %p29, %p30
    %p32 = scmp.ne.s32.totalorder %s21, %s24
    %p33 = scmp.eq.s32.totalorder %s16, 1
    %p34 = por %p32, %p33
    %p35 = scmp.ne.s32.totalorder %s24, %s25
    %p36 = scmp.eq.s32.totalorder %s16, 0
    %p37 = por %p35, %p36
    %p38 = scmp.ne.s32.totalorder %s24, %s25
    %p39 = scmp.eq.s32.totalorder %s17, 1
    %p40 = por %p38, %p39
    %p42 = scmp.ne.s32.totalorder %s25, %s41
    %p43 = scmp.eq.s32.totalorder %s17, 0
    %p44 = por %p42, %p43
    %s46 = sadd.s32 %s45, 1
    %p49 = scmp.eq.s32.totalorder %s11, 1
    %p50 = scmp.ne.s32.totalorder %s45, %s47
    %p51 = scmp.eq.s32.totalorder %s11, 0
    %p52 = por %p50, %p51
    %p53 = scmp.ne.s32.totalorder %s45, %s47
    %p54 = scmp.eq.s32.totalorder %s16, 1
    %p55 = por %p53, %p54
    %p56 = scmp.ne.s32.totalorder %s47, %s48
    %p57 = scmp.eq.s32.totalorder %s16, 0
    %p58 = por %p56, %p57
    %p59 = scmp.ne.s32.totalorder %s47, %s48
    %p60 = scmp.eq.s32.totalorder %s17, 1
    %p61 = por %p59, %p60
    %p63 = scmp.ne.s32.totalorder %s48, %s62
    %p64 = scmp.eq.s32.totalorder %s17, 0
    %p65 = por %p63, %p64
    %s67 = sadd.s32 %s66, 1
    %p70 = scmp.eq.s32.totalorder %s11, 1
    %p71 = scmp.ne.s32.totalorder %s66, %s68
    %p72 = scmp.eq.s32.totalorder %s11, 0
    %p73 = por %p71, %p72
    %p74 = scmp.ne.s32.totalorder %s66, %s68
    %p75 = scmp.eq.s32.totalorder %s16, 1
    %p76 = por %p74, %p75
    %p77 = scmp.ne.s32.totalorder %s68, %s69
    %p78 = scmp.eq.s32.totalorder %s16, 0
    %p79 = por %p77, %p78
    %p80 = scmp.ne.s32.totalorder %s68, %s69
    %p81 = scmp.eq.s32.totalorder %s17, 1
    %p82 = por %p80, %p81
    %p84 = scmp.ne.s32.totalorder %s69, %s83
    %p85 = scmp.eq.s32.totalorder %s17, 0
    %p86 = por %p84, %p85
    %s88 = sadd.s32 %s87, 1
    %p91 = scmp.eq.s32.totalorder %s11, 1
    %p92 = scmp.ne.s32.totalorder %s87, %s89
    %p93 = scmp.eq.s32.totalorder %s11, 0
    %p94 = por %p92, %p93
    %p95 = scmp.ne.s32.totalorder %s87, %s89
    %p96 = scmp.eq.s32.totalorder %s16, 1
    %p97 = por %p95, %p96
    %p98 = scmp.ne.s32.totalorder %s89, %s90
    %p99 = scmp.eq.s32.totalorder %s16, 0
    %p100 = por %p98, %p99
    %p101 = scmp.ne.s32.totalorder %s89, %s90
    %p102 = scmp.eq.s32.totalorder %s17, 1
    %p103 = por %p101, %p102
    %p105 = scmp.ne.s32.totalorder %s90, %s104
    %p106 = scmp.eq.s32.totalorder %s17, 0
    %p107 = por %p105, %p106
    %s109 = sadd.s32 %s108, 1
    %p112 = scmp.eq.s32.totalorder %s11, 1
    %p113 = scmp.ne.s32.totalorder %s108, %s110
    %p114 = scmp.eq.s32.totalorder %s11, 0
    %p115 = por %p113, %p114
    %p116 = scmp.ne.s32.totalorder %s108, %s110
    %p117 = scmp.eq.s32.totalorder %s16, 1
    %p118 = por %p116, %p117
    %p119 = scmp.ne.s32.totalorder %s110, %s111
    %p120 = scmp.eq.s32.totalorder %s16, 0
    %p121 = por %p119, %p120
    %p122 = scmp.ne.s32.totalorder %s110, %s111
    %p123 = scmp.eq.s32.totalorder %s17, 1
    %p124 = por %p122, %p123
    %p126 = scmp.ne.s32.totalorder %s111, %s125
    %p127 = scmp.eq.s32.totalorder %s17, 0
    %p128 = por %p126, %p127
    %s129 = ssub.s32 %s11, %s18
    %p130 = scmp.eq.s32.totalorder %s129, 0
    %s132 = sadd.s32 %s131, 1
    %s133 = scalar_select %p130, %s131, %s132
    %p136 = pneg %p130
    %p137 = scmp.eq.s32.totalorder %s11, 1
    %p138 = por %p136, %p137
    %p139 = scmp.ne.s32.totalorder %s131, %s134
    %p140 = scmp.eq.s32.totalorder %s11, 0
    %p141 = por %p139, %p140
    %p142 = scmp.ne.s32.totalorder %s131, %s134
    %p143 = scmp.eq.s32.totalorder %s16, 1
    %p144 = por %p142, %p143
    %p145 = scmp.ne.s32.totalorder %s134, %s135
    %p146 = scmp.eq.s32.totalorder %s16, 0
    %p147 = por %p145, %p146
    %p148 = scmp.ne.s32.totalorder %s134, %s135
    %p149 = scmp.eq.s32.totalorder %s17, 1
    %p150 = por %p148, %p149
    %p152 = scmp.ne.s32.totalorder %s135, %s151
    %p153 = scmp.eq.s32.totalorder %s17, 0
    %p154 = por %p152, %p153
    %p155 = scmp.le.s32.totalorder 1, %s11
    %p156 = scmp.lt.s32.totalorder %s11, 3
    %p157 = pnand %p155, %p156
    %p158 = pneg %p157
    // Predicated region
    $region9: #{simsppf_pallas.1} parent=5 // pred_check
      _
    $region10: #{simsppf_pallas.1} parent=5 // pred_check_branch
      %160 = sbr.rel (%p157) target = $region12
    $region11: #{simsppf_pallas.1} parent=5 // pred_region
      %s161 = ssub.s32 %s11, 1
      // Predicated region
      $region13: #{simsppf_pallas.1} parent=11 // pred_check
        %p162 = pneg %p58
      $region14: #{simsppf_pallas.1} parent=11 // pred_check_branch
        %164 = sbr.rel (%p162) target = $region16
      $region15: #{simsppf_pallas.1} parent=11 // pred_region
        _
      $region16: #{simsppf_pallas.1} parent=11 // pred_fallthru
        _
      // Predicated region
      $region17: #{simsppf_pallas.1} parent=11 // pred_check
        %p165 = pneg %p79
      $region18: #{simsppf_pallas.1} parent=11 // pred_check_branch
        %167 = sbr.rel (%p165) target = $region20
      $region19: #{simsppf_pallas.1} parent=11 // pred_region
        _
      $region20: #{simsppf_pallas.1} parent=11 // pred_fallthru
        _
      // Predicated region
      $region21: #{simsppf_pallas.1} parent=11 // pred_check
        %p168 = pneg %p100
      $region22: #{simsppf_pallas.1} parent=11 // pred_check_branch
        %170 = sbr.rel (%p168) target = $region24
      $region23: #{simsppf_pallas.1} parent=11 // pred_region
        _
      $region24: #{simsppf_pallas.1} parent=11 // pred_fallthru
        _
      // Predicated region
      $region25: #{simsppf_pallas.1} parent=11 // pred_check
        %p171 = pneg %p121
      $region26: #{simsppf_pallas.1} parent=11 // pred_check_branch
        %173 = sbr.rel (%p171) target = $region28
      $region27: #{simsppf_pallas.1} parent=11 // pred_region
        _
      $region28: #{simsppf_pallas.1} parent=11 // pred_fallthru
        _
    $region12: #{simsppf_pallas.1} parent=5 // pred_fallthru
      _
    %p174 = scmp.lt.s32.totalorder %s11, 2
    // Predicated region
    $region29: #{simsppf_pallas.1} parent=5 // pred_check
      %p175 = pneg %p174
    $region30: #{simsppf_pallas.1} parent=5 // pred_check_branch
      %177 = sbr.rel (%p175) target = $region32
    $region31: #{simsppf_pallas.1} parent=5 // pred_region
      // Predicated region
      $region33: #{simsppf_pallas.1} parent=31 // pred_check
        %p178 = pneg %p31
      $region34: #{simsppf_pallas.1} parent=31 // pred_check_branch
        %180 = sbr.rel (%p178) target = $region36
      $region35: #{simsppf_pallas.1} parent=31 // pred_region
        %p181 = scmp.lt.s32.totalorder %s11, 1
        %s182 = scalar_select %p181, %s11, 1
        %s183 = smul.addr %s182, 32
        %s184 = smul.addr %s183, 8
        %s185 = scalar_lea.vmem %s0, %s184
      $region36: #{simsppf_pallas.1} parent=31 // pred_fallthru
        _
    $region32: #{simsppf_pallas.1} parent=5 // pred_fallthru
      _
    %p186 = scmp.le.s32.totalorder 1, %s11
    %p187 = scmp.lt.s32.totalorder %s11, 3
    %p188 = pnand %p186, %p187
    %p189 = pneg %p188
    // Predicated region
    $region37: #{simsppf_pallas.1} parent=5 // pred_check
      _
    $region38: #{simsppf_pallas.1} parent=5 // pred_check_branch
      %191 = sbr.rel (%p188) target = $region40
    $region39: #{simsppf_pallas.1} parent=5 // pred_region
      %s192 = ssub.s32 %s11, 1
      %p193 = scmp.lt.s32.totalorder %s16, 1
      %s194 = scalar_select %p193, %s16, 1
      %s195 = smul.addr %s194, 32
      %s196 = smul.addr %s195, 8
      %s197 = scalar_lea.vmem %s0, %s196
      %p198 = pneg %p37
      %p199 = pneg %p34
      %p200 = pneg %p58
      %p201 = pneg %p55
      %p202 = pneg %p79
      %p203 = pneg %p76
      %p204 = pneg %p100
      %p205 = pneg %p97
      %p206 = pneg %p121
      %p207 = pneg %p118
      %p208 = pneg %p147
      %p209 = pneg %p144
      %p210 = scmp.lt.s32.totalorder %s16, 1
      %s211 = scalar_select %p210, %s16, 1
      %s212 = smul.addr %s211, 32
      %s213 = smul.addr %s212, 8
      %s214 = scalar_lea.vmem %s5, %s213
      %p215 = scmp.lt.s32.totalorder %s16, 1
      %s216 = scalar_select %p215, %s16, 1
      %s217 = smul.addr %s216, 32
      %s218 = smul.addr %s217, 8
      %s219 = scalar_lea.vmem %s0, %s218
      %p220 = scmp.lt.s32.totalorder %s16, 1
      %s221 = scalar_select %p220, %s16, 1
      %s222 = smul.addr %s221, 32
      %s223 = smul.addr %s222, 8
      %s224 = scalar_lea.vmem %s5, %s223
      %v225 = vld [vmem:[%s219] sm:$0xff]
      %v226 = vld [vmem:[%s219 + $0x8] sm:$0xff]
      %v227 = vld [vmem:[%s219 + $0x10] sm:$0xff]
      %v228 = vld [vmem:[%s219 + $0x18] sm:$0xff]
      %v229 = vld [vmem:[%s219 + $0x20] sm:$0xff]
      %v230 = vld [vmem:[%s219 + $0x28] sm:$0xff]
      %v231 = vld [vmem:[%s219 + $0x30] sm:$0xff]
      %v232 = vld [vmem:[%s219 + $0x38] sm:$0xff]
      %v233 = vld [vmem:[%s219 + $0x40] sm:$0xff]
      %v234 = vld [vmem:[%s219 + $0x48] sm:$0xff]
      %v235 = vld [vmem:[%s219 + $0x50] sm:$0xff]
      %v236 = vld [vmem:[%s219 + $0x58] sm:$0xff]
      %v237 = vld [vmem:[%s219 + $0x60] sm:$0xff]
      %v238 = vld [vmem:[%s219 + $0x68] sm:$0xff]
      %v239 = vld [vmem:[%s219 + $0x70] sm:$0xff]
      %v240 = vld [vmem:[%s219 + $0x78] sm:$0xff]
      %v241 = vld [vmem:[%s219 + $0x80] sm:$0xff]
      %v242 = vld [vmem:[%s219 + $0x88] sm:$0xff]
      %v243 = vld [vmem:[%s219 + $0x90] sm:$0xff]
      %v244 = vld [vmem:[%s219 + $0x98] sm:$0xff]
      %v245 = vld [vmem:[%s219 + $0xa0] sm:$0xff]
      %v246 = vld [vmem:[%s219 + $0xa8] sm:$0xff]
      %v247 = vld [vmem:[%s219 + $0xb0] sm:$0xff]
      %v248 = vld [vmem:[%s219 + $0xb8] sm:$0xff]
      %v249 = vld [vmem:[%s219 + $0xc0] sm:$0xff]
      %v250 = vld [vmem:[%s219 + $0xc8] sm:$0xff]
      %v251 = vld [vmem:[%s219 + $0xd0] sm:$0xff]
      %v252 = vld [vmem:[%s219 + $0xd8] sm:$0xff]
      %v253 = vld [vmem:[%s219 + $0xe0] sm:$0xff]
      %v254 = vld [vmem:[%s219 + $0xe8] sm:$0xff]
      %v255 = vld [vmem:[%s219 + $0xf0] sm:$0xff]
      %v256 = vld [vmem:[%s219 + $0xf8] sm:$0xff]
      %v257 = vld [vmem:[%s1] sm:$0xf]
      %v258 = vld [vmem:[%s2] sm:$0x1]
      %v260 = vperm.slane %v258, 0
      %vm262 = vcmask 31744
      %v264 = vsel %vm262, %v225, 0
      %v267 = vsel %vm262, %v226, 0
      %v270 = vsel %vm262, %v227, 0
      %v273 = vsel %vm262, %v228, 0
      %v276 = vsel %vm262, %v229, 0
      %v279 = vsel %vm262, %v230, 0
      %v282 = vsel %vm262, %v231, 0
      %v285 = vsel %vm262, %v232, 0
      %v288 = vsel %vm262, %v233, 0
      %v291 = vsel %vm262, %v234, 0
      %v294 = vsel %vm262, %v235, 0
      %v297 = vsel %vm262, %v236, 0
      %v300 = vsel %vm262, %v237, 0
      %v303 = vsel %vm262, %v238, 0
      %v306 = vsel %vm262, %v239, 0
      %v309 = vsel %vm262, %v240, 0
      %v312 = vsel %vm262, %v241, 0
      %v315 = vsel %vm262, %v242, 0
      %v318 = vsel %vm262, %v243, 0
      %v321 = vsel %vm262, %v244, 0
      %v324 = vsel %vm262, %v245, 0
      %v327 = vsel %vm262, %v246, 0
      %v330 = vsel %vm262, %v247, 0
      %v333 = vsel %vm262, %v248, 0
      %v336 = vsel %vm262, %v249, 0
      %v339 = vsel %vm262, %v250, 0
      %v342 = vsel %vm262, %v251, 0
      %v345 = vsel %vm262, %v252, 0
      %v348 = vsel %vm262, %v253, 0
      %v351 = vsel %vm262, %v254, 0
      %v354 = vsel %vm262, %v255, 0
      %v357 = vsel %vm262, %v256, 0
      %vm359 = vcmask 1043456
      %v361 = vsel %vm359, %v257, 0
      %363 = vmatpush.msra.mxu0 0.0
      %364 = vmatpush.msra.mxu0 0.0
      %365 = vmatpush.msra.mxu0 0.0
      %366 = vmatpush.msra.mxu0 0.0
      %367 = vmatpush.msra.mxu0 0.0
      %368 = vmatpush.msra.mxu0 0.0
      %369 = vmatpush.msra.mxu0 0.0
      %370 = vmatpush.msra.mxu0 0.0
      %371 = vmatpush.msra.mxu0 0.0
      %372 = vmatpush.msra.mxu0 0.0
      %373 = vmatpush.msra.mxu0 0.0
      %374 = vmatpush.msra.mxu0 0.0
      %375 = vmatpush.msra.mxu0 0.0
      %376 = vmatpush.msra.mxu0 0.0
      %377 = vmatpush.msra.mxu0 0.0
      %378 = vmatpush.msra.mxu0 %v361
      %379 = vmatmul.f32.gmra.mxu0 %v264
      %v380 = vpop.f32.mrf.mxu0
      %v381 = vadd.f32 %v260, %v380
      %382 = vmatmul.f32.gmra.mxu0 %v267
      %v383 = vpop.f32.mrf.mxu0
      %v384 = vadd.f32 %v260, %v383
      %385 = vmatmul.f32.gmra.mxu0 %v270
      %v386 = vpop.f32.mrf.mxu0
      %v387 = vadd.f32 %v260, %v386
      %388 = vmatmul.f32.gmra.mxu0 %v273
      %v389 = vpop.f32.mrf.mxu0
      %v390 = vadd.f32 %v260, %v389
      %391 = vmatmul.f32.gmra.mxu0 %v276
      %v392 = vpop.f32.mrf.mxu0
      %v393 = vadd.f32 %v260, %v392
      %394 = vmatmul.f32.gmra.mxu0 %v279
      %v395 = vpop.f32.mrf.mxu0
      %v396 = vadd.f32 %v260, %v395
      %397 = vmatmul.f32.gmra.mxu0 %v282
      %v398 = vpop.f32.mrf.mxu0
      %v399 = vadd.f32 %v260, %v398
      %400 = vmatmul.f32.gmra.mxu0 %v285
      %v401 = vpop.f32.mrf.mxu0
      %v402 = vadd.f32 %v260, %v401
      %403 = vmatmul.f32.gmra.mxu0 %v288
      %v404 = vpop.f32.mrf.mxu0
      %v405 = vadd.f32 %v260, %v404
      %406 = vmatmul.f32.gmra.mxu0 %v291
      %v407 = vpop.f32.mrf.mxu0
      %v408 = vadd.f32 %v260, %v407
      %409 = vmatmul.f32.gmra.mxu0 %v294
      %v410 = vpop.f32.mrf.mxu0
      %v411 = vadd.f32 %v260, %v410
      %412 = vmatmul.f32.gmra.mxu0 %v297
      %v413 = vpop.f32.mrf.mxu0
      %v414 = vadd.f32 %v260, %v413
      %415 = vmatmul.f32.gmra.mxu0 %v300
      %v416 = vpop.f32.mrf.mxu0
      %v417 = vadd.f32 %v260, %v416
      %418 = vmatmul.f32.gmra.mxu0 %v303
      %v419 = vpop.f32.mrf.mxu0
      %v420 = vadd.f32 %v260, %v419
      %421 = vmatmul.f32.gmra.mxu0 %v306
      %v422 = vpop.f32.mrf.mxu0
      %v423 = vadd.f32 %v260, %v422
      %424 = vmatmul.f32.gmra.mxu0 %v309
      %v425 = vpop.f32.mrf.mxu0
      %v426 = vadd.f32 %v260, %v425
      %427 = vmatmul.f32.gmra.mxu0 %v312
      %v428 = vpop.f32.mrf.mxu0
      %v429 = vadd.f32 %v260, %v428
      %430 = vmatmul.f32.gmra.mxu0 %v315
      %v431 = vpop.f32.mrf.mxu0
      %v432 = vadd.f32 %v260, %v431
      %433 = vmatmul.f32.gmra.mxu0 %v318
      %v434 = vpop.f32.mrf.mxu0
      %v435 = vadd.f32 %v260, %v434
      %436 = vmatmul.f32.gmra.mxu0 %v321
      %v437 = vpop.f32.mrf.mxu0
      %v438 = vadd.f32 %v260, %v437
      %439 = vmatmul.f32.gmra.mxu0 %v324
      %v440 = vpop.f32.mrf.mxu0
      %v441 = vadd.f32 %v260, %v440
      %442 = vmatmul.f32.gmra.mxu0 %v327
      %v443 = vpop.f32.mrf.mxu0
      %v444 = vadd.f32 %v260, %v443
      %445 = vmatmul.f32.gmra.mxu0 %v330
      %v446 = vpop.f32.mrf.mxu0
      %v447 = vadd.f32 %v260, %v446
      %448 = vmatmul.f32.gmra.mxu0 %v333
      %v449 = vpop.f32.mrf.mxu0
      %v450 = vadd.f32 %v260, %v449
      %451 = vmatmul.f32.gmra.mxu0 %v336
      %v452 = vpop.f32.mrf.mxu0
      %v453 = vadd.f32 %v260, %v452
      %454 = vmatmul.f32.gmra.mxu0 %v339
      %v455 = vpop.f32.mrf.mxu0
      %v456 = vadd.f32 %v260, %v455
      %457 = vmatmul.f32.gmra.mxu0 %v342
      %v458 = vpop.f32.mrf.mxu0
      %v459 = vadd.f32 %v260, %v458
      %460 = vmatmul.f32.gmra.mxu0 %v345
      %v461 = vpop.f32.mrf.mxu0
      %v462 = vadd.f32 %v260, %v461
      %463 = vmatmul.f32.gmra.mxu0 %v348
      %v464 = vpop.f32.mrf.mxu0
      %v465 = vadd.f32 %v260, %v464
      %466 = vmatmul.f32.gmra.mxu0 %v351
      %v467 = vpop.f32.mrf.mxu0
      %v468 = vadd.f32 %v260, %v467
      %469 = vmatmul.f32.gmra.mxu0 %v354
      %v470 = vpop.f32.mrf.mxu0
      %v471 = vadd.f32 %v260, %v470
      %472 = vmatmul.f32.gmra.mxu0 %v357
      %v473 = vpop.f32.mrf.mxu0
      %v474 = vadd.f32 %v260, %v473
      %475 = vdwg.mxu0
      %v476 = vmax.f32 %v381, 0.0
      %v477 = vmax.f32 %v384, 0.0
      %v478 = vmax.f32 %v387, 0.0
      %v479 = vmax.f32 %v390, 0.0
      %v480 = vmax.f32 %v393, 0.0
      %v481 = vmax.f32 %v396, 0.0
      %v482 = vmax.f32 %v399, 0.0
      %v483 = vmax.f32 %v402, 0.0
      %v484 = vmax.f32 %v405, 0.0
      %v485 = vmax.f32 %v408, 0.0
      %v486 = vmax.f32 %v411, 0.0
      %v487 = vmax.f32 %v414, 0.0
      %v488 = vmax.f32 %v417, 0.0
      %v489 = vmax.f32 %v420, 0.0
      %v490 = vmax.f32 %v423, 0.0
      %v491 = vmax.f32 %v426, 0.0
      %v492 = vmax.f32 %v429, 0.0
      %v493 = vmax.f32 %v432, 0.0
      %v494 = vmax.f32 %v435, 0.0
      %v495 = vmax.f32 %v438, 0.0
      %v496 = vmax.f32 %v441, 0.0
      %v497 = vmax.f32 %v444, 0.0
      %v498 = vmax.f32 %v447, 0.0
      %v499 = vmax.f32 %v450, 0.0
      %v500 = vmax.f32 %v453, 0.0
      %v501 = vmax.f32 %v456, 0.0
      %v502 = vmax.f32 %v459, 0.0
      %v503 = vmax.f32 %v462, 0.0
      %v504 = vmax.f32 %v465, 0.0
      %v505 = vmax.f32 %v468, 0.0
      %v506 = vmax.f32 %v471, 0.0
      %v507 = vmax.f32 %v474, 0.0
      %v508 = vlaneseq
      %v509 = vshrl.u32 %v508, 7
      %v510 = vadd.s32 %v509, 8
      %vm511 = vcmp.lt.s32.totalorder %v509, 15
      %vm512 = vcmp.lt.s32.totalorder %v510, 15
      %vm513 = vcmp.ge.s32.totalorder %v509, 1
      %vm514 = vcmp.ge.s32.totalorder %v510, 1
      %vm515 = vcmp.lt.s32.totalorder %v509, 14
      %vm516 = vcmp.lt.s32.totalorder %v510, 14
      %vm517 = vcmp.ge.s32.totalorder %v509, 2
      %vm518 = vcmp.ge.s32.totalorder %v510, 2
      %v519 = vld [vmem:[%s3] sm:$0x3]
      %v520 = vrot.slane %v476, 1
      %v521 = vrot.slane %v478, 1
      %v522 = vrot.slane %v480, 1
      %v523 = vrot.slane %v482, 1
      %v524 = vrot.slane %v484, 1
      %v525 = vrot.slane %v486, 1
      %v526 = vrot.slane %v488, 1
      %v527 = vrot.slane %v490, 1
      %v528 = vrot.slane %v492, 1
      %v529 = vrot.slane %v494, 1
      %v530 = vrot.slane %v496, 1
      %v531 = vrot.slane %v498, 1
      %v532 = vrot.slane %v500, 1
      %v533 = vrot.slane %v502, 1
      %v534 = vrot.slane %v504, 1
      %v535 = vrot.slane %v506, 1
      %v536 = vrot.slane %v477, 1
      %v537 = vrot.slane %v479, 1
      %v538 = vrot.slane %v481, 1
      %v539 = vrot.slane %v483, 1
      %v540 = vrot.slane %v485, 1
      %v541 = vrot.slane %v487, 1
      %v542 = vrot.slane %v489, 1
      %v543 = vrot.slane %v491, 1
      %v544 = vrot.slane %v493, 1
      %v545 = vrot.slane %v495, 1
      %v546 = vrot.slane %v497, 1
      %v547 = vrot.slane %v499, 1
      %v548 = vrot.slane %v501, 1
      %v549 = vrot.slane %v503, 1
      %v550 = vrot.slane %v505, 1
      %v551 = vrot.slane %v507, 1
      %vm552 = vcmp.lt.s32.totalorder %v509, 7
      %v553 = vsel %vm552, %v520, %v536
      %v554 = vsel %vm552, %v521, %v537
      %v555 = vsel %vm552, %v522, %v538
      %v556 = vsel %vm552, %v523, %v539
      %v557 = vsel %vm552, %v524, %v540
      %v558 = vsel %vm552, %v525, %v541
      %v559 = vsel %vm552, %v526, %v542
      %v560 = vsel %vm552, %v527, %v543
      %v561 = vsel %vm552, %v528, %v544
      %v562 = vsel %vm552, %v529, %v545
      %v563 = vsel %vm552, %v530, %v546
      %v564 = vsel %vm552, %v531, %v547
      %v565 = vsel %vm552, %v532, %v548
      %v566 = vsel %vm552, %v533, %v549
      %v567 = vsel %vm552, %v534, %v550
      %v568 = vsel %vm552, %v535, %v551
      %v569 = vsel %vm552, %v536, %v520
      %v570 = vsel %vm552, %v537, %v521
      %v571 = vsel %vm552, %v538, %v522
      %v572 = vsel %vm552, %v539, %v523
      %v573 = vsel %vm552, %v540, %v524
      %v574 = vsel %vm552, %v541, %v525
      %v575 = vsel %vm552, %v542, %v526
      %v576 = vsel %vm552, %v543, %v527
      %v577 = vsel %vm552, %v544, %v528
      %v578 = vsel %vm552, %v545, %v529
      %v579 = vsel %vm552, %v546, %v530
      %v580 = vsel %vm552, %v547, %v531
      %v581 = vsel %vm552, %v548, %v532
      %v582 = vsel %vm552, %v549, %v533
      %v583 = vsel %vm552, %v550, %v534
      %v584 = vsel %vm552, %v551, %v535
      %v585 = vsel %vm511, %v553, -inf
      %v586 = vsel %vm512, %v569, -inf
      %v587 = vsel %vm511, %v554, -inf
      %v588 = vsel %vm512, %v570, -inf
      %v589 = vsel %vm511, %v555, -inf
      %v590 = vsel %vm512, %v571, -inf
      %v591 = vsel %vm511, %v556, -inf
      %v592 = vsel %vm512, %v572, -inf
      %v593 = vsel %vm511, %v557, -inf
      %v594 = vsel %vm512, %v573, -inf
      %v595 = vsel %vm511, %v558, -inf
      %v596 = vsel %vm512, %v574, -inf
      %v597 = vsel %vm511, %v559, -inf
      %v598 = vsel %vm512, %v575, -inf
      %v599 = vsel %vm511, %v560, -inf
      %v600 = vsel %vm512, %v576, -inf
      %v601 = vsel %vm511, %v561, -inf
      %v602 = vsel %vm512, %v577, -inf
      %v603 = vsel %vm511, %v562, -inf
      %v604 = vsel %vm512, %v578, -inf
      %v605 = vsel %vm511, %v563, -inf
      %v606 = vsel %vm512, %v579, -inf
      %v607 = vsel %vm511, %v564, -inf
      %v608 = vsel %vm512, %v580, -inf
      %v609 = vsel %vm511, %v565, -inf
      %v610 = vsel %vm512, %v581, -inf
      %v611 = vsel %vm511, %v566, -inf
      %v612 = vsel %vm512, %v582, -inf
      %v613 = vsel %vm511, %v567, -inf
      %v614 = vsel %vm512, %v583, -inf
      %v615 = vsel %vm511, %v568, -inf
      %v616 = vsel %vm512, %v584, -inf
      %v617 = vmax.f32 %v476, %v585
      %v618 = vmax.f32 %v477, %v586
      %v619 = vmax.f32 %v478, %v587
      %v620 = vmax.f32 %v479, %v588
      %v621 = vmax.f32 %v480, %v589
      %v622 = vmax.f32 %v481, %v590
      %v623 = vmax.f32 %v482, %v591
      %v624 = vmax.f32 %v483, %v592
      %v625 = vmax.f32 %v484, %v593
      %v626 = vmax.f32 %v485, %v594
      %v627 = vmax.f32 %v486, %v595
      %v628 = vmax.f32 %v487, %v596
      %v629 = vmax.f32 %v488, %v597
      %v630 = vmax.f32 %v489, %v598
      %v631 = vmax.f32 %v490, %v599
      %v632 = vmax.f32 %v491, %v600
      %v633 = vmax.f32 %v492, %v601
      %v634 = vmax.f32 %v493, %v602
      %v635 = vmax.f32 %v494, %v603
      %v636 = vmax.f32 %v495, %v604
      %v637 = vmax.f32 %v496, %v605
      %v638 = vmax.f32 %v497, %v606
      %v639 = vmax.f32 %v498, %v607
      %v640 = vmax.f32 %v499, %v608
      %v641 = vmax.f32 %v500, %v609
      %v642 = vmax.f32 %v501, %v610
      %v643 = vmax.f32 %v502, %v611
      %v644 = vmax.f32 %v503, %v612
      %v645 = vmax.f32 %v504, %v613
      %v646 = vmax.f32 %v505, %v614
      %v647 = vmax.f32 %v506, %v615
      %v648 = vmax.f32 %v507, %v616
      %v649 = vrot.slane %v476, 7
      %v650 = vrot.slane %v478, 7
      %v651 = vrot.slane %v480, 7
      %v652 = vrot.slane %v482, 7
      %v653 = vrot.slane %v484, 7
      %v654 = vrot.slane %v486, 7
      %v655 = vrot.slane %v488, 7
      %v656 = vrot.slane %v490, 7
      %v657 = vrot.slane %v492, 7
      %v658 = vrot.slane %v494, 7
      %v659 = vrot.slane %v496, 7
      %v660 = vrot.slane %v498, 7
      %v661 = vrot.slane %v500, 7
      %v662 = vrot.slane %v502, 7
      %v663 = vrot.slane %v504, 7
      %v664 = vrot.slane %v506, 7
      %v665 = vrot.slane %v477, 7
      %v666 = vrot.slane %v479, 7
      %v667 = vrot.slane %v481, 7
      %v668 = vrot.slane %v483, 7
      %v669 = vrot.slane %v485, 7
      %v670 = vrot.slane %v487, 7
      %v671 = vrot.slane %v489, 7
      %v672 = vrot.slane %v491, 7
      %v673 = vrot.slane %v493, 7
      %v674 = vrot.slane %v495, 7
      %v675 = vrot.slane %v497, 7
      %v676 = vrot.slane %v499, 7
      %v677 = vrot.slane %v501, 7
      %v678 = vrot.slane %v503, 7
      %v679 = vrot.slane %v505, 7
      %v680 = vrot.slane %v507, 7
      %vm681 = vcmp.lt.s32.totalorder %v509, 1
      %v682 = vsel %vm681, %v649, %v665
      %v683 = vsel %vm681, %v650, %v666
      %v684 = vsel %vm681, %v651, %v667
      %v685 = vsel %vm681, %v652, %v668
      %v686 = vsel %vm681, %v653, %v669
      %v687 = vsel %vm681, %v654, %v670
      %v688 = vsel %vm681, %v655, %v671
      %v689 = vsel %vm681, %v656, %v672
      %v690 = vsel %vm681, %v657, %v673
      %v691 = vsel %vm681, %v658, %v674
      %v692 = vsel %vm681, %v659, %v675
      %v693 = vsel %vm681, %v660, %v676
      %v694 = vsel %vm681, %v661, %v677
      %v695 = vsel %vm681, %v662, %v678
      %v696 = vsel %vm681, %v663, %v679
      %v697 = vsel %vm681, %v664, %v680
      %v698 = vsel %vm681, %v665, %v649
      %v699 = vsel %vm681, %v666, %v650
      %v700 = vsel %vm681, %v667, %v651
      %v701 = vsel %vm681, %v668, %v652
      %v702 = vsel %vm681, %v669, %v653
      %v703 = vsel %vm681, %v670, %v654
      %v704 = vsel %vm681, %v671, %v655
      %v705 = vsel %vm681, %v672, %v656
      %v706 = vsel %vm681, %v673, %v657
      %v707 = vsel %vm681, %v674, %v658
      %v708 = vsel %vm681, %v675, %v659
      %v709 = vsel %vm681, %v676, %v660
      %v710 = vsel %vm681, %v677, %v661
      %v711 = vsel %vm681, %v678, %v662
      %v712 = vsel %vm681, %v679, %v663
      %v713 = vsel %vm681, %v680, %v664
      %v714 = vsel %vm513, %v698, -inf
      %v715 = vsel %vm514, %v682, -inf
      %v716 = vsel %vm513, %v699, -inf
      %v717 = vsel %vm514, %v683, -inf
      %v718 = vsel %vm513, %v700, -inf
      %v719 = vsel %vm514, %v684, -inf
      %v720 = vsel %vm513, %v701, -inf
      %v721 = vsel %vm514, %v685, -inf
      %v722 = vsel %vm513, %v702, -inf
      %v723 = vsel %vm514, %v686, -inf
      %v724 = vsel %vm513, %v703, -inf
      %v725 = vsel %vm514, %v687, -inf
      %v726 = vsel %vm513, %v704, -inf
      %v727 = vsel %vm514, %v688, -inf
      %v728 = vsel %vm513, %v705, -inf
      %v729 = vsel %vm514, %v689, -inf
      %v730 = vsel %vm513, %v706, -inf
      %v731 = vsel %vm514, %v690, -inf
      %v732 = vsel %vm513, %v707, -inf
      %v733 = vsel %vm514, %v691, -inf
      %v734 = vsel %vm513, %v708, -inf
      %v735 = vsel %vm514, %v692, -inf
      %v736 = vsel %vm513, %v709, -inf
      %v737 = vsel %vm514, %v693, -inf
      %v738 = vsel %vm513, %v710, -inf
      %v739 = vsel %vm514, %v694, -inf
      %v740 = vsel %vm513, %v711, -inf
      %v741 = vsel %vm514, %v695, -inf
      %v742 = vsel %vm513, %v712, -inf
      %v743 = vsel %vm514, %v696, -inf
      %v744 = vsel %vm513, %v713, -inf
      %v745 = vsel %vm514, %v697, -inf
      %v746 = vmax.f32 %v617, %v714
      %v747 = vmax.f32 %v618, %v715
      %v748 = vmax.f32 %v619, %v716
      %v749 = vmax.f32 %v620, %v717
      %v750 = vmax.f32 %v621, %v718
      %v751 = vmax.f32 %v622, %v719
      %v752 = vmax.f32 %v623, %v720
      %v753 = vmax.f32 %v624, %v721
      %v754 = vmax.f32 %v625, %v722
      %v755 = vmax.f32 %v626, %v723
      %v756 = vmax.f32 %v627, %v724
      %v757 = vmax.f32 %v628, %v725
      %v758 = vmax.f32 %v629, %v726
      %v759 = vmax.f32 %v630, %v727
      %v760 = vmax.f32 %v631, %v728
      %v761 = vmax.f32 %v632, %v729
      %v762 = vmax.f32 %v633, %v730
      %v763 = vmax.f32 %v634, %v731
      %v764 = vmax.f32 %v635, %v732
      %v765 = vmax.f32 %v636, %v733
      %v766 = vmax.f32 %v637, %v734
      %v767 = vmax.f32 %v638, %v735
      %v768 = vmax.f32 %v639, %v736
      %v769 = vmax.f32 %v640, %v737
      %v770 = vmax.f32 %v641, %v738
      %v771 = vmax.f32 %v642, %v739
      %v772 = vmax.f32 %v643, %v740
      %v773 = vmax.f32 %v644, %v741
      %v774 = vmax.f32 %v645, %v742
      %v775 = vmax.f32 %v646, %v743
      %v776 = vmax.f32 %v647, %v744
      %v777 = vmax.f32 %v648, %v745
      %v778 = vrot.slane %v476, 2
      %v779 = vrot.slane %v478, 2
      %v780 = vrot.slane %v480, 2
      %v781 = vrot.slane %v482, 2
      %v782 = vrot.slane %v484, 2
      %v783 = vrot.slane %v486, 2
      %v784 = vrot.slane %v488, 2
      %v785 = vrot.slane %v490, 2
      %v786 = vrot.slane %v492, 2
      %v787 = vrot.slane %v494, 2
      %v788 = vrot.slane %v496, 2
      %v789 = vrot.slane %v498, 2
      %v790 = vrot.slane %v500, 2
      %v791 = vrot.slane %v502, 2
      %v792 = vrot.slane %v504, 2
      %v793 = vrot.slane %v506, 2
      %v794 = vrot.slane %v477, 2
      %v795 = vrot.slane %v479, 2
      %v796 = vrot.slane %v481, 2
      %v797 = vrot.slane %v483, 2
      %v798 = vrot.slane %v485, 2
      %v799 = vrot.slane %v487, 2
      %v800 = vrot.slane %v489, 2
      %v801 = vrot.slane %v491, 2
      %v802 = vrot.slane %v493, 2
      %v803 = vrot.slane %v495, 2
      %v804 = vrot.slane %v497, 2
      %v805 = vrot.slane %v499, 2
      %v806 = vrot.slane %v501, 2
      %v807 = vrot.slane %v503, 2
      %v808 = vrot.slane %v505, 2
      %v809 = vrot.slane %v507, 2
      %vm810 = vcmp.lt.s32.totalorder %v509, 6
      %v811 = vsel %vm810, %v778, %v794
      %v812 = vsel %vm810, %v779, %v795
      %v813 = vsel %vm810, %v780, %v796
      %v814 = vsel %vm810, %v781, %v797
      %v815 = vsel %vm810, %v782, %v798
      %v816 = vsel %vm810, %v783, %v799
      %v817 = vsel %vm810, %v784, %v800
      %v818 = vsel %vm810, %v785, %v801
      %v819 = vsel %vm810, %v786, %v802
      %v820 = vsel %vm810, %v787, %v803
      %v821 = vsel %vm810, %v788, %v804
      %v822 = vsel %vm810, %v789, %v805
      %v823 = vsel %vm810, %v790, %v806
      %v824 = vsel %vm810, %v791, %v807
      %v825 = vsel %vm810, %v792, %v808
      %v826 = vsel %vm810, %v793, %v809
      %v827 = vsel %vm810, %v794, %v778
      %v828 = vsel %vm810, %v795, %v779
      %v829 = vsel %vm810, %v796, %v780
      %v830 = vsel %vm810, %v797, %v781
      %v831 = vsel %vm810, %v798, %v782
      %v832 = vsel %vm810, %v799, %v783
      %v833 = vsel %vm810, %v800, %v784
      %v834 = vsel %vm810, %v801, %v785
      %v835 = vsel %vm810, %v802, %v786
      %v836 = vsel %vm810, %v803, %v787
      %v837 = vsel %vm810, %v804, %v788
      %v838 = vsel %vm810, %v805, %v789
      %v839 = vsel %vm810, %v806, %v790
      %v840 = vsel %vm810, %v807, %v791
      %v841 = vsel %vm810, %v808, %v792
      %v842 = vsel %vm810, %v809, %v793
      %v843 = vsel %vm515, %v811, -inf
      %v844 = vsel %vm516, %v827, -inf
      %v845 = vsel %vm515, %v812, -inf
      %v846 = vsel %vm516, %v828, -inf
      %v847 = vsel %vm515, %v813, -inf
      %v848 = vsel %vm516, %v829, -inf
      %v849 = vsel %vm515, %v814, -inf
      %v850 = vsel %vm516, %v830, -inf
      %v851 = vsel %vm515, %v815, -inf
      %v852 = vsel %vm516, %v831, -inf
      %v853 = vsel %vm515, %v816, -inf
      %v854 = vsel %vm516, %v832, -inf
      %v855 = vsel %vm515, %v817, -inf
      %v856 = vsel %vm516, %v833, -inf
      %v857 = vsel %vm515, %v818, -inf
      %v858 = vsel %vm516, %v834, -inf
      %v859 = vsel %vm515, %v819, -inf
      %v860 = vsel %vm516, %v835, -inf
      %v861 = vsel %vm515, %v820, -inf
      %v862 = vsel %vm516, %v836, -inf
      %v863 = vsel %vm515, %v821, -inf
      %v864 = vsel %vm516, %v837, -inf
      %v865 = vsel %vm515, %v822, -inf
      %v866 = vsel %vm516, %v838, -inf
      %v867 = vsel %vm515, %v823, -inf
      %v868 = vsel %vm516, %v839, -inf
      %v869 = vsel %vm515, %v824, -inf
      %v870 = vsel %vm516, %v840, -inf
      %v871 = vsel %vm515, %v825, -inf
      %v872 = vsel %vm516, %v841, -inf
      %v873 = vsel %vm515, %v826, -inf
      %v874 = vsel %vm516, %v842, -inf
      %v875 = vmax.f32 %v746, %v843
      %v876 = vmax.f32 %v747, %v844
      %v877 = vmax.f32 %v748, %v845
      %v878 = vmax.f32 %v749, %v846
      %v879 = vmax.f32 %v750, %v847
      %v880 = vmax.f32 %v751, %v848
      %v881 = vmax.f32 %v752, %v849
      %v882 = vmax.f32 %v753, %v850
      %v883 = vmax.f32 %v754, %v851
      %v884 = vmax.f32 %v755, %v852
      %v885 = vmax.f32 %v756, %v853
      %v886 = vmax.f32 %v757, %v854
      %v887 = vmax.f32 %v758, %v855
      %v888 = vmax.f32 %v759, %v856
      %v889 = vmax.f32 %v760, %v857
      %v890 = vmax.f32 %v761, %v858
      %v891 = vmax.f32 %v762, %v859
      %v892 = vmax.f32 %v763, %v860
      %v893 = vmax.f32 %v764, %v861
      %v894 = vmax.f32 %v765, %v862
      %v895 = vmax.f32 %v766, %v863
      %v896 = vmax.f32 %v767, %v864
      %v897 = vmax.f32 %v768, %v865
      %v898 = vmax.f32 %v769, %v866
      %v899 = vmax.f32 %v770, %v867
      %v900 = vmax.f32 %v771, %v868
      %v901 = vmax.f32 %v772, %v869
      %v902 = vmax.f32 %v773, %v870
      %v903 = vmax.f32 %v774, %v871
      %v904 = vmax.f32 %v775, %v872
      %v905 = vmax.f32 %v776, %v873
      %v906 = vmax.f32 %v777, %v874
      %v907 = vrot.slane %v476, 6
      %v908 = vrot.slane %v478, 6
      %v909 = vrot.slane %v480, 6
      %v910 = vrot.slane %v482, 6
      %v911 = vrot.slane %v484, 6
      %v912 = vrot.slane %v486, 6
      %v913 = vrot.slane %v488, 6
      %v914 = vrot.slane %v490, 6
      %v915 = vrot.slane %v492, 6
      %v916 = vrot.slane %v494, 6
      %v917 = vrot.slane %v496, 6
      %v918 = vrot.slane %v498, 6
      %v919 = vrot.slane %v500, 6
      %v920 = vrot.slane %v502, 6
      %v921 = vrot.slane %v504, 6
      %v922 = vrot.slane %v506, 6
      %v923 = vrot.slane %v477, 6
      %v924 = vrot.slane %v479, 6
      %v925 = vrot.slane %v481, 6
      %v926 = vrot.slane %v483, 6
      %v927 = vrot.slane %v485, 6
      %v928 = vrot.slane %v487, 6
      %v929 = vrot.slane %v489, 6
      %v930 = vrot.slane %v491, 6
      %v931 = vrot.slane %v493, 6
      %v932 = vrot.slane %v495, 6
      %v933 = vrot.slane %v497, 6
      %v934 = vrot.slane %v499, 6
      %v935 = vrot.slane %v501, 6
      %v936 = vrot.slane %v503, 6
      %v937 = vrot.slane %v505, 6
      %v938 = vrot.slane %v507, 6
      %vm939 = vcmp.lt.s32.totalorder %v509, 2
      %v940 = vsel %vm939, %v907, %v923
      %v941 = vsel %vm939, %v908, %v924
      %v942 = vsel %vm939, %v909, %v925
      %v943 = vsel %vm939, %v910, %v926
      %v944 = vsel %vm939, %v911, %v927
      %v945 = vsel %vm939, %v912, %v928
      %v946 = vsel %vm939, %v913, %v929
      %v947 = vsel %vm939, %v914, %v930
      %v948 = vsel %vm939, %v915, %v931
      %v949 = vsel %vm939, %v916, %v932
      %v950 = vsel %vm939, %v917, %v933
      %v951 = vsel %vm939, %v918, %v934
      %v952 = vsel %vm939, %v919, %v935
      %v953 = vsel %vm939, %v920, %v936
      %v954 = vsel %vm939, %v921, %v937
      %v955 = vsel %vm939, %v922, %v938
      %v956 = vsel %vm939, %v923, %v907
      %v957 = vsel %vm939, %v924, %v908
      %v958 = vsel %vm939, %v925, %v909
      %v959 = vsel %vm939, %v926, %v910
      %v960 = vsel %vm939, %v927, %v911
      %v961 = vsel %vm939, %v928, %v912
      %v962 = vsel %vm939, %v929, %v913
      %v963 = vsel %vm939, %v930, %v914
      %v964 = vsel %vm939, %v931, %v915
      %v965 = vsel %vm939, %v932, %v916
      %v966 = vsel %vm939, %v933, %v917
      %v967 = vsel %vm939, %v934, %v918
      %v968 = vsel %vm939, %v935, %v919
      %v969 = vsel %vm939, %v936, %v920
      %v970 = vsel %vm939, %v937, %v921
      %v971 = vsel %vm939, %v938, %v922
      %v972 = vsel %vm517, %v956, -inf
      %v973 = vsel %vm518, %v940, -inf
      %v974 = vsel %vm517, %v957, -inf
      %v975 = vsel %vm518, %v941, -inf
      %v976 = vsel %vm517, %v958, -inf
      %v977 = vsel %vm518, %v942, -inf
      %v978 = vsel %vm517, %v959, -inf
      %v979 = vsel %vm518, %v943, -inf
      %v980 = vsel %vm517, %v960, -inf
      %v981 = vsel %vm518, %v944, -inf
      %v982 = vsel %vm517, %v961, -inf
      %v983 = vsel %vm518, %v945, -inf
      %v984 = vsel %vm517, %v962, -inf
      %v985 = vsel %vm518, %v946, -inf
      %v986 = vsel %vm517, %v963, -inf
      %v987 = vsel %vm518, %v947, -inf
      %v988 = vsel %vm517, %v964, -inf
      %v989 = vsel %vm518, %v948, -inf
      %v990 = vsel %vm517, %v965, -inf
      %v991 = vsel %vm518, %v949, -inf
      %v992 = vsel %vm517, %v966, -inf
      %v993 = vsel %vm518, %v950, -inf
      %v994 = vsel %vm517, %v967, -inf
      %v995 = vsel %vm518, %v951, -inf
      %v996 = vsel %vm517, %v968, -inf
      %v997 = vsel %vm518, %v952, -inf
      %v998 = vsel %vm517, %v969, -inf
      %v999 = vsel %vm518, %v953, -inf
      %v1000 = vsel %vm517, %v970, -inf
      %v1001 = vsel %vm518, %v954, -inf
      %v1002 = vsel %vm517, %v971, -inf
      %v1003 = vsel %vm518, %v955, -inf
      %v1004 = vmax.f32 %v875, %v972
      %v1005 = vmax.f32 %v876, %v973
      %v1006 = vmax.f32 %v877, %v974
      %v1007 = vmax.f32 %v878, %v975
      %v1008 = vmax.f32 %v879, %v976
      %v1009 = vmax.f32 %v880, %v977
      %v1010 = vmax.f32 %v881, %v978
      %v1011 = vmax.f32 %v882, %v979
      %v1012 = vmax.f32 %v883, %v980
      %v1013 = vmax.f32 %v884, %v981
      %v1014 = vmax.f32 %v885, %v982
      %v1015 = vmax.f32 %v886, %v983
      %v1016 = vmax.f32 %v887, %v984
      %v1017 = vmax.f32 %v888, %v985
      %v1018 = vmax.f32 %v889, %v986
      %v1019 = vmax.f32 %v890, %v987
      %v1020 = vmax.f32 %v891, %v988
      %v1021 = vmax.f32 %v892, %v989
      %v1022 = vmax.f32 %v893, %v990
      %v1023 = vmax.f32 %v894, %v991
      %v1024 = vmax.f32 %v895, %v992
      %v1025 = vmax.f32 %v896, %v993
      %v1026 = vmax.f32 %v897, %v994
      %v1027 = vmax.f32 %v898, %v995
      %v1028 = vmax.f32 %v899, %v996
      %v1029 = vmax.f32 %v900, %v997
      %v1030 = vmax.f32 %v901, %v998
      %v1031 = vmax.f32 %v902, %v999
      %v1032 = vmax.f32 %v903, %v1000
      %v1033 = vmax.f32 %v904, %v1001
      %v1034 = vmax.f32 %v905, %v1002
      %v1035 = vmax.f32 %v906, %v1003
      %v1036 = vmax.f32 %v1004, %v1006
      %v1037 = vmax.f32 %v1005, %v1007
      %v1038 = vmax.f32 %v1006, %v1008
      %v1039 = vmax.f32 %v1007, %v1009
      %v1040 = vmax.f32 %v1008, %v1010
      %v1041 = vmax.f32 %v1009, %v1011
      %v1042 = vmax.f32 %v1010, %v1012
      %v1043 = vmax.f32 %v1011, %v1013
      %v1044 = vmax.f32 %v1012, %v1014
      %v1045 = vmax.f32 %v1013, %v1015
      %v1046 = vmax.f32 %v1014, %v1016
      %v1047 = vmax.f32 %v1015, %v1017
      %v1048 = vmax.f32 %v1016, %v1018
      %v1049 = vmax.f32 %v1017, %v1019
      %v1050 = vmax.f32 %v1018, %v1020
      %v1051 = vmax.f32 %v1019, %v1021
      %v1052 = vmax.f32 %v1020, %v1022
      %v1053 = vmax.f32 %v1021, %v1023
      %v1054 = vmax.f32 %v1022, %v1024
      %v1055 = vmax.f32 %v1023, %v1025
      %v1056 = vmax.f32 %v1024, %v1026
      %v1057 = vmax.f32 %v1025, %v1027
      %v1058 = vmax.f32 %v1026, %v1028
      %v1059 = vmax.f32 %v1027, %v1029
      %v1060 = vmax.f32 %v1028, %v1030
      %v1061 = vmax.f32 %v1029, %v1031
      %v1062 = vmax.f32 %v1030, %v1032
      %v1063 = vmax.f32 %v1031, %v1033
      %v1064 = vmax.f32 %v1036, %v1008
      %v1065 = vmax.f32 %v1037, %v1009
      %v1066 = vmax.f32 %v1038, %v1010
      %v1067 = vmax.f32 %v1039, %v1011
      %v1068 = vmax.f32 %v1040, %v1012
      %v1069 = vmax.f32 %v1041, %v1013
      %v1070 = vmax.f32 %v1042, %v1014
      %v1071 = vmax.f32 %v1043, %v1015
      %v1072 = vmax.f32 %v1044, %v1016
      %v1073 = vmax.f32 %v1045, %v1017
      %v1074 = vmax.f32 %v1046, %v1018
      %v1075 = vmax.f32 %v1047, %v1019
      %v1076 = vmax.f32 %v1048, %v1020
      %v1077 = vmax.f32 %v1049, %v1021
      %v1078 = vmax.f32 %v1050, %v1022
      %v1079 = vmax.f32 %v1051, %v1023
      %v1080 = vmax.f32 %v1052, %v1024
      %v1081 = vmax.f32 %v1053, %v1025
      %v1082 = vmax.f32 %v1054, %v1026
      %v1083 = vmax.f32 %v1055, %v1027
      %v1084 = vmax.f32 %v1056, %v1028
      %v1085 = vmax.f32 %v1057, %v1029
      %v1086 = vmax.f32 %v1058, %v1030
      %v1087 = vmax.f32 %v1059, %v1031
      %v1088 = vmax.f32 %v1060, %v1032
      %v1089 = vmax.f32 %v1061, %v1033
      %v1090 = vmax.f32 %v1062, %v1034
      %v1091 = vmax.f32 %v1063, %v1035
      %v1092 = vmax.f32 %v1064, %v1010
      %v1093 = vmax.f32 %v1065, %v1011
      %v1094 = vmax.f32 %v1066, %v1012
      %v1095 = vmax.f32 %v1067, %v1013
      %v1096 = vmax.f32 %v1068, %v1014
      %v1097 = vmax.f32 %v1069, %v1015
      %v1098 = vmax.f32 %v1070, %v1016
      %v1099 = vmax.f32 %v1071, %v1017
      %v1100 = vmax.f32 %v1072, %v1018
      %v1101 = vmax.f32 %v1073, %v1019
      %v1102 = vmax.f32 %v1074, %v1020
      %v1103 = vmax.f32 %v1075, %v1021
      %v1104 = vmax.f32 %v1076, %v1022
      %v1105 = vmax.f32 %v1077, %v1023
      %v1106 = vmax.f32 %v1078, %v1024
      %v1107 = vmax.f32 %v1079, %v1025
      %v1108 = vmax.f32 %v1080, %v1026
      %v1109 = vmax.f32 %v1081, %v1027
      %v1110 = vmax.f32 %v1082, %v1028
      %v1111 = vmax.f32 %v1083, %v1029
      %v1112 = vmax.f32 %v1084, %v1030
      %v1113 = vmax.f32 %v1085, %v1031
      %v1114 = vmax.f32 %v1086, %v1032
      %v1115 = vmax.f32 %v1087, %v1033
      %v1116 = vmax.f32 %v1088, %v1034
      %v1117 = vmax.f32 %v1089, %v1035
      %v1118 = vmax.f32 %v1092, %v1012
      %v1119 = vmax.f32 %v1093, %v1013
      %v1120 = vmax.f32 %v1094, %v1014
      %v1121 = vmax.f32 %v1095, %v1015
      %v1122 = vmax.f32 %v1096, %v1016
      %v1123 = vmax.f32 %v1097, %v1017
      %v1124 = vmax.f32 %v1098, %v1018
      %v1125 = vmax.f32 %v1099, %v1019
      %v1126 = vmax.f32 %v1100, %v1020
      %v1127 = vmax.f32 %v1101, %v1021
      %v1128 = vmax.f32 %v1102, %v1022
      %v1129 = vmax.f32 %v1103, %v1023
      %v1130 = vmax.f32 %v1104, %v1024
      %v1131 = vmax.f32 %v1105, %v1025
      %v1132 = vmax.f32 %v1106, %v1026
      %v1133 = vmax.f32 %v1107, %v1027
      %v1134 = vmax.f32 %v1108, %v1028
      %v1135 = vmax.f32 %v1109, %v1029
      %v1136 = vmax.f32 %v1110, %v1030
      %v1137 = vmax.f32 %v1111, %v1031
      %v1138 = vmax.f32 %v1112, %v1032
      %v1139 = vmax.f32 %v1113, %v1033
      %v1140 = vmax.f32 %v1114, %v1034
      %v1141 = vmax.f32 %v1115, %v1035
      %v1142 = vld [vmem:[%s3 + $0x2] sm:$0x3]
      %vm1143 = vcmask 15360
      %v1145 = vsel %vm1143, %v1064, 0
      %v1148 = vsel %vm1143, %v1065, 0
      %v1151 = vsel %vm1143, %v1092, 0
      %v1154 = vsel %vm1143, %v1093, 0
      %v1157 = vsel %vm1143, %v1118, 0
      %v1160 = vsel %vm1143, %v1119, 0
      %v1163 = vsel %vm1143, %v1120, 0
      %v1166 = vsel %vm1143, %v1121, 0
      %v1169 = vsel %vm1143, %v1122, 0
      %v1172 = vsel %vm1143, %v1123, 0
      %v1175 = vsel %vm1143, %v1124, 0
      %v1178 = vsel %vm1143, %v1125, 0
      %v1181 = vsel %vm1143, %v1126, 0
      %v1184 = vsel %vm1143, %v1127, 0
      %v1187 = vsel %vm1143, %v1128, 0
      %v1190 = vsel %vm1143, %v1129, 0
      %v1193 = vsel %vm1143, %v1130, 0
      %v1196 = vsel %vm1143, %v1131, 0
      %v1199 = vsel %vm1143, %v1132, 0
      %v1202 = vsel %vm1143, %v1133, 0
      %v1205 = vsel %vm1143, %v1134, 0
      %v1208 = vsel %vm1143, %v1135, 0
      %v1211 = vsel %vm1143, %v1136, 0
      %v1214 = vsel %vm1143, %v1137, 0
      %v1217 = vsel %vm1143, %v1138, 0
      %v1220 = vsel %vm1143, %v1139, 0
      %v1223 = vsel %vm1143, %v1140, 0
      %v1226 = vsel %vm1143, %v1141, 0
      %v1229 = vsel %vm1143, %v1116, 0
      %v1232 = vsel %vm1143, %v1117, 0
      %v1235 = vsel %vm1143, %v1090, 0
      %v1238 = vsel %vm1143, %v1091, 0
      %vm1240 = vcmask 1041408
      %v1242 = vsel %vm1240, %v1142, 0
      %1244 = vmatpush.msra.mxu0 0.0
      %1245 = vmatpush.msra.mxu0 0.0
      %1246 = vmatpush.msra.mxu0 0.0
      %1247 = vmatpush.msra.mxu0 0.0
      %1248 = vmatpush.msra.mxu0 0.0
      %1249 = vmatpush.msra.mxu0 0.0
      %1250 = vmatpush.msra.mxu0 0.0
      %1251 = vmatpush.msra.mxu0 0.0
      %1252 = vmatpush.msra.mxu0 0.0
      %1253 = vmatpush.msra.mxu0 0.0
      %1254 = vmatpush.msra.mxu0 0.0
      %1255 = vmatpush.msra.mxu0 0.0
      %1256 = vmatpush.msra.mxu0 0.0
      %1257 = vmatpush.msra.mxu0 0.0
      %1258 = vmatpush.msra.mxu0 0.0
      %1259 = vmatpush.msra.mxu0 %v1242
      %1260 = vmatmul.f32.gmra.mxu0 %v1145
      %v1261 = vpop.f32.mrf.mxu0
      %v1262 = vadd.f32 0.0, %v1261
      %1263 = vmatmul.f32.gmra.mxu0 %v1148
      %v1264 = vpop.f32.mrf.mxu0
      %v1265 = vadd.f32 0.0, %v1264
      %1266 = vmatmul.f32.gmra.mxu0 %v1151
      %v1267 = vpop.f32.mrf.mxu0
      %v1268 = vadd.f32 0.0, %v1267
      %1269 = vmatmul.f32.gmra.mxu0 %v1154
      %v1270 = vpop.f32.mrf.mxu0
      %v1271 = vadd.f32 0.0, %v1270
      %1272 = vmatmul.f32.gmra.mxu0 %v1157
      %v1273 = vpop.f32.mrf.mxu0
      %v1274 = vadd.f32 0.0, %v1273
      %1275 = vmatmul.f32.gmra.mxu0 %v1160
      %v1276 = vpop.f32.mrf.mxu0
      %v1277 = vadd.f32 0.0, %v1276
      %1278 = vmatmul.f32.gmra.mxu0 %v1163
      %v1279 = vpop.f32.mrf.mxu0
      %v1280 = vadd.f32 0.0, %v1279
      %1281 = vmatmul.f32.gmra.mxu0 %v1166
      %v1282 = vpop.f32.mrf.mxu0
      %v1283 = vadd.f32 0.0, %v1282
      %1284 = vmatmul.f32.gmra.mxu0 %v1169
      %v1285 = vpop.f32.mrf.mxu0
      %v1286 = vadd.f32 0.0, %v1285
      %1287 = vmatmul.f32.gmra.mxu0 %v1172
      %v1288 = vpop.f32.mrf.mxu0
      %v1289 = vadd.f32 0.0, %v1288
      %1290 = vmatmul.f32.gmra.mxu0 %v1175
      %v1291 = vpop.f32.mrf.mxu0
      %v1292 = vadd.f32 0.0, %v1291
      %1293 = vmatmul.f32.gmra.mxu0 %v1178
      %v1294 = vpop.f32.mrf.mxu0
      %v1295 = vadd.f32 0.0, %v1294
      %1296 = vmatmul.f32.gmra.mxu0 %v1181
      %v1297 = vpop.f32.mrf.mxu0
      %v1298 = vadd.f32 0.0, %v1297
      %1299 = vmatmul.f32.gmra.mxu0 %v1184
      %v1300 = vpop.f32.mrf.mxu0
      %v1301 = vadd.f32 0.0, %v1300
      %1302 = vmatmul.f32.gmra.mxu0 %v1187
      %v1303 = vpop.f32.mrf.mxu0
      %v1304 = vadd.f32 0.0, %v1303
      %1305 = vmatmul.f32.gmra.mxu0 %v1190
      %v1306 = vpop.f32.mrf.mxu0
      %v1307 = vadd.f32 0.0, %v1306
      %1308 = vmatmul.f32.gmra.mxu0 %v1193
      %v1309 = vpop.f32.mrf.mxu0
      %v1310 = vadd.f32 0.0, %v1309
      %1311 = vmatmul.f32.gmra.mxu0 %v1196
      %v1312 = vpop.f32.mrf.mxu0
      %v1313 = vadd.f32 0.0, %v1312
      %1314 = vmatmul.f32.gmra.mxu0 %v1199
      %v1315 = vpop.f32.mrf.mxu0
      %v1316 = vadd.f32 0.0, %v1315
      %1317 = vmatmul.f32.gmra.mxu0 %v1202
      %v1318 = vpop.f32.mrf.mxu0
      %v1319 = vadd.f32 0.0, %v1318
      %1320 = vmatmul.f32.gmra.mxu0 %v1205
      %v1321 = vpop.f32.mrf.mxu0
      %v1322 = vadd.f32 0.0, %v1321
      %1323 = vmatmul.f32.gmra.mxu0 %v1208
      %v1324 = vpop.f32.mrf.mxu0
      %v1325 = vadd.f32 0.0, %v1324
      %1326 = vmatmul.f32.gmra.mxu0 %v1211
      %v1327 = vpop.f32.mrf.mxu0
      %v1328 = vadd.f32 0.0, %v1327
      %1329 = vmatmul.f32.gmra.mxu0 %v1214
      %v1330 = vpop.f32.mrf.mxu0
      %v1331 = vadd.f32 0.0, %v1330
      %1332 = vmatmul.f32.gmra.mxu0 %v1217
      %v1333 = vpop.f32.mrf.mxu0
      %v1334 = vadd.f32 0.0, %v1333
      %1335 = vmatmul.f32.gmra.mxu0 %v1220
      %v1336 = vpop.f32.mrf.mxu0
      %v1337 = vadd.f32 0.0, %v1336
      %1338 = vmatmul.f32.gmra.mxu0 %v1223
      %v1339 = vpop.f32.mrf.mxu0
      %v1340 = vadd.f32 0.0, %v1339
      %1341 = vmatmul.f32.gmra.mxu0 %v1226
      %v1342 = vpop.f32.mrf.mxu0
      %v1343 = vadd.f32 0.0, %v1342
      %1344 = vmatmul.f32.gmra.mxu0 %v1229
      %v1345 = vpop.f32.mrf.mxu0
      %v1346 = vadd.f32 0.0, %v1345
      %1347 = vmatmul.f32.gmra.mxu0 %v1232
      %v1348 = vpop.f32.mrf.mxu0
      %v1349 = vadd.f32 0.0, %v1348
      %1350 = vmatmul.f32.gmra.mxu0 %v1235
      %v1351 = vpop.f32.mrf.mxu0
      %v1352 = vadd.f32 0.0, %v1351
      %1353 = vmatmul.f32.gmra.mxu0 %v1238
      %v1354 = vpop.f32.mrf.mxu0
      %v1355 = vadd.f32 0.0, %v1354
      %1356 = vdwg.mxu0
      %v1358 = vsel %vm1143, %v476, 0
      %v1361 = vsel %vm1143, %v477, 0
      %v1364 = vsel %vm1143, %v478, 0
      %v1367 = vsel %vm1143, %v479, 0
      %v1370 = vsel %vm1143, %v480, 0
      %v1373 = vsel %vm1143, %v481, 0
      %v1376 = vsel %vm1143, %v482, 0
      %v1379 = vsel %vm1143, %v483, 0
      %v1382 = vsel %vm1143, %v484, 0
      %v1385 = vsel %vm1143, %v485, 0
      %v1388 = vsel %vm1143, %v486, 0
      %v1391 = vsel %vm1143, %v487, 0
      %v1394 = vsel %vm1143, %v488, 0
      %v1397 = vsel %vm1143, %v489, 0
      %v1400 = vsel %vm1143, %v490, 0
      %v1403 = vsel %vm1143, %v491, 0
      %v1406 = vsel %vm1143, %v492, 0
      %v1409 = vsel %vm1143, %v493, 0
      %v1412 = vsel %vm1143, %v494, 0
      %v1415 = vsel %vm1143, %v495, 0
      %v1418 = vsel %vm1143, %v496, 0
      %v1421 = vsel %vm1143, %v497, 0
      %v1424 = vsel %vm1143, %v498, 0
      %v1427 = vsel %vm1143, %v499, 0
      %v1430 = vsel %vm1143, %v500, 0
      %v1433 = vsel %vm1143, %v501, 0
      %v1436 = vsel %vm1143, %v502, 0
      %v1439 = vsel %vm1143, %v503, 0
      %v1442 = vsel %vm1143, %v504, 0
      %v1445 = vsel %vm1143, %v505, 0
      %v1448 = vsel %vm1143, %v506, 0
      %v1451 = vsel %vm1143, %v507, 0
      %v1454 = vsel %vm1240, %v519, 0
      %1456 = vmatpush.msra.mxu0 0.0
      %1457 = vmatpush.msra.mxu0 0.0
      %1458 = vmatpush.msra.mxu0 0.0
      %1459 = vmatpush.msra.mxu0 0.0
      %1460 = vmatpush.msra.mxu0 0.0
      %1461 = vmatpush.msra.mxu0 0.0
      %1462 = vmatpush.msra.mxu0 0.0
      %1463 = vmatpush.msra.mxu0 0.0
      %1464 = vmatpush.msra.mxu0 0.0
      %1465 = vmatpush.msra.mxu0 0.0
      %1466 = vmatpush.msra.mxu0 0.0
      %1467 = vmatpush.msra.mxu0 0.0
      %1468 = vmatpush.msra.mxu0 0.0
      %1469 = vmatpush.msra.mxu0 0.0
      %1470 = vmatpush.msra.mxu0 0.0
      %1471 = vmatpush.msra.mxu0 %v1454
      %1472 = vmatmul.f32.gmra.mxu0 %v1358
      %v1473 = vpop.f32.mrf.mxu0
      %v1474 = vadd.f32 %v1262, %v1473
      %1475 = vmatmul.f32.gmra.mxu0 %v1361
      %v1476 = vpop.f32.mrf.mxu0
      %v1477 = vadd.f32 %v1265, %v1476
      %1478 = vmatmul.f32.gmra.mxu0 %v1364
      %v1479 = vpop.f32.mrf.mxu0
      %v1480 = vadd.f32 %v1268, %v1479
      %1481 = vmatmul.f32.gmra.mxu0 %v1367
      %v1482 = vpop.f32.mrf.mxu0
      %v1483 = vadd.f32 %v1271, %v1482
      %1484 = vmatmul.f32.gmra.mxu0 %v1370
      %v1485 = vpop.f32.mrf.mxu0
      %v1486 = vadd.f32 %v1274, %v1485
      %1487 = vmatmul.f32.gmra.mxu0 %v1373
      %v1488 = vpop.f32.mrf.mxu0
      %v1489 = vadd.f32 %v1277, %v1488
      %1490 = vmatmul.f32.gmra.mxu0 %v1376
      %v1491 = vpop.f32.mrf.mxu0
      %v1492 = vadd.f32 %v1280, %v1491
      %1493 = vmatmul.f32.gmra.mxu0 %v1379
      %v1494 = vpop.f32.mrf.mxu0
      %v1495 = vadd.f32 %v1283, %v1494
      %1496 = vmatmul.f32.gmra.mxu0 %v1382
      %v1497 = vpop.f32.mrf.mxu0
      %v1498 = vadd.f32 %v1286, %v1497
      %1499 = vmatmul.f32.gmra.mxu0 %v1385
      %v1500 = vpop.f32.mrf.mxu0
      %v1501 = vadd.f32 %v1289, %v1500
      %1502 = vmatmul.f32.gmra.mxu0 %v1388
      %v1503 = vpop.f32.mrf.mxu0
      %v1504 = vadd.f32 %v1292, %v1503
      %1505 = vmatmul.f32.gmra.mxu0 %v1391
      %v1506 = vpop.f32.mrf.mxu0
      %v1507 = vadd.f32 %v1295, %v1506
      %1508 = vmatmul.f32.gmra.mxu0 %v1394
      %v1509 = vpop.f32.mrf.mxu0
      %v1510 = vadd.f32 %v1298, %v1509
      %1511 = vmatmul.f32.gmra.mxu0 %v1397
      %v1512 = vpop.f32.mrf.mxu0
      %v1513 = vadd.f32 %v1301, %v1512
      %1514 = vmatmul.f32.gmra.mxu0 %v1400
      %v1515 = vpop.f32.mrf.mxu0
      %v1516 = vadd.f32 %v1304, %v1515
      %1517 = vmatmul.f32.gmra.mxu0 %v1403
      %v1518 = vpop.f32.mrf.mxu0
      %v1519 = vadd.f32 %v1307, %v1518
      %1520 = vmatmul.f32.gmra.mxu0 %v1406
      %v1521 = vpop.f32.mrf.mxu0
      %v1522 = vadd.f32 %v1310, %v1521
      %1523 = vmatmul.f32.gmra.mxu0 %v1409
      %v1524 = vpop.f32.mrf.mxu0
      %v1525 = vadd.f32 %v1313, %v1524
      %1526 = vmatmul.f32.gmra.mxu0 %v1412
      %v1527 = vpop.f32.mrf.mxu0
      %v1528 = vadd.f32 %v1316, %v1527
      %1529 = vmatmul.f32.gmra.mxu0 %v1415
      %v1530 = vpop.f32.mrf.mxu0
      %v1531 = vadd.f32 %v1319, %v1530
      %1532 = vmatmul.f32.gmra.mxu0 %v1418
      %v1533 = vpop.f32.mrf.mxu0
      %v1534 = vadd.f32 %v1322, %v1533
      %1535 = vmatmul.f32.gmra.mxu0 %v1421
      %v1536 = vpop.f32.mrf.mxu0
      %v1537 = vadd.f32 %v1325, %v1536
      %1538 = vmatmul.f32.gmra.mxu0 %v1424
      %v1539 = vpop.f32.mrf.mxu0
      %v1540 = vadd.f32 %v1328, %v1539
      %1541 = vmatmul.f32.gmra.mxu0 %v1427
      %v1542 = vpop.f32.mrf.mxu0
      %v1543 = vadd.f32 %v1331, %v1542
      %1544 = vmatmul.f32.gmra.mxu0 %v1430
      %v1545 = vpop.f32.mrf.mxu0
      %v1546 = vadd.f32 %v1334, %v1545
      %1547 = vmatmul.f32.gmra.mxu0 %v1433
      %v1548 = vpop.f32.mrf.mxu0
      %v1549 = vadd.f32 %v1337, %v1548
      %1550 = vmatmul.f32.gmra.mxu0 %v1436
      %v1551 = vpop.f32.mrf.mxu0
      %v1552 = vadd.f32 %v1340, %v1551
      %1553 = vmatmul.f32.gmra.mxu0 %v1439
      %v1554 = vpop.f32.mrf.mxu0
      %v1555 = vadd.f32 %v1343, %v1554
      %1556 = vmatmul.f32.gmra.mxu0 %v1442
      %v1557 = vpop.f32.mrf.mxu0
      %v1558 = vadd.f32 %v1346, %v1557
      %1559 = vmatmul.f32.gmra.mxu0 %v1445
      %v1560 = vpop.f32.mrf.mxu0
      %v1561 = vadd.f32 %v1349, %v1560
      %1562 = vmatmul.f32.gmra.mxu0 %v1448
      %v1563 = vpop.f32.mrf.mxu0
      %v1564 = vadd.f32 %v1352, %v1563
      %1565 = vmatmul.f32.gmra.mxu0 %v1451
      %v1566 = vpop.f32.mrf.mxu0
      %v1567 = vadd.f32 %v1355, %v1566
      %1568 = vdwg.mxu0
      %v1569 = vrot.slane %v1064, 1
      %v1570 = vrot.slane %v1092, 1
      %v1571 = vrot.slane %v1118, 1
      %v1572 = vrot.slane %v1120, 1
      %v1573 = vrot.slane %v1122, 1
      %v1574 = vrot.slane %v1124, 1
      %v1575 = vrot.slane %v1126, 1
      %v1576 = vrot.slane %v1128, 1
      %v1577 = vrot.slane %v1130, 1
      %v1578 = vrot.slane %v1132, 1
      %v1579 = vrot.slane %v1134, 1
      %v1580 = vrot.slane %v1136, 1
      %v1581 = vrot.slane %v1138, 1
      %v1582 = vrot.slane %v1140, 1
      %v1583 = vrot.slane %v1116, 1
      %v1584 = vrot.slane %v1090, 1
      %v1585 = vrot.slane %v1065, 1
      %v1586 = vrot.slane %v1093, 1
      %v1587 = vrot.slane %v1119, 1
      %v1588 = vrot.slane %v1121, 1
      %v1589 = vrot.slane %v1123, 1
      %v1590 = vrot.slane %v1125, 1
      %v1591 = vrot.slane %v1127, 1
      %v1592 = vrot.slane %v1129, 1
      %v1593 = vrot.slane %v1131, 1
      %v1594 = vrot.slane %v1133, 1
      %v1595 = vrot.slane %v1135, 1
      %v1596 = vrot.slane %v1137, 1
      %v1597 = vrot.slane %v1139, 1
      %v1598 = vrot.slane %v1141, 1
      %v1599 = vrot.slane %v1117, 1
      %v1600 = vrot.slane %v1091, 1
      %v1601 = vsel %vm552, %v1569, %v1585
      %v1602 = vsel %vm552, %v1570, %v1586
      %v1603 = vsel %vm552, %v1571, %v1587
      %v1604 = vsel %vm552, %v1572, %v1588
      %v1605 = vsel %vm552, %v1573, %v1589
      %v1606 = vsel %vm552, %v1574, %v1590
      %v1607 = vsel %vm552, %v1575, %v1591
      %v1608 = vsel %vm552, %v1576, %v1592
      %v1609 = vsel %vm552, %v1577, %v1593
      %v1610 = vsel %vm552, %v1578, %v1594
      %v1611 = vsel %vm552, %v1579, %v1595
      %v1612 = vsel %vm552, %v1580, %v1596
      %v1613 = vsel %vm552, %v1581, %v1597
      %v1614 = vsel %vm552, %v1582, %v1598
      %v1615 = vsel %vm552, %v1583, %v1599
      %v1616 = vsel %vm552, %v1584, %v1600
      %v1617 = vsel %vm552, %v1585, %v1569
      %v1618 = vsel %vm552, %v1586, %v1570
      %v1619 = vsel %vm552, %v1587, %v1571
      %v1620 = vsel %vm552, %v1588, %v1572
      %v1621 = vsel %vm552, %v1589, %v1573
      %v1622 = vsel %vm552, %v1590, %v1574
      %v1623 = vsel %vm552, %v1591, %v1575
      %v1624 = vsel %vm552, %v1592, %v1576
      %v1625 = vsel %vm552, %v1593, %v1577
      %v1626 = vsel %vm552, %v1594, %v1578
      %v1627 = vsel %vm552, %v1595, %v1579
      %v1628 = vsel %vm552, %v1596, %v1580
      %v1629 = vsel %vm552, %v1597, %v1581
      %v1630 = vsel %vm552, %v1598, %v1582
      %v1631 = vsel %vm552, %v1599, %v1583
      %v1632 = vsel %vm552, %v1600, %v1584
      %v1633 = vsel %vm511, %v1601, -inf
      %v1634 = vsel %vm512, %v1617, -inf
      %v1635 = vsel %vm511, %v1602, -inf
      %v1636 = vsel %vm512, %v1618, -inf
      %v1637 = vsel %vm511, %v1603, -inf
      %v1638 = vsel %vm512, %v1619, -inf
      %v1639 = vsel %vm511, %v1604, -inf
      %v1640 = vsel %vm512, %v1620, -inf
      %v1641 = vsel %vm511, %v1605, -inf
      %v1642 = vsel %vm512, %v1621, -inf
      %v1643 = vsel %vm511, %v1606, -inf
      %v1644 = vsel %vm512, %v1622, -inf
      %v1645 = vsel %vm511, %v1607, -inf
      %v1646 = vsel %vm512, %v1623, -inf
      %v1647 = vsel %vm511, %v1608, -inf
      %v1648 = vsel %vm512, %v1624, -inf
      %v1649 = vsel %vm511, %v1609, -inf
      %v1650 = vsel %vm512, %v1625, -inf
      %v1651 = vsel %vm511, %v1610, -inf
      %v1652 = vsel %vm512, %v1626, -inf
      %v1653 = vsel %vm511, %v1611, -inf
      %v1654 = vsel %vm512, %v1627, -inf
      %v1655 = vsel %vm511, %v1612, -inf
      %v1656 = vsel %vm512, %v1628, -inf
      %v1657 = vsel %vm511, %v1613, -inf
      %v1658 = vsel %vm512, %v1629, -inf
      %v1659 = vsel %vm511, %v1614, -inf
      %v1660 = vsel %vm512, %v1630, -inf
      %v1661 = vsel %vm511, %v1615, -inf
      %v1662 = vsel %vm512, %v1631, -inf
      %v1663 = vsel %vm511, %v1616, -inf
      %v1664 = vsel %vm512, %v1632, -inf
      %v1665 = vmax.f32 %v1064, %v1633
      %v1666 = vmax.f32 %v1065, %v1634
      %v1667 = vmax.f32 %v1092, %v1635
      %v1668 = vmax.f32 %v1093, %v1636
      %v1669 = vmax.f32 %v1118, %v1637
      %v1670 = vmax.f32 %v1119, %v1638
      %v1671 = vmax.f32 %v1120, %v1639
      %v1672 = vmax.f32 %v1121, %v1640
      %v1673 = vmax.f32 %v1122, %v1641
      %v1674 = vmax.f32 %v1123, %v1642
      %v1675 = vmax.f32 %v1124, %v1643
      %v1676 = vmax.f32 %v1125, %v1644
      %v1677 = vmax.f32 %v1126, %v1645
      %v1678 = vmax.f32 %v1127, %v1646
      %v1679 = vmax.f32 %v1128, %v1647
      %v1680 = vmax.f32 %v1129, %v1648
      %v1681 = vmax.f32 %v1130, %v1649
      %v1682 = vmax.f32 %v1131, %v1650
      %v1683 = vmax.f32 %v1132, %v1651
      %v1684 = vmax.f32 %v1133, %v1652
      %v1685 = vmax.f32 %v1134, %v1653
      %v1686 = vmax.f32 %v1135, %v1654
      %v1687 = vmax.f32 %v1136, %v1655
      %v1688 = vmax.f32 %v1137, %v1656
      %v1689 = vmax.f32 %v1138, %v1657
      %v1690 = vmax.f32 %v1139, %v1658
      %v1691 = vmax.f32 %v1140, %v1659
      %v1692 = vmax.f32 %v1141, %v1660
      %v1693 = vmax.f32 %v1116, %v1661
      %v1694 = vmax.f32 %v1117, %v1662
      %v1695 = vmax.f32 %v1090, %v1663
      %v1696 = vmax.f32 %v1091, %v1664
      %v1697 = vrot.slane %v1064, 7
      %v1698 = vrot.slane %v1092, 7
      %v1699 = vrot.slane %v1118, 7
      %v1700 = vrot.slane %v1120, 7
      %v1701 = vrot.slane %v1122, 7
      %v1702 = vrot.slane %v1124, 7
      %v1703 = vrot.slane %v1126, 7
      %v1704 = vrot.slane %v1128, 7
      %v1705 = vrot.slane %v1130, 7
      %v1706 = vrot.slane %v1132, 7
      %v1707 = vrot.slane %v1134, 7
      %v1708 = vrot.slane %v1136, 7
      %v1709 = vrot.slane %v1138, 7
      %v1710 = vrot.slane %v1140, 7
      %v1711 = vrot.slane %v1116, 7
      %v1712 = vrot.slane %v1090, 7
      %v1713 = vrot.slane %v1065, 7
      %v1714 = vrot.slane %v1093, 7
      %v1715 = vrot.slane %v1119, 7
      %v1716 = vrot.slane %v1121, 7
      %v1717 = vrot.slane %v1123, 7
      %v1718 = vrot.slane %v1125, 7
      %v1719 = vrot.slane %v1127, 7
      %v1720 = vrot.slane %v1129, 7
      %v1721 = vrot.slane %v1131, 7
      %v1722 = vrot.slane %v1133, 7
      %v1723 = vrot.slane %v1135, 7
      %v1724 = vrot.slane %v1137, 7
      %v1725 = vrot.slane %v1139, 7
      %v1726 = vrot.slane %v1141, 7
      %v1727 = vrot.slane %v1117, 7
      %v1728 = vrot.slane %v1091, 7
      %v1729 = vsel %vm681, %v1697, %v1713
      %v1730 = vsel %vm681, %v1698, %v1714
      %v1731 = vsel %vm681, %v1699, %v1715
      %v1732 = vsel %vm681, %v1700, %v1716
      %v1733 = vsel %vm681, %v1701, %v1717
      %v1734 = vsel %vm681, %v1702, %v1718
      %v1735 = vsel %vm681, %v1703, %v1719
      %v1736 = vsel %vm681, %v1704, %v1720
      %v1737 = vsel %vm681, %v1705, %v1721
      %v1738 = vsel %vm681, %v1706, %v1722
      %v1739 = vsel %vm681, %v1707, %v1723
      %v1740 = vsel %vm681, %v1708, %v1724
      %v1741 = vsel %vm681, %v1709, %v1725
      %v1742 = vsel %vm681, %v1710, %v1726
      %v1743 = vsel %vm681, %v1711, %v1727
      %v1744 = vsel %vm681, %v1712, %v1728
      %v1745 = vsel %vm681, %v1713, %v1697
      %v1746 = vsel %vm681, %v1714, %v1698
      %v1747 = vsel %vm681, %v1715, %v1699
      %v1748 = vsel %vm681, %v1716, %v1700
      %v1749 = vsel %vm681, %v1717, %v1701
      %v1750 = vsel %vm681, %v1718, %v1702
      %v1751 = vsel %vm681, %v1719, %v1703
      %v1752 = vsel %vm681, %v1720, %v1704
      %v1753 = vsel %vm681, %v1721, %v1705
      %v1754 = vsel %vm681, %v1722, %v1706
      %v1755 = vsel %vm681, %v1723, %v1707
      %v1756 = vsel %vm681, %v1724, %v1708
      %v1757 = vsel %vm681, %v1725, %v1709
      %v1758 = vsel %vm681, %v1726, %v1710
      %v1759 = vsel %vm681, %v1727, %v1711
      %v1760 = vsel %vm681, %v1728, %v1712
      %v1761 = vsel %vm513, %v1745, -inf
      %v1762 = vsel %vm514, %v1729, -inf
      %v1763 = vsel %vm513, %v1746, -inf
      %v1764 = vsel %vm514, %v1730, -inf
      %v1765 = vsel %vm513, %v1747, -inf
      %v1766 = vsel %vm514, %v1731, -inf
      %v1767 = vsel %vm513, %v1748, -inf
      %v1768 = vsel %vm514, %v1732, -inf
      %v1769 = vsel %vm513, %v1749, -inf
      %v1770 = vsel %vm514, %v1733, -inf
      %v1771 = vsel %vm513, %v1750, -inf
      %v1772 = vsel %vm514, %v1734, -inf
      %v1773 = vsel %vm513, %v1751, -inf
      %v1774 = vsel %vm514, %v1735, -inf
      %v1775 = vsel %vm513, %v1752, -inf
      %v1776 = vsel %vm514, %v1736, -inf
      %v1777 = vsel %vm513, %v1753, -inf
      %v1778 = vsel %vm514, %v1737, -inf
      %v1779 = vsel %vm513, %v1754, -inf
      %v1780 = vsel %vm514, %v1738, -inf
      %v1781 = vsel %vm513, %v1755, -inf
      %v1782 = vsel %vm514, %v1739, -inf
      %v1783 = vsel %vm513, %v1756, -inf
      %v1784 = vsel %vm514, %v1740, -inf
      %v1785 = vsel %vm513, %v1757, -inf
      %v1786 = vsel %vm514, %v1741, -inf
      %v1787 = vsel %vm513, %v1758, -inf
      %v1788 = vsel %vm514, %v1742, -inf
      %v1789 = vsel %vm513, %v1759, -inf
      %v1790 = vsel %vm514, %v1743, -inf
      %v1791 = vsel %vm513, %v1760, -inf
      %v1792 = vsel %vm514, %v1744, -inf
      %v1793 = vmax.f32 %v1665, %v1761
      %v1794 = vmax.f32 %v1666, %v1762
      %v1795 = vmax.f32 %v1667, %v1763
      %v1796 = vmax.f32 %v1668, %v1764
      %v1797 = vmax.f32 %v1669, %v1765
      %v1798 = vmax.f32 %v1670, %v1766
      %v1799 = vmax.f32 %v1671, %v1767
      %v1800 = vmax.f32 %v1672, %v1768
      %v1801 = vmax.f32 %v1673, %v1769
      %v1802 = vmax.f32 %v1674, %v1770
      %v1803 = vmax.f32 %v1675, %v1771
      %v1804 = vmax.f32 %v1676, %v1772
      %v1805 = vmax.f32 %v1677, %v1773
      %v1806 = vmax.f32 %v1678, %v1774
      %v1807 = vmax.f32 %v1679, %v1775
      %v1808 = vmax.f32 %v1680, %v1776
      %v1809 = vmax.f32 %v1681, %v1777
      %v1810 = vmax.f32 %v1682, %v1778
      %v1811 = vmax.f32 %v1683, %v1779
      %v1812 = vmax.f32 %v1684, %v1780
      %v1813 = vmax.f32 %v1685, %v1781
      %v1814 = vmax.f32 %v1686, %v1782
      %v1815 = vmax.f32 %v1687, %v1783
      %v1816 = vmax.f32 %v1688, %v1784
      %v1817 = vmax.f32 %v1689, %v1785
      %v1818 = vmax.f32 %v1690, %v1786
      %v1819 = vmax.f32 %v1691, %v1787
      %v1820 = vmax.f32 %v1692, %v1788
      %v1821 = vmax.f32 %v1693, %v1789
      %v1822 = vmax.f32 %v1694, %v1790
      %v1823 = vmax.f32 %v1695, %v1791
      %v1824 = vmax.f32 %v1696, %v1792
      %v1825 = vrot.slane %v1064, 2
      %v1826 = vrot.slane %v1092, 2
      %v1827 = vrot.slane %v1118, 2
      %v1828 = vrot.slane %v1120, 2
      %v1829 = vrot.slane %v1122, 2
      %v1830 = vrot.slane %v1124, 2
      %v1831 = vrot.slane %v1126, 2
      %v1832 = vrot.slane %v1128, 2
      %v1833 = vrot.slane %v1130, 2
      %v1834 = vrot.slane %v1132, 2
      %v1835 = vrot.slane %v1134, 2
      %v1836 = vrot.slane %v1136, 2
      %v1837 = vrot.slane %v1138, 2
      %v1838 = vrot.slane %v1140, 2
      %v1839 = vrot.slane %v1116, 2
      %v1840 = vrot.slane %v1090, 2
      %v1841 = vrot.slane %v1065, 2
      %v1842 = vrot.slane %v1093, 2
      %v1843 = vrot.slane %v1119, 2
      %v1844 = vrot.slane %v1121, 2
      %v1845 = vrot.slane %v1123, 2
      %v1846 = vrot.slane %v1125, 2
      %v1847 = vrot.slane %v1127, 2
      %v1848 = vrot.slane %v1129, 2
      %v1849 = vrot.slane %v1131, 2
      %v1850 = vrot.slane %v1133, 2
      %v1851 = vrot.slane %v1135, 2
      %v1852 = vrot.slane %v1137, 2
      %v1853 = vrot.slane %v1139, 2
      %v1854 = vrot.slane %v1141, 2
      %v1855 = vrot.slane %v1117, 2
      %v1856 = vrot.slane %v1091, 2
      %v1857 = vsel %vm810, %v1825, %v1841
      %v1858 = vsel %vm810, %v1826, %v1842
      %v1859 = vsel %vm810, %v1827, %v1843
      %v1860 = vsel %vm810, %v1828, %v1844
      %v1861 = vsel %vm810, %v1829, %v1845
      %v1862 = vsel %vm810, %v1830, %v1846
      %v1863 = vsel %vm810, %v1831, %v1847
      %v1864 = vsel %vm810, %v1832, %v1848
      %v1865 = vsel %vm810, %v1833, %v1849
      %v1866 = vsel %vm810, %v1834, %v1850
      %v1867 = vsel %vm810, %v1835, %v1851
      %v1868 = vsel %vm810, %v1836, %v1852
      %v1869 = vsel %vm810, %v1837, %v1853
      %v1870 = vsel %vm810, %v1838, %v1854
      %v1871 = vsel %vm810, %v1839, %v1855
      %v1872 = vsel %vm810, %v1840, %v1856
      %v1873 = vsel %vm810, %v1841, %v1825
      %v1874 = vsel %vm810, %v1842, %v1826
      %v1875 = vsel %vm810, %v1843, %v1827
      %v1876 = vsel %vm810, %v1844, %v1828
      %v1877 = vsel %vm810, %v1845, %v1829
      %v1878 = vsel %vm810, %v1846, %v1830
      %v1879 = vsel %vm810, %v1847, %v1831
      %v1880 = vsel %vm810, %v1848, %v1832
      %v1881 = vsel %vm810, %v1849, %v1833
      %v1882 = vsel %vm810, %v1850, %v1834
      %v1883 = vsel %vm810, %v1851, %v1835
      %v1884 = vsel %vm810, %v1852, %v1836
      %v1885 = vsel %vm810, %v1853, %v1837
      %v1886 = vsel %vm810, %v1854, %v1838
      %v1887 = vsel %vm810, %v1855, %v1839
      %v1888 = vsel %vm810, %v1856, %v1840
      %v1889 = vsel %vm515, %v1857, -inf
      %v1890 = vsel %vm516, %v1873, -inf
      %v1891 = vsel %vm515, %v1858, -inf
      %v1892 = vsel %vm516, %v1874, -inf
      %v1893 = vsel %vm515, %v1859, -inf
      %v1894 = vsel %vm516, %v1875, -inf
      %v1895 = vsel %vm515, %v1860, -inf
      %v1896 = vsel %vm516, %v1876, -inf
      %v1897 = vsel %vm515, %v1861, -inf
      %v1898 = vsel %vm516, %v1877, -inf
      %v1899 = vsel %vm515, %v1862, -inf
      %v1900 = vsel %vm516, %v1878, -inf
      %v1901 = vsel %vm515, %v1863, -inf
      %v1902 = vsel %vm516, %v1879, -inf
      %v1903 = vsel %vm515, %v1864, -inf
      %v1904 = vsel %vm516, %v1880, -inf
      %v1905 = vsel %vm515, %v1865, -inf
      %v1906 = vsel %vm516, %v1881, -inf
      %v1907 = vsel %vm515, %v1866, -inf
      %v1908 = vsel %vm516, %v1882, -inf
      %v1909 = vsel %vm515, %v1867, -inf
      %v1910 = vsel %vm516, %v1883, -inf
      %v1911 = vsel %vm515, %v1868, -inf
      %v1912 = vsel %vm516, %v1884, -inf
      %v1913 = vsel %vm515, %v1869, -inf
      %v1914 = vsel %vm516, %v1885, -inf
      %v1915 = vsel %vm515, %v1870, -inf
      %v1916 = vsel %vm516, %v1886, -inf
      %v1917 = vsel %vm515, %v1871, -inf
      %v1918 = vsel %vm516, %v1887, -inf
      %v1919 = vsel %vm515, %v1872, -inf
      %v1920 = vsel %vm516, %v1888, -inf
      %v1921 = vmax.f32 %v1793, %v1889
      %v1922 = vmax.f32 %v1794, %v1890
      %v1923 = vmax.f32 %v1795, %v1891
      %v1924 = vmax.f32 %v1796, %v1892
      %v1925 = vmax.f32 %v1797, %v1893
      %v1926 = vmax.f32 %v1798, %v1894
      %v1927 = vmax.f32 %v1799, %v1895
      %v1928 = vmax.f32 %v1800, %v1896
      %v1929 = vmax.f32 %v1801, %v1897
      %v1930 = vmax.f32 %v1802, %v1898
      %v1931 = vmax.f32 %v1803, %v1899
      %v1932 = vmax.f32 %v1804, %v1900
      %v1933 = vmax.f32 %v1805, %v1901
      %v1934 = vmax.f32 %v1806, %v1902
      %v1935 = vmax.f32 %v1807, %v1903
      %v1936 = vmax.f32 %v1808, %v1904
      %v1937 = vmax.f32 %v1809, %v1905
      %v1938 = vmax.f32 %v1810, %v1906
      %v1939 = vmax.f32 %v1811, %v1907
      %v1940 = vmax.f32 %v1812, %v1908
      %v1941 = vmax.f32 %v1813, %v1909
      %v1942 = vmax.f32 %v1814, %v1910
      %v1943 = vmax.f32 %v1815, %v1911
      %v1944 = vmax.f32 %v1816, %v1912
      %v1945 = vmax.f32 %v1817, %v1913
      %v1946 = vmax.f32 %v1818, %v1914
      %v1947 = vmax.f32 %v1819, %v1915
      %v1948 = vmax.f32 %v1820, %v1916
      %v1949 = vmax.f32 %v1821, %v1917
      %v1950 = vmax.f32 %v1822, %v1918
      %v1951 = vmax.f32 %v1823, %v1919
      %v1952 = vmax.f32 %v1824, %v1920
      %v1953 = vrot.slane %v1064, 6
      %v1954 = vrot.slane %v1092, 6
      %v1955 = vrot.slane %v1118, 6
      %v1956 = vrot.slane %v1120, 6
      %v1957 = vrot.slane %v1122, 6
      %v1958 = vrot.slane %v1124, 6
      %v1959 = vrot.slane %v1126, 6
      %v1960 = vrot.slane %v1128, 6
      %v1961 = vrot.slane %v1130, 6
      %v1962 = vrot.slane %v1132, 6
      %v1963 = vrot.slane %v1134, 6
      %v1964 = vrot.slane %v1136, 6
      %v1965 = vrot.slane %v1138, 6
      %v1966 = vrot.slane %v1140, 6
      %v1967 = vrot.slane %v1116, 6
      %v1968 = vrot.slane %v1090, 6
      %v1969 = vrot.slane %v1065, 6
      %v1970 = vrot.slane %v1093, 6
      %v1971 = vrot.slane %v1119, 6
      %v1972 = vrot.slane %v1121, 6
      %v1973 = vrot.slane %v1123, 6
      %v1974 = vrot.slane %v1125, 6
      %v1975 = vrot.slane %v1127, 6
      %v1976 = vrot.slane %v1129, 6
      %v1977 = vrot.slane %v1131, 6
      %v1978 = vrot.slane %v1133, 6
      %v1979 = vrot.slane %v1135, 6
      %v1980 = vrot.slane %v1137, 6
      %v1981 = vrot.slane %v1139, 6
      %v1982 = vrot.slane %v1141, 6
      %v1983 = vrot.slane %v1117, 6
      %v1984 = vrot.slane %v1091, 6
      %v1985 = vsel %vm939, %v1953, %v1969
      %v1986 = vsel %vm939, %v1954, %v1970
      %v1987 = vsel %vm939, %v1955, %v1971
      %v1988 = vsel %vm939, %v1956, %v1972
      %v1989 = vsel %vm939, %v1957, %v1973
      %v1990 = vsel %vm939, %v1958, %v1974
      %v1991 = vsel %vm939, %v1959, %v1975
      %v1992 = vsel %vm939, %v1960, %v1976
      %v1993 = vsel %vm939, %v1961, %v1977
      %v1994 = vsel %vm939, %v1962, %v1978
      %v1995 = vsel %vm939, %v1963, %v1979
      %v1996 = vsel %vm939, %v1964, %v1980
      %v1997 = vsel %vm939, %v1965, %v1981
      %v1998 = vsel %vm939, %v1966, %v1982
      %v1999 = vsel %vm939, %v1967, %v1983
      %v2000 = vsel %vm939, %v1968, %v1984
      %v2001 = vsel %vm939, %v1969, %v1953
      %v2002 = vsel %vm939, %v1970, %v1954
      %v2003 = vsel %vm939, %v1971, %v1955
      %v2004 = vsel %vm939, %v1972, %v1956
      %v2005 = vsel %vm939, %v1973, %v1957
      %v2006 = vsel %vm939, %v1974, %v1958
      %v2007 = vsel %vm939, %v1975, %v1959
      %v2008 = vsel %vm939, %v1976, %v1960
      %v2009 = vsel %vm939, %v1977, %v1961
      %v2010 = vsel %vm939, %v1978, %v1962
      %v2011 = vsel %vm939, %v1979, %v1963
      %v2012 = vsel %vm939, %v1980, %v1964
      %v2013 = vsel %vm939, %v1981, %v1965
      %v2014 = vsel %vm939, %v1982, %v1966
      %v2015 = vsel %vm939, %v1983, %v1967
      %v2016 = vsel %vm939, %v1984, %v1968
      %v2017 = vsel %vm517, %v2001, -inf
      %v2018 = vsel %vm518, %v1985, -inf
      %v2019 = vsel %vm517, %v2002, -inf
      %v2020 = vsel %vm518, %v1986, -inf
      %v2021 = vsel %vm517, %v2003, -inf
      %v2022 = vsel %vm518, %v1987, -inf
      %v2023 = vsel %vm517, %v2004, -inf
      %v2024 = vsel %vm518, %v1988, -inf
      %v2025 = vsel %vm517, %v2005, -inf
      %v2026 = vsel %vm518, %v1989, -inf
      %v2027 = vsel %vm517, %v2006, -inf
      %v2028 = vsel %vm518, %v1990, -inf
      %v2029 = vsel %vm517, %v2007, -inf
      %v2030 = vsel %vm518, %v1991, -inf
      %v2031 = vsel %vm517, %v2008, -inf
      %v2032 = vsel %vm518, %v1992, -inf
      %v2033 = vsel %vm517, %v2009, -inf
      %v2034 = vsel %vm518, %v1993, -inf
      %v2035 = vsel %vm517, %v2010, -inf
      %v2036 = vsel %vm518, %v1994, -inf
      %v2037 = vsel %vm517, %v2011, -inf
      %v2038 = vsel %vm518, %v1995, -inf
      %v2039 = vsel %vm517, %v2012, -inf
      %v2040 = vsel %vm518, %v1996, -inf
      %v2041 = vsel %vm517, %v2013, -inf
      %v2042 = vsel %vm518, %v1997, -inf
      %v2043 = vsel %vm517, %v2014, -inf
      %v2044 = vsel %vm518, %v1998, -inf
      %v2045 = vsel %vm517, %v2015, -inf
      %v2046 = vsel %vm518, %v1999, -inf
      %v2047 = vsel %vm517, %v2016, -inf
      %v2048 = vsel %vm518, %v2000, -inf
      %v2049 = vmax.f32 %v1921, %v2017
      %v2050 = vmax.f32 %v1922, %v2018
      %v2051 = vmax.f32 %v1923, %v2019
      %v2052 = vmax.f32 %v1924, %v2020
      %v2053 = vmax.f32 %v1925, %v2021
      %v2054 = vmax.f32 %v1926, %v2022
      %v2055 = vmax.f32 %v1927, %v2023
      %v2056 = vmax.f32 %v1928, %v2024
      %v2057 = vmax.f32 %v1929, %v2025
      %v2058 = vmax.f32 %v1930, %v2026
      %v2059 = vmax.f32 %v1931, %v2027
      %v2060 = vmax.f32 %v1932, %v2028
      %v2061 = vmax.f32 %v1933, %v2029
      %v2062 = vmax.f32 %v1934, %v2030
      %v2063 = vmax.f32 %v1935, %v2031
      %v2064 = vmax.f32 %v1936, %v2032
      %v2065 = vmax.f32 %v1937, %v2033
      %v2066 = vmax.f32 %v1938, %v2034
      %v2067 = vmax.f32 %v1939, %v2035
      %v2068 = vmax.f32 %v1940, %v2036
      %v2069 = vmax.f32 %v1941, %v2037
      %v2070 = vmax.f32 %v1942, %v2038
      %v2071 = vmax.f32 %v1943, %v2039
      %v2072 = vmax.f32 %v1944, %v2040
      %v2073 = vmax.f32 %v1945, %v2041
      %v2074 = vmax.f32 %v1946, %v2042
      %v2075 = vmax.f32 %v1947, %v2043
      %v2076 = vmax.f32 %v1948, %v2044
      %v2077 = vmax.f32 %v1949, %v2045
      %v2078 = vmax.f32 %v1950, %v2046
      %v2079 = vmax.f32 %v1951, %v2047
      %v2080 = vmax.f32 %v1952, %v2048
      %v2081 = vmax.f32 %v2049, %v2051
      %v2082 = vmax.f32 %v2050, %v2052
      %v2083 = vmax.f32 %v2051, %v2053
      %v2084 = vmax.f32 %v2052, %v2054
      %v2085 = vmax.f32 %v2053, %v2055
      %v2086 = vmax.f32 %v2054, %v2056
      %v2087 = vmax.f32 %v2055, %v2057
      %v2088 = vmax.f32 %v2056, %v2058
      %v2089 = vmax.f32 %v2057, %v2059
      %v2090 = vmax.f32 %v2058, %v2060
      %v2091 = vmax.f32 %v2059, %v2061
      %v2092 = vmax.f32 %v2060, %v2062
      %v2093 = vmax.f32 %v2061, %v2063
      %v2094 = vmax.f32 %v2062, %v2064
      %v2095 = vmax.f32 %v2063, %v2065
      %v2096 = vmax.f32 %v2064, %v2066
      %v2097 = vmax.f32 %v2065, %v2067
      %v2098 = vmax.f32 %v2066, %v2068
      %v2099 = vmax.f32 %v2067, %v2069
      %v2100 = vmax.f32 %v2068, %v2070
      %v2101 = vmax.f32 %v2069, %v2071
      %v2102 = vmax.f32 %v2070, %v2072
      %v2103 = vmax.f32 %v2071, %v2073
      %v2104 = vmax.f32 %v2072, %v2074
      %v2105 = vmax.f32 %v2073, %v2075
      %v2106 = vmax.f32 %v2074, %v2076
      %v2107 = vmax.f32 %v2075, %v2077
      %v2108 = vmax.f32 %v2076, %v2078
      %v2109 = vmax.f32 %v2081, %v2053
      %v2110 = vmax.f32 %v2082, %v2054
      %v2111 = vmax.f32 %v2083, %v2055
      %v2112 = vmax.f32 %v2084, %v2056
      %v2113 = vmax.f32 %v2085, %v2057
      %v2114 = vmax.f32 %v2086, %v2058
      %v2115 = vmax.f32 %v2087, %v2059
      %v2116 = vmax.f32 %v2088, %v2060
      %v2117 = vmax.f32 %v2089, %v2061
      %v2118 = vmax.f32 %v2090, %v2062
      %v2119 = vmax.f32 %v2091, %v2063
      %v2120 = vmax.f32 %v2092, %v2064
      %v2121 = vmax.f32 %v2093, %v2065
      %v2122 = vmax.f32 %v2094, %v2066
      %v2123 = vmax.f32 %v2095, %v2067
      %v2124 = vmax.f32 %v2096, %v2068
      %v2125 = vmax.f32 %v2097, %v2069
      %v2126 = vmax.f32 %v2098, %v2070
      %v2127 = vmax.f32 %v2099, %v2071
      %v2128 = vmax.f32 %v2100, %v2072
      %v2129 = vmax.f32 %v2101, %v2073
      %v2130 = vmax.f32 %v2102, %v2074
      %v2131 = vmax.f32 %v2103, %v2075
      %v2132 = vmax.f32 %v2104, %v2076
      %v2133 = vmax.f32 %v2105, %v2077
      %v2134 = vmax.f32 %v2106, %v2078
      %v2135 = vmax.f32 %v2107, %v2079
      %v2136 = vmax.f32 %v2108, %v2080
      %v2137 = vmax.f32 %v2109, %v2055
      %v2138 = vmax.f32 %v2110, %v2056
      %v2139 = vmax.f32 %v2111, %v2057
      %v2140 = vmax.f32 %v2112, %v2058
      %v2141 = vmax.f32 %v2113, %v2059
      %v2142 = vmax.f32 %v2114, %v2060
      %v2143 = vmax.f32 %v2115, %v2061
      %v2144 = vmax.f32 %v2116, %v2062
      %v2145 = vmax.f32 %v2117, %v2063
      %v2146 = vmax.f32 %v2118, %v2064
      %v2147 = vmax.f32 %v2119, %v2065
      %v2148 = vmax.f32 %v2120, %v2066
      %v2149 = vmax.f32 %v2121, %v2067
      %v2150 = vmax.f32 %v2122, %v2068
      %v2151 = vmax.f32 %v2123, %v2069
      %v2152 = vmax.f32 %v2124, %v2070
      %v2153 = vmax.f32 %v2125, %v2071
      %v2154 = vmax.f32 %v2126, %v2072
      %v2155 = vmax.f32 %v2127, %v2073
      %v2156 = vmax.f32 %v2128, %v2074
      %v2157 = vmax.f32 %v2129, %v2075
      %v2158 = vmax.f32 %v2130, %v2076
      %v2159 = vmax.f32 %v2131, %v2077
      %v2160 = vmax.f32 %v2132, %v2078
      %v2161 = vmax.f32 %v2133, %v2079
      %v2162 = vmax.f32 %v2134, %v2080
      %v2163 = vmax.f32 %v2137, %v2057
      %v2164 = vmax.f32 %v2138, %v2058
      %v2165 = vmax.f32 %v2139, %v2059
      %v2166 = vmax.f32 %v2140, %v2060
      %v2167 = vmax.f32 %v2141, %v2061
      %v2168 = vmax.f32 %v2142, %v2062
      %v2169 = vmax.f32 %v2143, %v2063
      %v2170 = vmax.f32 %v2144, %v2064
      %v2171 = vmax.f32 %v2145, %v2065
      %v2172 = vmax.f32 %v2146, %v2066
      %v2173 = vmax.f32 %v2147, %v2067
      %v2174 = vmax.f32 %v2148, %v2068
      %v2175 = vmax.f32 %v2149, %v2069
      %v2176 = vmax.f32 %v2150, %v2070
      %v2177 = vmax.f32 %v2151, %v2071
      %v2178 = vmax.f32 %v2152, %v2072
      %v2179 = vmax.f32 %v2153, %v2073
      %v2180 = vmax.f32 %v2154, %v2074
      %v2181 = vmax.f32 %v2155, %v2075
      %v2182 = vmax.f32 %v2156, %v2076
      %v2183 = vmax.f32 %v2157, %v2077
      %v2184 = vmax.f32 %v2158, %v2078
      %v2185 = vmax.f32 %v2159, %v2079
      %v2186 = vmax.f32 %v2160, %v2080
      %v2187 = vld [vmem:[%s3 + $0x4] sm:$0x3]
      %v2189 = vsel %vm1143, %v2109, 0
      %v2192 = vsel %vm1143, %v2110, 0
      %v2195 = vsel %vm1143, %v2137, 0
      %v2198 = vsel %vm1143, %v2138, 0
      %v2201 = vsel %vm1143, %v2163, 0
      %v2204 = vsel %vm1143, %v2164, 0
      %v2207 = vsel %vm1143, %v2165, 0
      %v2210 = vsel %vm1143, %v2166, 0
      %v2213 = vsel %vm1143, %v2167, 0
      %v2216 = vsel %vm1143, %v2168, 0
      %v2219 = vsel %vm1143, %v2169, 0
      %v2222 = vsel %vm1143, %v2170, 0
      %v2225 = vsel %vm1143, %v2171, 0
      %v2228 = vsel %vm1143, %v2172, 0
      %v2231 = vsel %vm1143, %v2173, 0
      %v2234 = vsel %vm1143, %v2174, 0
      %v2237 = vsel %vm1143, %v2175, 0
      %v2240 = vsel %vm1143, %v2176, 0
      %v2243 = vsel %vm1143, %v2177, 0
      %v2246 = vsel %vm1143, %v2178, 0
      %v2249 = vsel %vm1143, %v2179, 0
      %v2252 = vsel %vm1143, %v2180, 0
      %v2255 = vsel %vm1143, %v2181, 0
      %v2258 = vsel %vm1143, %v2182, 0
      %v2261 = vsel %vm1143, %v2183, 0
      %v2264 = vsel %vm1143, %v2184, 0
      %v2267 = vsel %vm1143, %v2185, 0
      %v2270 = vsel %vm1143, %v2186, 0
      %v2273 = vsel %vm1143, %v2161, 0
      %v2276 = vsel %vm1143, %v2162, 0
      %v2279 = vsel %vm1143, %v2135, 0
      %v2282 = vsel %vm1143, %v2136, 0
      %v2285 = vsel %vm1240, %v2187, 0
      %2287 = vmatpush.msra.mxu0 0.0
      %2288 = vmatpush.msra.mxu0 0.0
      %2289 = vmatpush.msra.mxu0 0.0
      %2290 = vmatpush.msra.mxu0 0.0
      %2291 = vmatpush.msra.mxu0 0.0
      %2292 = vmatpush.msra.mxu0 0.0
      %2293 = vmatpush.msra.mxu0 0.0
      %2294 = vmatpush.msra.mxu0 0.0
      %2295 = vmatpush.msra.mxu0 0.0
      %2296 = vmatpush.msra.mxu0 0.0
      %2297 = vmatpush.msra.mxu0 0.0
      %2298 = vmatpush.msra.mxu0 0.0
      %2299 = vmatpush.msra.mxu0 0.0
      %2300 = vmatpush.msra.mxu0 0.0
      %2301 = vmatpush.msra.mxu0 0.0
      %2302 = vmatpush.msra.mxu0 %v2285
      %2303 = vmatmul.f32.gmra.mxu0 %v2189
      %v2304 = vpop.f32.mrf.mxu0
      %v2305 = vadd.f32 0.0, %v2304
      %2306 = vmatmul.f32.gmra.mxu0 %v2192
      %v2307 = vpop.f32.mrf.mxu0
      %v2308 = vadd.f32 0.0, %v2307
      %2309 = vmatmul.f32.gmra.mxu0 %v2195
      %v2310 = vpop.f32.mrf.mxu0
      %v2311 = vadd.f32 0.0, %v2310
      %2312 = vmatmul.f32.gmra.mxu0 %v2198
      %v2313 = vpop.f32.mrf.mxu0
      %v2314 = vadd.f32 0.0, %v2313
      %2315 = vmatmul.f32.gmra.mxu0 %v2201
      %v2316 = vpop.f32.mrf.mxu0
      %v2317 = vadd.f32 0.0, %v2316
      %2318 = vmatmul.f32.gmra.mxu0 %v2204
      %v2319 = vpop.f32.mrf.mxu0
      %v2320 = vadd.f32 0.0, %v2319
      %2321 = vmatmul.f32.gmra.mxu0 %v2207
      %v2322 = vpop.f32.mrf.mxu0
      %v2323 = vadd.f32 0.0, %v2322
      %2324 = vmatmul.f32.gmra.mxu0 %v2210
      %v2325 = vpop.f32.mrf.mxu0
      %v2326 = vadd.f32 0.0, %v2325
      %2327 = vmatmul.f32.gmra.mxu0 %v2213
      %v2328 = vpop.f32.mrf.mxu0
      %v2329 = vadd.f32 0.0, %v2328
      %2330 = vmatmul.f32.gmra.mxu0 %v2216
      %v2331 = vpop.f32.mrf.mxu0
      %v2332 = vadd.f32 0.0, %v2331
      %2333 = vmatmul.f32.gmra.mxu0 %v2219
      %v2334 = vpop.f32.mrf.mxu0
      %v2335 = vadd.f32 0.0, %v2334
      %2336 = vmatmul.f32.gmra.mxu0 %v2222
      %v2337 = vpop.f32.mrf.mxu0
      %v2338 = vadd.f32 0.0, %v2337
      %2339 = vmatmul.f32.gmra.mxu0 %v2225
      %v2340 = vpop.f32.mrf.mxu0
      %v2341 = vadd.f32 0.0, %v2340
      %2342 = vmatmul.f32.gmra.mxu0 %v2228
      %v2343 = vpop.f32.mrf.mxu0
      %v2344 = vadd.f32 0.0, %v2343
      %2345 = vmatmul.f32.gmra.mxu0 %v2231
      %v2346 = vpop.f32.mrf.mxu0
      %v2347 = vadd.f32 0.0, %v2346
      %2348 = vmatmul.f32.gmra.mxu0 %v2234
      %v2349 = vpop.f32.mrf.mxu0
      %v2350 = vadd.f32 0.0, %v2349
      %2351 = vmatmul.f32.gmra.mxu0 %v2237
      %v2352 = vpop.f32.mrf.mxu0
      %v2353 = vadd.f32 0.0, %v2352
      %2354 = vmatmul.f32.gmra.mxu0 %v2240
      %v2355 = vpop.f32.mrf.mxu0
      %v2356 = vadd.f32 0.0, %v2355
      %2357 = vmatmul.f32.gmra.mxu0 %v2243
      %v2358 = vpop.f32.mrf.mxu0
      %v2359 = vadd.f32 0.0, %v2358
      %2360 = vmatmul.f32.gmra.mxu0 %v2246
      %v2361 = vpop.f32.mrf.mxu0
      %v2362 = vadd.f32 0.0, %v2361
      %2363 = vmatmul.f32.gmra.mxu0 %v2249
      %v2364 = vpop.f32.mrf.mxu0
      %v2365 = vadd.f32 0.0, %v2364
      %2366 = vmatmul.f32.gmra.mxu0 %v2252
      %v2367 = vpop.f32.mrf.mxu0
      %v2368 = vadd.f32 0.0, %v2367
      %2369 = vmatmul.f32.gmra.mxu0 %v2255
      %v2370 = vpop.f32.mrf.mxu0
      %v2371 = vadd.f32 0.0, %v2370
      %2372 = vmatmul.f32.gmra.mxu0 %v2258
      %v2373 = vpop.f32.mrf.mxu0
      %v2374 = vadd.f32 0.0, %v2373
      %2375 = vmatmul.f32.gmra.mxu0 %v2261
      %v2376 = vpop.f32.mrf.mxu0
      %v2377 = vadd.f32 0.0, %v2376
      %2378 = vmatmul.f32.gmra.mxu0 %v2264
      %v2379 = vpop.f32.mrf.mxu0
      %v2380 = vadd.f32 0.0, %v2379
      %2381 = vmatmul.f32.gmra.mxu0 %v2267
      %v2382 = vpop.f32.mrf.mxu0
      %v2383 = vadd.f32 0.0, %v2382
      %2384 = vmatmul.f32.gmra.mxu0 %v2270
      %v2385 = vpop.f32.mrf.mxu0
      %v2386 = vadd.f32 0.0, %v2385
      %2387 = vmatmul.f32.gmra.mxu0 %v2273
      %v2388 = vpop.f32.mrf.mxu0
      %v2389 = vadd.f32 0.0, %v2388
      %2390 = vmatmul.f32.gmra.mxu0 %v2276
      %v2391 = vpop.f32.mrf.mxu0
      %v2392 = vadd.f32 0.0, %v2391
      %2393 = vmatmul.f32.gmra.mxu0 %v2279
      %v2394 = vpop.f32.mrf.mxu0
      %v2395 = vadd.f32 0.0, %v2394
      %2396 = vmatmul.f32.gmra.mxu0 %v2282
      %v2397 = vpop.f32.mrf.mxu0
      %v2398 = vadd.f32 0.0, %v2397
      %2399 = vdwg.mxu0
      %v2400 = vadd.f32 %v1474, %v2305
      %v2401 = vadd.f32 %v1477, %v2308
      %v2402 = vadd.f32 %v1480, %v2311
      %v2403 = vadd.f32 %v1483, %v2314
      %v2404 = vadd.f32 %v1486, %v2317
      %v2405 = vadd.f32 %v1489, %v2320
      %v2406 = vadd.f32 %v1492, %v2323
      %v2407 = vadd.f32 %v1495, %v2326
      %v2408 = vadd.f32 %v1498, %v2329
      %v2409 = vadd.f32 %v1501, %v2332
      %v2410 = vadd.f32 %v1504, %v2335
      %v2411 = vadd.f32 %v1507, %v2338
      %v2412 = vadd.f32 %v1510, %v2341
      %v2413 = vadd.f32 %v1513, %v2344
      %v2414 = vadd.f32 %v1516, %v2347
      %v2415 = vadd.f32 %v1519, %v2350
      %v2416 = vadd.f32 %v1522, %v2353
      %v2417 = vadd.f32 %v1525, %v2356
      %v2418 = vadd.f32 %v1528, %v2359
      %v2419 = vadd.f32 %v1531, %v2362
      %v2420 = vadd.f32 %v1534, %v2365
      %v2421 = vadd.f32 %v1537, %v2368
      %v2422 = vadd.f32 %v1540, %v2371
      %v2423 = vadd.f32 %v1543, %v2374
      %v2424 = vadd.f32 %v1546, %v2377
      %v2425 = vadd.f32 %v1549, %v2380
      %v2426 = vadd.f32 %v1552, %v2383
      %v2427 = vadd.f32 %v1555, %v2386
      %v2428 = vadd.f32 %v1558, %v2389
      %v2429 = vadd.f32 %v1561, %v2392
      %v2430 = vadd.f32 %v1564, %v2395
      %v2431 = vadd.f32 %v1567, %v2398
      %v2432 = vrot.slane %v2109, 1
      %v2433 = vrot.slane %v2137, 1
      %v2434 = vrot.slane %v2163, 1
      %v2435 = vrot.slane %v2165, 1
      %v2436 = vrot.slane %v2167, 1
      %v2437 = vrot.slane %v2169, 1
      %v2438 = vrot.slane %v2171, 1
      %v2439 = vrot.slane %v2173, 1
      %v2440 = vrot.slane %v2175, 1
      %v2441 = vrot.slane %v2177, 1
      %v2442 = vrot.slane %v2179, 1
      %v2443 = vrot.slane %v2181, 1
      %v2444 = vrot.slane %v2183, 1
      %v2445 = vrot.slane %v2185, 1
      %v2446 = vrot.slane %v2161, 1
      %v2447 = vrot.slane %v2135, 1
      %v2448 = vrot.slane %v2110, 1
      %v2449 = vrot.slane %v2138, 1
      %v2450 = vrot.slane %v2164, 1
      %v2451 = vrot.slane %v2166, 1
      %v2452 = vrot.slane %v2168, 1
      %v2453 = vrot.slane %v2170, 1
      %v2454 = vrot.slane %v2172, 1
      %v2455 = vrot.slane %v2174, 1
      %v2456 = vrot.slane %v2176, 1
      %v2457 = vrot.slane %v2178, 1
      %v2458 = vrot.slane %v2180, 1
      %v2459 = vrot.slane %v2182, 1
      %v2460 = vrot.slane %v2184, 1
      %v2461 = vrot.slane %v2186, 1
      %v2462 = vrot.slane %v2162, 1
      %v2463 = vrot.slane %v2136, 1
      %v2464 = vsel %vm552, %v2432, %v2448
      %v2465 = vsel %vm552, %v2433, %v2449
      %v2466 = vsel %vm552, %v2434, %v2450
      %v2467 = vsel %vm552, %v2435, %v2451
      %v2468 = vsel %vm552, %v2436, %v2452
      %v2469 = vsel %vm552, %v2437, %v2453
      %v2470 = vsel %vm552, %v2438, %v2454
      %v2471 = vsel %vm552, %v2439, %v2455
      %v2472 = vsel %vm552, %v2440, %v2456
      %v2473 = vsel %vm552, %v2441, %v2457
      %v2474 = vsel %vm552, %v2442, %v2458
      %v2475 = vsel %vm552, %v2443, %v2459
      %v2476 = vsel %vm552, %v2444, %v2460
      %v2477 = vsel %vm552, %v2445, %v2461
      %v2478 = vsel %vm552, %v2446, %v2462
      %v2479 = vsel %vm552, %v2447, %v2463
      %v2480 = vsel %vm552, %v2448, %v2432
      %v2481 = vsel %vm552, %v2449, %v2433
      %v2482 = vsel %vm552, %v2450, %v2434
      %v2483 = vsel %vm552, %v2451, %v2435
      %v2484 = vsel %vm552, %v2452, %v2436
      %v2485 = vsel %vm552, %v2453, %v2437
      %v2486 = vsel %vm552, %v2454, %v2438
      %v2487 = vsel %vm552, %v2455, %v2439
      %v2488 = vsel %vm552, %v2456, %v2440
      %v2489 = vsel %vm552, %v2457, %v2441
      %v2490 = vsel %vm552, %v2458, %v2442
      %v2491 = vsel %vm552, %v2459, %v2443
      %v2492 = vsel %vm552, %v2460, %v2444
      %v2493 = vsel %vm552, %v2461, %v2445
      %v2494 = vsel %vm552, %v2462, %v2446
      %v2495 = vsel %vm552, %v2463, %v2447
      %v2496 = vsel %vm511, %v2464, -inf
      %v2497 = vsel %vm512, %v2480, -inf
      %v2498 = vsel %vm511, %v2465, -inf
      %v2499 = vsel %vm512, %v2481, -inf
      %v2500 = vsel %vm511, %v2466, -inf
      %v2501 = vsel %vm512, %v2482, -inf
      %v2502 = vsel %vm511, %v2467, -inf
      %v2503 = vsel %vm512, %v2483, -inf
      %v2504 = vsel %vm511, %v2468, -inf
      %v2505 = vsel %vm512, %v2484, -inf
      %v2506 = vsel %vm511, %v2469, -inf
      %v2507 = vsel %vm512, %v2485, -inf
      %v2508 = vsel %vm511, %v2470, -inf
      %v2509 = vsel %vm512, %v2486, -inf
      %v2510 = vsel %vm511, %v2471, -inf
      %v2511 = vsel %vm512, %v2487, -inf
      %v2512 = vsel %vm511, %v2472, -inf
      %v2513 = vsel %vm512, %v2488, -inf
      %v2514 = vsel %vm511, %v2473, -inf
      %v2515 = vsel %vm512, %v2489, -inf
      %v2516 = vsel %vm511, %v2474, -inf
      %v2517 = vsel %vm512, %v2490, -inf
      %v2518 = vsel %vm511, %v2475, -inf
      %v2519 = vsel %vm512, %v2491, -inf
      %v2520 = vsel %vm511, %v2476, -inf
      %v2521 = vsel %vm512, %v2492, -inf
      %v2522 = vsel %vm511, %v2477, -inf
      %v2523 = vsel %vm512, %v2493, -inf
      %v2524 = vsel %vm511, %v2478, -inf
      %v2525 = vsel %vm512, %v2494, -inf
      %v2526 = vsel %vm511, %v2479, -inf
      %v2527 = vsel %vm512, %v2495, -inf
      %v2528 = vmax.f32 %v2109, %v2496
      %v2529 = vmax.f32 %v2110, %v2497
      %v2530 = vmax.f32 %v2137, %v2498
      %v2531 = vmax.f32 %v2138, %v2499
      %v2532 = vmax.f32 %v2163, %v2500
      %v2533 = vmax.f32 %v2164, %v2501
      %v2534 = vmax.f32 %v2165, %v2502
      %v2535 = vmax.f32 %v2166, %v2503
      %v2536 = vmax.f32 %v2167, %v2504
      %v2537 = vmax.f32 %v2168, %v2505
      %v2538 = vmax.f32 %v2169, %v2506
      %v2539 = vmax.f32 %v2170, %v2507
      %v2540 = vmax.f32 %v2171, %v2508
      %v2541 = vmax.f32 %v2172, %v2509
      %v2542 = vmax.f32 %v2173, %v2510
      %v2543 = vmax.f32 %v2174, %v2511
      %v2544 = vmax.f32 %v2175, %v2512
      %v2545 = vmax.f32 %v2176, %v2513
      %v2546 = vmax.f32 %v2177, %v2514
      %v2547 = vmax.f32 %v2178, %v2515
      %v2548 = vmax.f32 %v2179, %v2516
      %v2549 = vmax.f32 %v2180, %v2517
      %v2550 = vmax.f32 %v2181, %v2518
      %v2551 = vmax.f32 %v2182, %v2519
      %v2552 = vmax.f32 %v2183, %v2520
      %v2553 = vmax.f32 %v2184, %v2521
      %v2554 = vmax.f32 %v2185, %v2522
      %v2555 = vmax.f32 %v2186, %v2523
      %v2556 = vmax.f32 %v2161, %v2524
      %v2557 = vmax.f32 %v2162, %v2525
      %v2558 = vmax.f32 %v2135, %v2526
      %v2559 = vmax.f32 %v2136, %v2527
      %v2560 = vrot.slane %v2109, 7
      %v2561 = vrot.slane %v2137, 7
      %v2562 = vrot.slane %v2163, 7
      %v2563 = vrot.slane %v2165, 7
      %v2564 = vrot.slane %v2167, 7
      %v2565 = vrot.slane %v2169, 7
      %v2566 = vrot.slane %v2171, 7
      %v2567 = vrot.slane %v2173, 7
      %v2568 = vrot.slane %v2175, 7
      %v2569 = vrot.slane %v2177, 7
      %v2570 = vrot.slane %v2179, 7
      %v2571 = vrot.slane %v2181, 7
      %v2572 = vrot.slane %v2183, 7
      %v2573 = vrot.slane %v2185, 7
      %v2574 = vrot.slane %v2161, 7
      %v2575 = vrot.slane %v2135, 7
      %v2576 = vrot.slane %v2110, 7
      %v2577 = vrot.slane %v2138, 7
      %v2578 = vrot.slane %v2164, 7
      %v2579 = vrot.slane %v2166, 7
      %v2580 = vrot.slane %v2168, 7
      %v2581 = vrot.slane %v2170, 7
      %v2582 = vrot.slane %v2172, 7
      %v2583 = vrot.slane %v2174, 7
      %v2584 = vrot.slane %v2176, 7
      %v2585 = vrot.slane %v2178, 7
      %v2586 = vrot.slane %v2180, 7
      %v2587 = vrot.slane %v2182, 7
      %v2588 = vrot.slane %v2184, 7
      %v2589 = vrot.slane %v2186, 7
      %v2590 = vrot.slane %v2162, 7
      %v2591 = vrot.slane %v2136, 7
      %v2592 = vsel %vm681, %v2560, %v2576
      %v2593 = vsel %vm681, %v2561, %v2577
      %v2594 = vsel %vm681, %v2562, %v2578
      %v2595 = vsel %vm681, %v2563, %v2579
      %v2596 = vsel %vm681, %v2564, %v2580
      %v2597 = vsel %vm681, %v2565, %v2581
      %v2598 = vsel %vm681, %v2566, %v2582
      %v2599 = vsel %vm681, %v2567, %v2583
      %v2600 = vsel %vm681, %v2568, %v2584
      %v2601 = vsel %vm681, %v2569, %v2585
      %v2602 = vsel %vm681, %v2570, %v2586
      %v2603 = vsel %vm681, %v2571, %v2587
      %v2604 = vsel %vm681, %v2572, %v2588
      %v2605 = vsel %vm681, %v2573, %v2589
      %v2606 = vsel %vm681, %v2574, %v2590
      %v2607 = vsel %vm681, %v2575, %v2591
      %v2608 = vsel %vm681, %v2576, %v2560
      %v2609 = vsel %vm681, %v2577, %v2561
      %v2610 = vsel %vm681, %v2578, %v2562
      %v2611 = vsel %vm681, %v2579, %v2563
      %v2612 = vsel %vm681, %v2580, %v2564
      %v2613 = vsel %vm681, %v2581, %v2565
      %v2614 = vsel %vm681, %v2582, %v2566
      %v2615 = vsel %vm681, %v2583, %v2567
      %v2616 = vsel %vm681, %v2584, %v2568
      %v2617 = vsel %vm681, %v2585, %v2569
      %v2618 = vsel %vm681, %v2586, %v2570
      %v2619 = vsel %vm681, %v2587, %v2571
      %v2620 = vsel %vm681, %v2588, %v2572
      %v2621 = vsel %vm681, %v2589, %v2573
      %v2622 = vsel %vm681, %v2590, %v2574
      %v2623 = vsel %vm681, %v2591, %v2575
      %v2624 = vsel %vm513, %v2608, -inf
      %v2625 = vsel %vm514, %v2592, -inf
      %v2626 = vsel %vm513, %v2609, -inf
      %v2627 = vsel %vm514, %v2593, -inf
      %v2628 = vsel %vm513, %v2610, -inf
      %v2629 = vsel %vm514, %v2594, -inf
      %v2630 = vsel %vm513, %v2611, -inf
      %v2631 = vsel %vm514, %v2595, -inf
      %v2632 = vsel %vm513, %v2612, -inf
      %v2633 = vsel %vm514, %v2596, -inf
      %v2634 = vsel %vm513, %v2613, -inf
      %v2635 = vsel %vm514, %v2597, -inf
      %v2636 = vsel %vm513, %v2614, -inf
      %v2637 = vsel %vm514, %v2598, -inf
      %v2638 = vsel %vm513, %v2615, -inf
      %v2639 = vsel %vm514, %v2599, -inf
      %v2640 = vsel %vm513, %v2616, -inf
      %v2641 = vsel %vm514, %v2600, -inf
      %v2642 = vsel %vm513, %v2617, -inf
      %v2643 = vsel %vm514, %v2601, -inf
      %v2644 = vsel %vm513, %v2618, -inf
      %v2645 = vsel %vm514, %v2602, -inf
      %v2646 = vsel %vm513, %v2619, -inf
      %v2647 = vsel %vm514, %v2603, -inf
      %v2648 = vsel %vm513, %v2620, -inf
      %v2649 = vsel %vm514, %v2604, -inf
      %v2650 = vsel %vm513, %v2621, -inf
      %v2651 = vsel %vm514, %v2605, -inf
      %v2652 = vsel %vm513, %v2622, -inf
      %v2653 = vsel %vm514, %v2606, -inf
      %v2654 = vsel %vm513, %v2623, -inf
      %v2655 = vsel %vm514, %v2607, -inf
      %v2656 = vmax.f32 %v2528, %v2624
      %v2657 = vmax.f32 %v2529, %v2625
      %v2658 = vmax.f32 %v2530, %v2626
      %v2659 = vmax.f32 %v2531, %v2627
      %v2660 = vmax.f32 %v2532, %v2628
      %v2661 = vmax.f32 %v2533, %v2629
      %v2662 = vmax.f32 %v2534, %v2630
      %v2663 = vmax.f32 %v2535, %v2631
      %v2664 = vmax.f32 %v2536, %v2632
      %v2665 = vmax.f32 %v2537, %v2633
      %v2666 = vmax.f32 %v2538, %v2634
      %v2667 = vmax.f32 %v2539, %v2635
      %v2668 = vmax.f32 %v2540, %v2636
      %v2669 = vmax.f32 %v2541, %v2637
      %v2670 = vmax.f32 %v2542, %v2638
      %v2671 = vmax.f32 %v2543, %v2639
      %v2672 = vmax.f32 %v2544, %v2640
      %v2673 = vmax.f32 %v2545, %v2641
      %v2674 = vmax.f32 %v2546, %v2642
      %v2675 = vmax.f32 %v2547, %v2643
      %v2676 = vmax.f32 %v2548, %v2644
      %v2677 = vmax.f32 %v2549, %v2645
      %v2678 = vmax.f32 %v2550, %v2646
      %v2679 = vmax.f32 %v2551, %v2647
      %v2680 = vmax.f32 %v2552, %v2648
      %v2681 = vmax.f32 %v2553, %v2649
      %v2682 = vmax.f32 %v2554, %v2650
      %v2683 = vmax.f32 %v2555, %v2651
      %v2684 = vmax.f32 %v2556, %v2652
      %v2685 = vmax.f32 %v2557, %v2653
      %v2686 = vmax.f32 %v2558, %v2654
      %v2687 = vmax.f32 %v2559, %v2655
      %v2688 = vrot.slane %v2109, 2
      %v2689 = vrot.slane %v2137, 2
      %v2690 = vrot.slane %v2163, 2
      %v2691 = vrot.slane %v2165, 2
      %v2692 = vrot.slane %v2167, 2
      %v2693 = vrot.slane %v2169, 2
      %v2694 = vrot.slane %v2171, 2
      %v2695 = vrot.slane %v2173, 2
      %v2696 = vrot.slane %v2175, 2
      %v2697 = vrot.slane %v2177, 2
      %v2698 = vrot.slane %v2179, 2
      %v2699 = vrot.slane %v2181, 2
      %v2700 = vrot.slane %v2183, 2
      %v2701 = vrot.slane %v2185, 2
      %v2702 = vrot.slane %v2161, 2
      %v2703 = vrot.slane %v2135, 2
      %v2704 = vrot.slane %v2110, 2
      %v2705 = vrot.slane %v2138, 2
      %v2706 = vrot.slane %v2164, 2
      %v2707 = vrot.slane %v2166, 2
      %v2708 = vrot.slane %v2168, 2
      %v2709 = vrot.slane %v2170, 2
      %v2710 = vrot.slane %v2172, 2
      %v2711 = vrot.slane %v2174, 2
      %v2712 = vrot.slane %v2176, 2
      %v2713 = vrot.slane %v2178, 2
      %v2714 = vrot.slane %v2180, 2
      %v2715 = vrot.slane %v2182, 2
      %v2716 = vrot.slane %v2184, 2
      %v2717 = vrot.slane %v2186, 2
      %v2718 = vrot.slane %v2162, 2
      %v2719 = vrot.slane %v2136, 2
      %v2720 = vsel %vm810, %v2688, %v2704
      %v2721 = vsel %vm810, %v2689, %v2705
      %v2722 = vsel %vm810, %v2690, %v2706
      %v2723 = vsel %vm810, %v2691, %v2707
      %v2724 = vsel %vm810, %v2692, %v2708
      %v2725 = vsel %vm810, %v2693, %v2709
      %v2726 = vsel %vm810, %v2694, %v2710
      %v2727 = vsel %vm810, %v2695, %v2711
      %v2728 = vsel %vm810, %v2696, %v2712
      %v2729 = vsel %vm810, %v2697, %v2713
      %v2730 = vsel %vm810, %v2698, %v2714
      %v2731 = vsel %vm810, %v2699, %v2715
      %v2732 = vsel %vm810, %v2700, %v2716
      %v2733 = vsel %vm810, %v2701, %v2717
      %v2734 = vsel %vm810, %v2702, %v2718
      %v2735 = vsel %vm810, %v2703, %v2719
      %v2736 = vsel %vm810, %v2704, %v2688
      %v2737 = vsel %vm810, %v2705, %v2689
      %v2738 = vsel %vm810, %v2706, %v2690
      %v2739 = vsel %vm810, %v2707, %v2691
      %v2740 = vsel %vm810, %v2708, %v2692
      %v2741 = vsel %vm810, %v2709, %v2693
      %v2742 = vsel %vm810, %v2710, %v2694
      %v2743 = vsel %vm810, %v2711, %v2695
      %v2744 = vsel %vm810, %v2712, %v2696
      %v2745 = vsel %vm810, %v2713, %v2697
      %v2746 = vsel %vm810, %v2714, %v2698
      %v2747 = vsel %vm810, %v2715, %v2699
      %v2748 = vsel %vm810, %v2716, %v2700
      %v2749 = vsel %vm810, %v2717, %v2701
      %v2750 = vsel %vm810, %v2718, %v2702
      %v2751 = vsel %vm810, %v2719, %v2703
      %v2752 = vsel %vm515, %v2720, -inf
      %v2753 = vsel %vm516, %v2736, -inf
      %v2754 = vsel %vm515, %v2721, -inf
      %v2755 = vsel %vm516, %v2737, -inf
      %v2756 = vsel %vm515, %v2722, -inf
      %v2757 = vsel %vm516, %v2738, -inf
      %v2758 = vsel %vm515, %v2723, -inf
      %v2759 = vsel %vm516, %v2739, -inf
      %v2760 = vsel %vm515, %v2724, -inf
      %v2761 = vsel %vm516, %v2740, -inf
      %v2762 = vsel %vm515, %v2725, -inf
      %v2763 = vsel %vm516, %v2741, -inf
      %v2764 = vsel %vm515, %v2726, -inf
      %v2765 = vsel %vm516, %v2742, -inf
      %v2766 = vsel %vm515, %v2727, -inf
      %v2767 = vsel %vm516, %v2743, -inf
      %v2768 = vsel %vm515, %v2728, -inf
      %v2769 = vsel %vm516, %v2744, -inf
      %v2770 = vsel %vm515, %v2729, -inf
      %v2771 = vsel %vm516, %v2745, -inf
      %v2772 = vsel %vm515, %v2730, -inf
      %v2773 = vsel %vm516, %v2746, -inf
      %v2774 = vsel %vm515, %v2731, -inf
      %v2775 = vsel %vm516, %v2747, -inf
      %v2776 = vsel %vm515, %v2732, -inf
      %v2777 = vsel %vm516, %v2748, -inf
      %v2778 = vsel %vm515, %v2733, -inf
      %v2779 = vsel %vm516, %v2749, -inf
      %v2780 = vsel %vm515, %v2734, -inf
      %v2781 = vsel %vm516, %v2750, -inf
      %v2782 = vsel %vm515, %v2735, -inf
      %v2783 = vsel %vm516, %v2751, -inf
      %v2784 = vmax.f32 %v2656, %v2752
      %v2785 = vmax.f32 %v2657, %v2753
      %v2786 = vmax.f32 %v2658, %v2754
      %v2787 = vmax.f32 %v2659, %v2755
      %v2788 = vmax.f32 %v2660, %v2756
      %v2789 = vmax.f32 %v2661, %v2757
      %v2790 = vmax.f32 %v2662, %v2758
      %v2791 = vmax.f32 %v2663, %v2759
      %v2792 = vmax.f32 %v2664, %v2760
      %v2793 = vmax.f32 %v2665, %v2761
      %v2794 = vmax.f32 %v2666, %v2762
      %v2795 = vmax.f32 %v2667, %v2763
      %v2796 = vmax.f32 %v2668, %v2764
      %v2797 = vmax.f32 %v2669, %v2765
      %v2798 = vmax.f32 %v2670, %v2766
      %v2799 = vmax.f32 %v2671, %v2767
      %v2800 = vmax.f32 %v2672, %v2768
      %v2801 = vmax.f32 %v2673, %v2769
      %v2802 = vmax.f32 %v2674, %v2770
      %v2803 = vmax.f32 %v2675, %v2771
      %v2804 = vmax.f32 %v2676, %v2772
      %v2805 = vmax.f32 %v2677, %v2773
      %v2806 = vmax.f32 %v2678, %v2774
      %v2807 = vmax.f32 %v2679, %v2775
      %v2808 = vmax.f32 %v2680, %v2776
      %v2809 = vmax.f32 %v2681, %v2777
      %v2810 = vmax.f32 %v2682, %v2778
      %v2811 = vmax.f32 %v2683, %v2779
      %v2812 = vmax.f32 %v2684, %v2780
      %v2813 = vmax.f32 %v2685, %v2781
      %v2814 = vmax.f32 %v2686, %v2782
      %v2815 = vmax.f32 %v2687, %v2783
      %v2816 = vrot.slane %v2109, 6
      %v2817 = vrot.slane %v2137, 6
      %v2818 = vrot.slane %v2163, 6
      %v2819 = vrot.slane %v2165, 6
      %v2820 = vrot.slane %v2167, 6
      %v2821 = vrot.slane %v2169, 6
      %v2822 = vrot.slane %v2171, 6
      %v2823 = vrot.slane %v2173, 6
      %v2824 = vrot.slane %v2175, 6
      %v2825 = vrot.slane %v2177, 6
      %v2826 = vrot.slane %v2179, 6
      %v2827 = vrot.slane %v2181, 6
      %v2828 = vrot.slane %v2183, 6
      %v2829 = vrot.slane %v2185, 6
      %v2830 = vrot.slane %v2161, 6
      %v2831 = vrot.slane %v2135, 6
      %v2832 = vrot.slane %v2110, 6
      %v2833 = vrot.slane %v2138, 6
      %v2834 = vrot.slane %v2164, 6
      %v2835 = vrot.slane %v2166, 6
      %v2836 = vrot.slane %v2168, 6
      %v2837 = vrot.slane %v2170, 6
      %v2838 = vrot.slane %v2172, 6
      %v2839 = vrot.slane %v2174, 6
      %v2840 = vrot.slane %v2176, 6
      %v2841 = vrot.slane %v2178, 6
      %v2842 = vrot.slane %v2180, 6
      %v2843 = vrot.slane %v2182, 6
      %v2844 = vrot.slane %v2184, 6
      %v2845 = vrot.slane %v2186, 6
      %v2846 = vrot.slane %v2162, 6
      %v2847 = vrot.slane %v2136, 6
      %v2848 = vsel %vm939, %v2816, %v2832
      %v2849 = vsel %vm939, %v2817, %v2833
      %v2850 = vsel %vm939, %v2818, %v2834
      %v2851 = vsel %vm939, %v2819, %v2835
      %v2852 = vsel %vm939, %v2820, %v2836
      %v2853 = vsel %vm939, %v2821, %v2837
      %v2854 = vsel %vm939, %v2822, %v2838
      %v2855 = vsel %vm939, %v2823, %v2839
      %v2856 = vsel %vm939, %v2824, %v2840
      %v2857 = vsel %vm939, %v2825, %v2841
      %v2858 = vsel %vm939, %v2826, %v2842
      %v2859 = vsel %vm939, %v2827, %v2843
      %v2860 = vsel %vm939, %v2828, %v2844
      %v2861 = vsel %vm939, %v2829, %v2845
      %v2862 = vsel %vm939, %v2830, %v2846
      %v2863 = vsel %vm939, %v2831, %v2847
      %v2864 = vsel %vm939, %v2832, %v2816
      %v2865 = vsel %vm939, %v2833, %v2817
      %v2866 = vsel %vm939, %v2834, %v2818
      %v2867 = vsel %vm939, %v2835, %v2819
      %v2868 = vsel %vm939, %v2836, %v2820
      %v2869 = vsel %vm939, %v2837, %v2821
      %v2870 = vsel %vm939, %v2838, %v2822
      %v2871 = vsel %vm939, %v2839, %v2823
      %v2872 = vsel %vm939, %v2840, %v2824
      %v2873 = vsel %vm939, %v2841, %v2825
      %v2874 = vsel %vm939, %v2842, %v2826
      %v2875 = vsel %vm939, %v2843, %v2827
      %v2876 = vsel %vm939, %v2844, %v2828
      %v2877 = vsel %vm939, %v2845, %v2829
      %v2878 = vsel %vm939, %v2846, %v2830
      %v2879 = vsel %vm939, %v2847, %v2831
      %v2880 = vsel %vm517, %v2864, -inf
      %v2881 = vsel %vm518, %v2848, -inf
      %v2882 = vsel %vm517, %v2865, -inf
      %v2883 = vsel %vm518, %v2849, -inf
      %v2884 = vsel %vm517, %v2866, -inf
      %v2885 = vsel %vm518, %v2850, -inf
      %v2886 = vsel %vm517, %v2867, -inf
      %v2887 = vsel %vm518, %v2851, -inf
      %v2888 = vsel %vm517, %v2868, -inf
      %v2889 = vsel %vm518, %v2852, -inf
      %v2890 = vsel %vm517, %v2869, -inf
      %v2891 = vsel %vm518, %v2853, -inf
      %v2892 = vsel %vm517, %v2870, -inf
      %v2893 = vsel %vm518, %v2854, -inf
      %v2894 = vsel %vm517, %v2871, -inf
      %v2895 = vsel %vm518, %v2855, -inf
      %v2896 = vsel %vm517, %v2872, -inf
      %v2897 = vsel %vm518, %v2856, -inf
      %v2898 = vsel %vm517, %v2873, -inf
      %v2899 = vsel %vm518, %v2857, -inf
      %v2900 = vsel %vm517, %v2874, -inf
      %v2901 = vsel %vm518, %v2858, -inf
      %v2902 = vsel %vm517, %v2875, -inf
      %v2903 = vsel %vm518, %v2859, -inf
      %v2904 = vsel %vm517, %v2876, -inf
      %v2905 = vsel %vm518, %v2860, -inf
      %v2906 = vsel %vm517, %v2877, -inf
      %v2907 = vsel %vm518, %v2861, -inf
      %v2908 = vsel %vm517, %v2878, -inf
      %v2909 = vsel %vm518, %v2862, -inf
      %v2910 = vsel %vm517, %v2879, -inf
      %v2911 = vsel %vm518, %v2863, -inf
      %v2912 = vmax.f32 %v2784, %v2880
      %v2913 = vmax.f32 %v2785, %v2881
      %v2914 = vmax.f32 %v2786, %v2882
      %v2915 = vmax.f32 %v2787, %v2883
      %v2916 = vmax.f32 %v2788, %v2884
      %v2917 = vmax.f32 %v2789, %v2885
      %v2918 = vmax.f32 %v2790, %v2886
      %v2919 = vmax.f32 %v2791, %v2887
      %v2920 = vmax.f32 %v2792, %v2888
      %v2921 = vmax.f32 %v2793, %v2889
      %v2922 = vmax.f32 %v2794, %v2890
      %v2923 = vmax.f32 %v2795, %v2891
      %v2924 = vmax.f32 %v2796, %v2892
      %v2925 = vmax.f32 %v2797, %v2893
      %v2926 = vmax.f32 %v2798, %v2894
      %v2927 = vmax.f32 %v2799, %v2895
      %v2928 = vmax.f32 %v2800, %v2896
      %v2929 = vmax.f32 %v2801, %v2897
      %v2930 = vmax.f32 %v2802, %v2898
      %v2931 = vmax.f32 %v2803, %v2899
      %v2932 = vmax.f32 %v2804, %v2900
      %v2933 = vmax.f32 %v2805, %v2901
      %v2934 = vmax.f32 %v2806, %v2902
      %v2935 = vmax.f32 %v2807, %v2903
      %v2936 = vmax.f32 %v2808, %v2904
      %v2937 = vmax.f32 %v2809, %v2905
      %v2938 = vmax.f32 %v2810, %v2906
      %v2939 = vmax.f32 %v2811, %v2907
      %v2940 = vmax.f32 %v2812, %v2908
      %v2941 = vmax.f32 %v2813, %v2909
      %v2942 = vmax.f32 %v2814, %v2910
      %v2943 = vmax.f32 %v2815, %v2911
      %v2944 = vmax.f32 %v2912, %v2914
      %v2945 = vmax.f32 %v2913, %v2915
      %v2946 = vmax.f32 %v2914, %v2916
      %v2947 = vmax.f32 %v2915, %v2917
      %v2948 = vmax.f32 %v2916, %v2918
      %v2949 = vmax.f32 %v2917, %v2919
      %v2950 = vmax.f32 %v2918, %v2920
      %v2951 = vmax.f32 %v2919, %v2921
      %v2952 = vmax.f32 %v2920, %v2922
      %v2953 = vmax.f32 %v2921, %v2923
      %v2954 = vmax.f32 %v2922, %v2924
      %v2955 = vmax.f32 %v2923, %v2925
      %v2956 = vmax.f32 %v2924, %v2926
      %v2957 = vmax.f32 %v2925, %v2927
      %v2958 = vmax.f32 %v2926, %v2928
      %v2959 = vmax.f32 %v2927, %v2929
      %v2960 = vmax.f32 %v2928, %v2930
      %v2961 = vmax.f32 %v2929, %v2931
      %v2962 = vmax.f32 %v2930, %v2932
      %v2963 = vmax.f32 %v2931, %v2933
      %v2964 = vmax.f32 %v2932, %v2934
      %v2965 = vmax.f32 %v2933, %v2935
      %v2966 = vmax.f32 %v2934, %v2936
      %v2967 = vmax.f32 %v2935, %v2937
      %v2968 = vmax.f32 %v2936, %v2938
      %v2969 = vmax.f32 %v2937, %v2939
      %v2970 = vmax.f32 %v2938, %v2940
      %v2971 = vmax.f32 %v2939, %v2941
      %v2972 = vmax.f32 %v2944, %v2916
      %v2973 = vmax.f32 %v2945, %v2917
      %v2974 = vmax.f32 %v2946, %v2918
      %v2975 = vmax.f32 %v2947, %v2919
      %v2976 = vmax.f32 %v2948, %v2920
      %v2977 = vmax.f32 %v2949, %v2921
      %v2978 = vmax.f32 %v2950, %v2922
      %v2979 = vmax.f32 %v2951, %v2923
      %v2980 = vmax.f32 %v2952, %v2924
      %v2981 = vmax.f32 %v2953, %v2925
      %v2982 = vmax.f32 %v2954, %v2926
      %v2983 = vmax.f32 %v2955, %v2927
      %v2984 = vmax.f32 %v2956, %v2928
      %v2985 = vmax.f32 %v2957, %v2929
      %v2986 = vmax.f32 %v2958, %v2930
      %v2987 = vmax.f32 %v2959, %v2931
      %v2988 = vmax.f32 %v2960, %v2932
      %v2989 = vmax.f32 %v2961, %v2933
      %v2990 = vmax.f32 %v2962, %v2934
      %v2991 = vmax.f32 %v2963, %v2935
      %v2992 = vmax.f32 %v2964, %v2936
      %v2993 = vmax.f32 %v2965, %v2937
      %v2994 = vmax.f32 %v2966, %v2938
      %v2995 = vmax.f32 %v2967, %v2939
      %v2996 = vmax.f32 %v2968, %v2940
      %v2997 = vmax.f32 %v2969, %v2941
      %v2998 = vmax.f32 %v2970, %v2942
      %v2999 = vmax.f32 %v2971, %v2943
      %v3000 = vmax.f32 %v2972, %v2918
      %v3001 = vmax.f32 %v2973, %v2919
      %v3002 = vmax.f32 %v2974, %v2920
      %v3003 = vmax.f32 %v2975, %v2921
      %v3004 = vmax.f32 %v2976, %v2922
      %v3005 = vmax.f32 %v2977, %v2923
      %v3006 = vmax.f32 %v2978, %v2924
      %v3007 = vmax.f32 %v2979, %v2925
      %v3008 = vmax.f32 %v2980, %v2926
      %v3009 = vmax.f32 %v2981, %v2927
      %v3010 = vmax.f32 %v2982, %v2928
      %v3011 = vmax.f32 %v2983, %v2929
      %v3012 = vmax.f32 %v2984, %v2930
      %v3013 = vmax.f32 %v2985, %v2931
      %v3014 = vmax.f32 %v2986, %v2932
      %v3015 = vmax.f32 %v2987, %v2933
      %v3016 = vmax.f32 %v2988, %v2934
      %v3017 = vmax.f32 %v2989, %v2935
      %v3018 = vmax.f32 %v2990, %v2936
      %v3019 = vmax.f32 %v2991, %v2937
      %v3020 = vmax.f32 %v2992, %v2938
      %v3021 = vmax.f32 %v2993, %v2939
      %v3022 = vmax.f32 %v2994, %v2940
      %v3023 = vmax.f32 %v2995, %v2941
      %v3024 = vmax.f32 %v2996, %v2942
      %v3025 = vmax.f32 %v2997, %v2943
      %v3026 = vmax.f32 %v3000, %v2920
      %v3027 = vmax.f32 %v3001, %v2921
      %v3028 = vmax.f32 %v3002, %v2922
      %v3029 = vmax.f32 %v3003, %v2923
      %v3030 = vmax.f32 %v3004, %v2924
      %v3031 = vmax.f32 %v3005, %v2925
      %v3032 = vmax.f32 %v3006, %v2926
      %v3033 = vmax.f32 %v3007, %v2927
      %v3034 = vmax.f32 %v3008, %v2928
      %v3035 = vmax.f32 %v3009, %v2929
      %v3036 = vmax.f32 %v3010, %v2930
      %v3037 = vmax.f32 %v3011, %v2931
      %v3038 = vmax.f32 %v3012, %v2932
      %v3039 = vmax.f32 %v3013, %v2933
      %v3040 = vmax.f32 %v3014, %v2934
      %v3041 = vmax.f32 %v3015, %v2935
      %v3042 = vmax.f32 %v3016, %v2936
      %v3043 = vmax.f32 %v3017, %v2937
      %v3044 = vmax.f32 %v3018, %v2938
      %v3045 = vmax.f32 %v3019, %v2939
      %v3046 = vmax.f32 %v3020, %v2940
      %v3047 = vmax.f32 %v3021, %v2941
      %v3048 = vmax.f32 %v3022, %v2942
      %v3049 = vmax.f32 %v3023, %v2943
      %v3050 = vld [vmem:[%s3 + $0x6] sm:$0x3]
      %v3052 = vsel %vm1143, %v2972, 0
      %v3055 = vsel %vm1143, %v2973, 0
      %v3058 = vsel %vm1143, %v3000, 0
      %v3061 = vsel %vm1143, %v3001, 0
      %v3064 = vsel %vm1143, %v3026, 0
      %v3067 = vsel %vm1143, %v3027, 0
      %v3070 = vsel %vm1143, %v3028, 0
      %v3073 = vsel %vm1143, %v3029, 0
      %v3076 = vsel %vm1143, %v3030, 0
      %v3079 = vsel %vm1143, %v3031, 0
      %v3082 = vsel %vm1143, %v3032, 0
      %v3085 = vsel %vm1143, %v3033, 0
      %v3088 = vsel %vm1143, %v3034, 0
      %v3091 = vsel %vm1143, %v3035, 0
      %v3094 = vsel %vm1143, %v3036, 0
      %v3097 = vsel %vm1143, %v3037, 0
      %v3100 = vsel %vm1143, %v3038, 0
      %v3103 = vsel %vm1143, %v3039, 0
      %v3106 = vsel %vm1143, %v3040, 0
      %v3109 = vsel %vm1143, %v3041, 0
      %v3112 = vsel %vm1143, %v3042, 0
      %v3115 = vsel %vm1143, %v3043, 0
      %v3118 = vsel %vm1143, %v3044, 0
      %v3121 = vsel %vm1143, %v3045, 0
      %v3124 = vsel %vm1143, %v3046, 0
      %v3127 = vsel %vm1143, %v3047, 0
      %v3130 = vsel %vm1143, %v3048, 0
      %v3133 = vsel %vm1143, %v3049, 0
      %v3136 = vsel %vm1143, %v3024, 0
      %v3139 = vsel %vm1143, %v3025, 0
      %v3142 = vsel %vm1143, %v2998, 0
      %v3145 = vsel %vm1143, %v2999, 0
      %v3148 = vsel %vm1240, %v3050, 0
      %3150 = vmatpush.msra.mxu0 0.0
      %3151 = vmatpush.msra.mxu0 0.0
      %3152 = vmatpush.msra.mxu0 0.0
      %3153 = vmatpush.msra.mxu0 0.0
      %3154 = vmatpush.msra.mxu0 0.0
      %3155 = vmatpush.msra.mxu0 0.0
      %3156 = vmatpush.msra.mxu0 0.0
      %3157 = vmatpush.msra.mxu0 0.0
      %3158 = vmatpush.msra.mxu0 0.0
      %3159 = vmatpush.msra.mxu0 0.0
      %3160 = vmatpush.msra.mxu0 0.0
      %3161 = vmatpush.msra.mxu0 0.0
      %3162 = vmatpush.msra.mxu0 0.0
      %3163 = vmatpush.msra.mxu0 0.0
      %3164 = vmatpush.msra.mxu0 0.0
      %3165 = vmatpush.msra.mxu0 %v3148
      %3166 = vmatmul.f32.gmra.mxu0 %v3052
      %v3167 = vpop.f32.mrf.mxu0
      %v3168 = vadd.f32 0.0, %v3167
      %3169 = vmatmul.f32.gmra.mxu0 %v3055
      %v3170 = vpop.f32.mrf.mxu0
      %v3171 = vadd.f32 0.0, %v3170
      %3172 = vmatmul.f32.gmra.mxu0 %v3058
      %v3173 = vpop.f32.mrf.mxu0
      %v3174 = vadd.f32 0.0, %v3173
      %3175 = vmatmul.f32.gmra.mxu0 %v3061
      %v3176 = vpop.f32.mrf.mxu0
      %v3177 = vadd.f32 0.0, %v3176
      %3178 = vmatmul.f32.gmra.mxu0 %v3064
      %v3179 = vpop.f32.mrf.mxu0
      %v3180 = vadd.f32 0.0, %v3179
      %3181 = vmatmul.f32.gmra.mxu0 %v3067
      %v3182 = vpop.f32.mrf.mxu0
      %v3183 = vadd.f32 0.0, %v3182
      %3184 = vmatmul.f32.gmra.mxu0 %v3070
      %v3185 = vpop.f32.mrf.mxu0
      %v3186 = vadd.f32 0.0, %v3185
      %3187 = vmatmul.f32.gmra.mxu0 %v3073
      %v3188 = vpop.f32.mrf.mxu0
      %v3189 = vadd.f32 0.0, %v3188
      %3190 = vmatmul.f32.gmra.mxu0 %v3076
      %v3191 = vpop.f32.mrf.mxu0
      %v3192 = vadd.f32 0.0, %v3191
      %3193 = vmatmul.f32.gmra.mxu0 %v3079
      %v3194 = vpop.f32.mrf.mxu0
      %v3195 = vadd.f32 0.0, %v3194
      %3196 = vmatmul.f32.gmra.mxu0 %v3082
      %v3197 = vpop.f32.mrf.mxu0
      %v3198 = vadd.f32 0.0, %v3197
      %3199 = vmatmul.f32.gmra.mxu0 %v3085
      %v3200 = vpop.f32.mrf.mxu0
      %v3201 = vadd.f32 0.0, %v3200
      %3202 = vmatmul.f32.gmra.mxu0 %v3088
      %v3203 = vpop.f32.mrf.mxu0
      %v3204 = vadd.f32 0.0, %v3203
      %3205 = vmatmul.f32.gmra.mxu0 %v3091
      %v3206 = vpop.f32.mrf.mxu0
      %v3207 = vadd.f32 0.0, %v3206
      %3208 = vmatmul.f32.gmra.mxu0 %v3094
      %v3209 = vpop.f32.mrf.mxu0
      %v3210 = vadd.f32 0.0, %v3209
      %3211 = vmatmul.f32.gmra.mxu0 %v3097
      %v3212 = vpop.f32.mrf.mxu0
      %v3213 = vadd.f32 0.0, %v3212
      %3214 = vmatmul.f32.gmra.mxu0 %v3100
      %v3215 = vpop.f32.mrf.mxu0
      %v3216 = vadd.f32 0.0, %v3215
      %3217 = vmatmul.f32.gmra.mxu0 %v3103
      %v3218 = vpop.f32.mrf.mxu0
      %v3219 = vadd.f32 0.0, %v3218
      %3220 = vmatmul.f32.gmra.mxu0 %v3106
      %v3221 = vpop.f32.mrf.mxu0
      %v3222 = vadd.f32 0.0, %v3221
      %3223 = vmatmul.f32.gmra.mxu0 %v3109
      %v3224 = vpop.f32.mrf.mxu0
      %v3225 = vadd.f32 0.0, %v3224
      %3226 = vmatmul.f32.gmra.mxu0 %v3112
      %v3227 = vpop.f32.mrf.mxu0
      %v3228 = vadd.f32 0.0, %v3227
      %3229 = vmatmul.f32.gmra.mxu0 %v3115
      %v3230 = vpop.f32.mrf.mxu0
      %v3231 = vadd.f32 0.0, %v3230
      %3232 = vmatmul.f32.gmra.mxu0 %v3118
      %v3233 = vpop.f32.mrf.mxu0
      %v3234 = vadd.f32 0.0, %v3233
      %3235 = vmatmul.f32.gmra.mxu0 %v3121
      %v3236 = vpop.f32.mrf.mxu0
      %v3237 = vadd.f32 0.0, %v3236
      %3238 = vmatmul.f32.gmra.mxu0 %v3124
      %v3239 = vpop.f32.mrf.mxu0
      %v3240 = vadd.f32 0.0, %v3239
      %3241 = vmatmul.f32.gmra.mxu0 %v3127
      %v3242 = vpop.f32.mrf.mxu0
      %v3243 = vadd.f32 0.0, %v3242
      %3244 = vmatmul.f32.gmra.mxu0 %v3130
      %v3245 = vpop.f32.mrf.mxu0
      %v3246 = vadd.f32 0.0, %v3245
      %3247 = vmatmul.f32.gmra.mxu0 %v3133
      %v3248 = vpop.f32.mrf.mxu0
      %v3249 = vadd.f32 0.0, %v3248
      %3250 = vmatmul.f32.gmra.mxu0 %v3136
      %v3251 = vpop.f32.mrf.mxu0
      %v3252 = vadd.f32 0.0, %v3251
      %3253 = vmatmul.f32.gmra.mxu0 %v3139
      %v3254 = vpop.f32.mrf.mxu0
      %v3255 = vadd.f32 0.0, %v3254
      %3256 = vmatmul.f32.gmra.mxu0 %v3142
      %v3257 = vpop.f32.mrf.mxu0
      %v3258 = vadd.f32 0.0, %v3257
      %3259 = vmatmul.f32.gmra.mxu0 %v3145
      %v3260 = vpop.f32.mrf.mxu0
      %v3261 = vadd.f32 0.0, %v3260
      %3262 = vdwg.mxu0
      %v3263 = vadd.f32 %v2400, %v3168
      %v3264 = vadd.f32 %v2401, %v3171
      %v3265 = vadd.f32 %v2402, %v3174
      %v3266 = vadd.f32 %v2403, %v3177
      %v3267 = vadd.f32 %v2404, %v3180
      %v3268 = vadd.f32 %v2405, %v3183
      %v3269 = vadd.f32 %v2406, %v3186
      %v3270 = vadd.f32 %v2407, %v3189
      %v3271 = vadd.f32 %v2408, %v3192
      %v3272 = vadd.f32 %v2409, %v3195
      %v3273 = vadd.f32 %v2410, %v3198
      %v3274 = vadd.f32 %v2411, %v3201
      %v3275 = vadd.f32 %v2412, %v3204
      %v3276 = vadd.f32 %v2413, %v3207
      %v3277 = vadd.f32 %v2414, %v3210
      %v3278 = vadd.f32 %v2415, %v3213
      %v3279 = vadd.f32 %v2416, %v3216
      %v3280 = vadd.f32 %v2417, %v3219
      %v3281 = vadd.f32 %v2418, %v3222
      %v3282 = vadd.f32 %v2419, %v3225
      %v3283 = vadd.f32 %v2420, %v3228
      %v3284 = vadd.f32 %v2421, %v3231
      %v3285 = vadd.f32 %v2422, %v3234
      %v3286 = vadd.f32 %v2423, %v3237
      %v3287 = vadd.f32 %v2424, %v3240
      %v3288 = vadd.f32 %v2425, %v3243
      %v3289 = vadd.f32 %v2426, %v3246
      %v3290 = vadd.f32 %v2427, %v3249
      %v3291 = vadd.f32 %v2428, %v3252
      %v3292 = vadd.f32 %v2429, %v3255
      %v3293 = vadd.f32 %v2430, %v3258
      %v3294 = vadd.f32 %v2431, %v3261
      %v3295 = vld [vmem:[%s4] sm:$0x1]
      %v3297 = vperm.slane %v3295, 0
      %v3299 = vadd.f32 %v3263, %v3297
      %v3300 = vadd.f32 %v3264, %v3297
      %v3301 = vadd.f32 %v3265, %v3297
      %v3302 = vadd.f32 %v3266, %v3297
      %v3303 = vadd.f32 %v3267, %v3297
      %v3304 = vadd.f32 %v3268, %v3297
      %v3305 = vadd.f32 %v3269, %v3297
      %v3306 = vadd.f32 %v3270, %v3297
      %v3307 = vadd.f32 %v3271, %v3297
      %v3308 = vadd.f32 %v3272, %v3297
      %v3309 = vadd.f32 %v3273, %v3297
      %v3310 = vadd.f32 %v3274, %v3297
      %v3311 = vadd.f32 %v3275, %v3297
      %v3312 = vadd.f32 %v3276, %v3297
      %v3313 = vadd.f32 %v3277, %v3297
      %v3314 = vadd.f32 %v3278, %v3297
      %v3315 = vadd.f32 %v3279, %v3297
      %v3316 = vadd.f32 %v3280, %v3297
      %v3317 = vadd.f32 %v3281, %v3297
      %v3318 = vadd.f32 %v3282, %v3297
      %v3319 = vadd.f32 %v3283, %v3297
      %v3320 = vadd.f32 %v3284, %v3297
      %v3321 = vadd.f32 %v3285, %v3297
      %v3322 = vadd.f32 %v3286, %v3297
      %v3323 = vadd.f32 %v3287, %v3297
      %v3324 = vadd.f32 %v3288, %v3297
      %v3325 = vadd.f32 %v3289, %v3297
      %v3326 = vadd.f32 %v3290, %v3297
      %v3327 = vadd.f32 %v3291, %v3297
      %v3328 = vadd.f32 %v3292, %v3297
      %v3329 = vadd.f32 %v3293, %v3297
      %v3330 = vadd.f32 %v3294, %v3297
      %v3331 = vmax.f32 %v3299, 0.0
      %v3332 = vmax.f32 %v3300, 0.0
      %v3333 = vmax.f32 %v3301, 0.0
      %v3334 = vmax.f32 %v3302, 0.0
      %v3335 = vmax.f32 %v3303, 0.0
      %v3336 = vmax.f32 %v3304, 0.0
      %v3337 = vmax.f32 %v3305, 0.0
      %v3338 = vmax.f32 %v3306, 0.0
      %v3339 = vmax.f32 %v3307, 0.0
      %v3340 = vmax.f32 %v3308, 0.0
      %v3341 = vmax.f32 %v3309, 0.0
      %v3342 = vmax.f32 %v3310, 0.0
      %v3343 = vmax.f32 %v3311, 0.0
      %v3344 = vmax.f32 %v3312, 0.0
      %v3345 = vmax.f32 %v3313, 0.0
      %v3346 = vmax.f32 %v3314, 0.0
      %v3347 = vmax.f32 %v3315, 0.0
      %v3348 = vmax.f32 %v3316, 0.0
      %v3349 = vmax.f32 %v3317, 0.0
      %v3350 = vmax.f32 %v3318, 0.0
      %v3351 = vmax.f32 %v3319, 0.0
      %v3352 = vmax.f32 %v3320, 0.0
      %v3353 = vmax.f32 %v3321, 0.0
      %v3354 = vmax.f32 %v3322, 0.0
      %v3355 = vmax.f32 %v3323, 0.0
      %v3356 = vmax.f32 %v3324, 0.0
      %v3357 = vmax.f32 %v3325, 0.0
      %v3358 = vmax.f32 %v3326, 0.0
      %v3359 = vmax.f32 %v3327, 0.0
      %v3360 = vmax.f32 %v3328, 0.0
      %v3361 = vmax.f32 %v3329, 0.0
      %v3362 = vmax.f32 %v3330, 0.0
      %vm3363 = vcmask 64512
      %3364 = vst.msk [vmem:[%s224] sm:$0xff] %vm3363, %v3331
      %3365 = vst.msk [vmem:[%s224 + $0x8] sm:$0xff] %vm3363, %v3332
      %3366 = vst.msk [vmem:[%s224 + $0x10] sm:$0xff] %vm3363, %v3333
      %3367 = vst.msk [vmem:[%s224 + $0x18] sm:$0xff] %vm3363, %v3334
      %3368 = vst.msk [vmem:[%s224 + $0x20] sm:$0xff] %vm3363, %v3335
      %3369 = vst.msk [vmem:[%s224 + $0x28] sm:$0xff] %vm3363, %v3336
      %3370 = vst.msk [vmem:[%s224 + $0x30] sm:$0xff] %vm3363, %v3337
      %3371 = vst.msk [vmem:[%s224 + $0x38] sm:$0xff] %vm3363, %v3338
      %3372 = vst.msk [vmem:[%s224 + $0x40] sm:$0xff] %vm3363, %v3339
      %3373 = vst.msk [vmem:[%s224 + $0x48] sm:$0xff] %vm3363, %v3340
      %3374 = vst.msk [vmem:[%s224 + $0x50] sm:$0xff] %vm3363, %v3341
      %3375 = vst.msk [vmem:[%s224 + $0x58] sm:$0xff] %vm3363, %v3342
      %3376 = vst.msk [vmem:[%s224 + $0x60] sm:$0xff] %vm3363, %v3343
      %3377 = vst.msk [vmem:[%s224 + $0x68] sm:$0xff] %vm3363, %v3344
      %3378 = vst.msk [vmem:[%s224 + $0x70] sm:$0xff] %vm3363, %v3345
      %3379 = vst.msk [vmem:[%s224 + $0x78] sm:$0xff] %vm3363, %v3346
      %3380 = vst.msk [vmem:[%s224 + $0x80] sm:$0xff] %vm3363, %v3347
      %3381 = vst.msk [vmem:[%s224 + $0x88] sm:$0xff] %vm3363, %v3348
      %3382 = vst.msk [vmem:[%s224 + $0x90] sm:$0xff] %vm3363, %v3349
      %3383 = vst.msk [vmem:[%s224 + $0x98] sm:$0xff] %vm3363, %v3350
      %3384 = vst.msk [vmem:[%s224 + $0xa0] sm:$0xff] %vm3363, %v3351
      %3385 = vst.msk [vmem:[%s224 + $0xa8] sm:$0xff] %vm3363, %v3352
      %3386 = vst.msk [vmem:[%s224 + $0xb0] sm:$0xff] %vm3363, %v3353
      %3387 = vst.msk [vmem:[%s224 + $0xb8] sm:$0xff] %vm3363, %v3354
      %3388 = vst.msk [vmem:[%s224 + $0xc0] sm:$0xff] %vm3363, %v3355
      %3389 = vst.msk [vmem:[%s224 + $0xc8] sm:$0xff] %vm3363, %v3356
      %3390 = vst.msk [vmem:[%s224 + $0xd0] sm:$0xff] %vm3363, %v3357
      %3391 = vst.msk [vmem:[%s224 + $0xd8] sm:$0xff] %vm3363, %v3358
      %3392 = vst.msk [vmem:[%s224 + $0xe0] sm:$0xff] %vm3363, %v3359
      %3393 = vst.msk [vmem:[%s224 + $0xe8] sm:$0xff] %vm3363, %v3360
      %3394 = vst.msk [vmem:[%s224 + $0xf0] sm:$0xff] %vm3363, %v3361
      %3395 = vst.msk [vmem:[%s224 + $0xf8] sm:$0xff] %vm3363, %v3362
      %p3396 = scmp.lt.s32.totalorder %s16, 1
      %s3397 = scalar_select %p3396, %s16, 1
      %s3398 = smul.addr %s3397, 32
      %s3399 = smul.addr %s3398, 8
      %s3400 = scalar_lea.vmem %s5, %s3399
      // Predicated region
      $region41: #{simsppf_pallas.1} parent=39 // pred_check
        %p3401 = pneg %p144
      $region42: #{simsppf_pallas.1} parent=39 // pred_check_branch
        %3403 = sbr.rel (%p3401) target = $region44
      $region43: #{simsppf_pallas.1} parent=39 // pred_region
        _
      $region44: #{simsppf_pallas.1} parent=39 // pred_fallthru
        _
    $region40: #{simsppf_pallas.1} parent=5 // pred_fallthru
      _
    %p3404 = scmp.le.s32.totalorder 2, %s11
    // Predicated region
    $region45: #{simsppf_pallas.1} parent=5 // pred_check
      %p3405 = pneg %p3404
    $region46: #{simsppf_pallas.1} parent=5 // pred_check_branch
      %3407 = sbr.rel (%p3405) target = $region48
    $region47: #{simsppf_pallas.1} parent=5 // pred_region
      %s3408 = ssub.s32 %s11, 2
      // Predicated region
      $region49: #{simsppf_pallas.1} parent=47 // pred_check
        %p3409 = pneg %p150
      $region50: #{simsppf_pallas.1} parent=47 // pred_check_branch
        %3411 = sbr.rel (%p3409) target = $region52
      $region51: #{simsppf_pallas.1} parent=47 // pred_region
        %p3412 = scmp.lt.s32.totalorder %s17, 1
        %s3413 = scalar_select %p3412, %s17, 1
        %s3414 = smul.addr %s3413, 32
        %s3415 = smul.addr %s3414, 8
        %s3416 = scalar_lea.vmem %s5, %s3415
      $region52: #{simsppf_pallas.1} parent=47 // pred_fallthru
        _
    $region48: #{simsppf_pallas.1} parent=5 // pred_fallthru
      _
  $region6: #{simsppf_pallas.1} parent=0 // loop_footer
    %s15 = sadd.s32 1, %s11
  $region7: #{simsppf_pallas.1} parent=0 // loop_footer_branch
    %10 = sbr.rel target = $region3
  $region8: #{simsppf_pallas.1} parent=0 // loop_exit
    _

</llo_original>
